<compile_context>
chip_gen: v7x
topology: tpu7x:2x2x1
jax: 0.10.0
libtpu: 0.0.40
codegen_flags: <defaults>
</compile_context>

<pallas_src>
import functools

import jax
import jax.numpy as jnp
from jax import lax
from jax.experimental import pallas as pl
from jax.experimental.pallas import tpu as pltpu


_VMEM_LIMIT = 64 * 1024 * 1024  # scoped-VMEM cap; actual use stays well below


# --------------------------------------------------------------------------
# helpers
# --------------------------------------------------------------------------

def _pick_tile(dim, cap, align):
    """Largest tile <= cap that divides `dim` and is a multiple of `align`;
    falls back to the full dim (always a legal block) otherwise."""
    if dim <= cap:
        return dim
    t = (cap // align) * align
    while t >= align:
        if dim % t == 0:
            return t
        t -= align
    return dim


def _heads_per_block(num_heads, dh):
    """Smallest head-group whose width (heads*dh) is lane-dense (mult of 128);
    otherwise process all heads at once (block == full H, always legal)."""
    for hpb in range(1, num_heads + 1):
        if num_heads % hpb == 0 and (hpb * dh) % 128 == 0:
            return hpb
    return num_heads


# --------------------------------------------------------------------------
# matmul (+bias, +optional GELU) kernels
# --------------------------------------------------------------------------

def _matmul_bias_kernel(x_ref, w_ref, b_ref, o_ref, acc_ref, *, activation):
    @pl.when(pl.program_id(2) == 0)
    def _():
        acc_ref[...] = jnp.zeros_like(acc_ref)

    acc_ref[...] += jnp.dot(x_ref[...], w_ref[...],
                            preferred_element_type=jnp.float32)

    @pl.when(pl.program_id(2) == pl.num_programs(2) - 1)
    def _():
        y = acc_ref[...] + b_ref[...]
        if activation == "gelu":
            # tanh-approx GELU (HF uses erf-GELU; diff is O(1e-3)), f32 VPU/EUP
            c = jnp.float32(0.7978845608028654)  # sqrt(2/pi)
            y = 0.5 * y * (1.0 + jnp.tanh(c * (y + 0.044715 * y * y * y)))
        o_ref[...] = y.astype(o_ref.dtype)


def dense(x, w, b, activation=None, out_dtype=jnp.bfloat16):
    """Tiled (M,K)@(K,N)+b with optional GELU. bf16 operands, f32 accumulate."""
    M, K = x.shape
    N = w.shape[1]
    tm = _pick_tile(M, 512, 16)
    tn = _pick_tile(N, 1024, 128)
    tk = _pick_tile(K, 512, 128)
    kern = functools.partial(_matmul_bias_kernel, activation=activation)
    return pl.pallas_call(
        kern,
        out_shape=jax.ShapeDtypeStruct((M, N), out_dtype),
        grid=(M // tm, N // tn, K // tk),
        in_specs=[
            pl.BlockSpec((tm, tk), lambda i, j, k: (i, k)),
            pl.BlockSpec((tk, tn), lambda i, j, k: (k, j)),
            pl.BlockSpec((1, tn), lambda i, j, k: (0, j)),
        ],
        out_specs=pl.BlockSpec((tm, tn), lambda i, j, k: (i, j)),
        scratch_shapes=[pltpu.VMEM((tm, tn), jnp.float32)],
        compiler_params=pltpu.CompilerParams(
            dimension_semantics=("parallel", "parallel", "arbitrary"),
            vmem_limit_bytes=_VMEM_LIMIT),
    )(x.astype(jnp.bfloat16), w.astype(jnp.bfloat16),
      b.astype(jnp.float32).reshape(1, N))


def dense_qkv(x, w, b, out_dtype=jnp.bfloat16):
    """Fused QKV projection.  x:(M,K), w:(3,K,H), b:(3,1,H) -> (3,M,H).
    The stacked output layout means q/k/v are never sliced by XLA downstream;
    attention reads them straight from this buffer via BlockSpecs."""
    M, K = x.shape
    H = w.shape[2]
    tm = _pick_tile(M, 512, 16)
    tn = _pick_tile(H, 1024, 128)
    tk = _pick_tile(K, 512, 128)
    nh = H // tn
    if nh == 1:
        w_map = lambda i, j, k: (j, k, 0)
        b_map = lambda i, j, k: (j, 0, 0)
        o_map = lambda i, j, k: (j, i, 0)
    else:
        w_map = lambda i, j, k: (j // nh, k, j % nh)
        b_map = lambda i, j, k: (j // nh, 0, j % nh)
        o_map = lambda i, j, k: (j // nh, i, j % nh)
    kern = functools.partial(_matmul_bias_kernel, activation=None)
    return pl.pallas_call(
        kern,
        out_shape=jax.ShapeDtypeStruct((3, M, H), out_dtype),
        grid=(M // tm, 3 * nh, K // tk),
        in_specs=[
            pl.BlockSpec((tm, tk), lambda i, j, k: (i, k)),
            pl.BlockSpec((None, tk, tn), w_map),
            pl.BlockSpec((None, 1, tn), b_map),
        ],
        out_specs=pl.BlockSpec((None, tm, tn), o_map),
        scratch_shapes=[pltpu.VMEM((tm, tn), jnp.float32)],
        compiler_params=pltpu.CompilerParams(
            dimension_semantics=("parallel", "parallel", "arbitrary"),
            vmem_limit_bytes=_VMEM_LIMIT),
    )(x.astype(jnp.bfloat16), w.astype(jnp.bfloat16), b.astype(jnp.float32))


def _matmul_res_ln_kernel(x_ref, w_ref, b_ref, res_ref, g_ref, bt_ref,
                          o_ref, acc_ref):
    @pl.when(pl.program_id(1) == 0)
    def _():
        acc_ref[...] = jnp.zeros_like(acc_ref)

    acc_ref[...] += jnp.dot(x_ref[...], w_ref[...],
                            preferred_element_type=jnp.float32)

    @pl.when(pl.program_id(1) == pl.num_programs(1) - 1)
    def _():
        y = acc_ref[...] + b_ref[...] + res_ref[...].astype(jnp.float32)
        mu = jnp.mean(y, axis=-1, keepdims=True)
        var = jnp.mean(jnp.square(y - mu), axis=-1, keepdims=True)
        yn = (y - mu) * lax.rsqrt(var + jnp.float32(1e-12))  # BERT LN eps
        o_ref[...] = (yn * g_ref[...] + bt_ref[...]).astype(o_ref.dtype)


def dense_res_ln(x, w, b, res, gamma, beta, out_dtype=jnp.bfloat16):
    """LayerNorm(x @ w + b + res) fused into the matmul epilogue.
    N (== hidden) is kept whole so the LN row reduction stays in one block.
    Residual is consumed as bf16; LN math is f32; output bf16 by default."""
    M, K = x.shape
    N = w.shape[1]
    tm = _pick_tile(M, 512, 16)
    tk = _pick_tile(K, 512, 128)
    return pl.pallas_call(
        _matmul_res_ln_kernel,
        out_shape=jax.ShapeDtypeStruct((M, N), out_dtype),
        grid=(M // tm, K // tk),
        in_specs=[
            pl.BlockSpec((tm, tk), lambda i, k: (i, k)),
            pl.BlockSpec((tk, N), lambda i, k: (k, 0)),
            pl.BlockSpec((1, N), lambda i, k: (0, 0)),
            pl.BlockSpec((tm, N), lambda i, k: (i, 0)),
            pl.BlockSpec((1, N), lambda i, k: (0, 0)),
            pl.BlockSpec((1, N), lambda i, k: (0, 0)),
        ],
        out_specs=pl.BlockSpec((tm, N), lambda i, k: (i, 0)),
        scratch_shapes=[pltpu.VMEM((tm, N), jnp.float32)],
        compiler_params=pltpu.CompilerParams(
            dimension_semantics=("parallel", "arbitrary"),
            vmem_limit_bytes=_VMEM_LIMIT),
    )(x.astype(jnp.bfloat16), w.astype(jnp.bfloat16),
      b.astype(jnp.float32).reshape(1, N), res.astype(jnp.bfloat16),
      gamma.astype(jnp.float32).reshape(1, N),
      beta.astype(jnp.float32).reshape(1, N))


# --------------------------------------------------------------------------
# embedding LayerNorm (word + position + token_type, no HBM pos-emb tiling)
# --------------------------------------------------------------------------

def _embed_ln_kernel(w_ref, p_ref, t_ref, g_ref, b_ref, o_ref):
    x = w_ref[...] + p_ref[...] + t_ref[...]          # f32
    mu = jnp.mean(x, axis=-1, keepdims=True)
    var = jnp.mean(jnp.square(x - mu), axis=-1, keepdims=True)
    y = (x - mu) * lax.rsqrt(var + jnp.float32(1e-12))
    o_ref[...] = (y * g_ref[...] + b_ref[...]).astype(o_ref.dtype)


def embed_layernorm(word, pos, type_row, gamma, beta, out_dtype=jnp.bfloat16):
    """LayerNorm(word + pos + type) over rows.  `word` is (B*S, H); `pos` is
    (S, H) and is indexed per row-block via the BlockSpec (row-block i of the
    flattened batch maps to pos block i % (S/tm)) — no (B*S,H) HBM temp."""
    M, H = word.shape
    S = pos.shape[0]
    tm = _pick_tile(S, 512, 8)       # tm | S  =>  tm | B*S
    n_s = S // tm
    pos_map = (lambda i: (i % n_s, 0)) if n_s > 1 else (lambda i: (0, 0))
    return pl.pallas_call(
        _embed_ln_kernel,
        out_shape=jax.ShapeDtypeStruct((M, H), out_dtype),
        grid=(M // tm,),
        in_specs=[
            pl.BlockSpec((tm, H), lambda i: (i, 0)),
            pl.BlockSpec((tm, H), pos_map),
            pl.BlockSpec((1, H), lambda i: (0, 0)),
            pl.BlockSpec((1, H), lambda i: (0, 0)),
            pl.BlockSpec((1, H), lambda i: (0, 0)),
        ],
        out_specs=pl.BlockSpec((tm, H), lambda i: (i, 0)),
        compiler_params=pltpu.CompilerParams(
            dimension_semantics=("parallel",)),
    )(word.astype(jnp.float32), pos.astype(jnp.float32),
      type_row.astype(jnp.float32),
      gamma.astype(jnp.float32).reshape(1, H),
      beta.astype(jnp.float32).reshape(1, H))


# --------------------------------------------------------------------------
# attention
# --------------------------------------------------------------------------

def _attention_kernel(q_ref, k_ref, v_ref, mbias_ref, o_ref, *, dh, hpb):
    # q block: (tq, W); k/v blocks: (S, W); mbias: (1, S); o: (tq, W).
    # 1/sqrt(dh) is already folded into the Q projection weights.
    mb = mbias_ref[...]                                              # f32
    outs = []
    for h in range(hpb):
        lo = h * dh
        qh = q_ref[:, lo:lo + dh]
        kh = k_ref[:, lo:lo + dh]
        vh = v_ref[:, lo:lo + dh]
        # Q @ K^T without materializing the transpose (contract last dims).
        s = lax.dot_general(qh, kh, (((1,), (1,)), ((), ())),
                            preferred_element_type=jnp.float32)      # (tq, S)
        s = s + mb
        m = jnp.max(s, axis=-1, keepdims=True)
        p = jnp.exp(s - m)
        p = p * pl.reciprocal(jnp.sum(p, axis=-1, keepdims=True), approx=True)
        outs.append(jnp.dot(p.astype(jnp.bfloat16), vh,
                            preferred_element_type=jnp.float32))
    o = outs[0] if hpb == 1 else jnp.concatenate(outs, axis=-1)
    o_ref[...] = o.astype(o_ref.dtype)   # single lane-dense (tq, W) store


def attention(qkv, mask_bias, num_heads):
    """qkv: (3, B, S, H) bf16 stacked q/k/v; mask_bias: (B, 1, S) f32.
    Returns (B, S, H) bf16.  Grid = (batch, head-group, q-block); K/V for the
    head-group stay resident across q-blocks (flash-lite)."""
    _, B, S, H = qkv.shape
    dh = H // num_heads
    hpb = _heads_per_block(num_heads, dh)
    ng = num_heads // hpb
    W = hpb * dh
    tq = _pick_tile(S, 256, 8)
    kern = functools.partial(_attention_kernel, dh=dh, hpb=hpb)

    def qkv_spec(which, q_stream):
        if q_stream:
            return pl.BlockSpec((None, None, tq, W),
                                lambda b, g, qb: (which, b, qb, g))
        return pl.BlockSpec((None, None, S, W),
                            lambda b, g, qb: (which, b, 0, g))

    return pl.pallas_call(
        kern,
        out_shape=jax.ShapeDtypeStruct((B, S, H), jnp.bfloat16),
        grid=(B, ng, S // tq),
        in_specs=[
            qkv_spec(0, True), qkv_spec(1, False), qkv_spec(2, False),
            pl.BlockSpec((None, 1, S), lambda b, g, qb: (b, 0, 0)),
        ],
        out_specs=pl.BlockSpec((None, tq, W), lambda b, g, qb: (b, qb, g)),
        compiler_params=pltpu.CompilerParams(
            dimension_semantics=("parallel", "parallel", "parallel")),
    )(qkv, qkv, qkv, mask_bias)


# --------------------------------------------------------------------------
# final 3-way average
# --------------------------------------------------------------------------

def _avg3_kernel(a_ref, b_ref, c_ref, o_ref):
    s = (a_ref[...].astype(jnp.float32) + b_ref[...].astype(jnp.float32) +
         c_ref[...].astype(jnp.float32))
    o_ref[...] = (s * jnp.float32(1.0 / 3.0)).astype(o_ref.dtype)


def avg_last3(a, b, c):
    """Mean of the last three hidden states (== stack(dim=1).mean(1))."""
    B, S, H = a.shape
    M = B * S
    a2, b2, c2 = (t.reshape(M, H) for t in (a, b, c))
    tm = _pick_tile(M, 512, 8)
    spec = pl.BlockSpec((tm, H), lambda i: (i, 0))
    out = pl.pallas_call(
        _avg3_kernel,
        out_shape=jax.ShapeDtypeStruct((M, H), jnp.float32),
        grid=(M // tm,),
        in_specs=[spec, spec, spec],
        out_specs=spec,
        compiler_params=pltpu.CompilerParams(dimension_semantics=("parallel",)),
    )(a2, b2, c2)
    return out.reshape(B, S, H)


# --------------------------------------------------------------------------
# Parameters (deterministic synthetic init; shapes follow BertModel config)
# --------------------------------------------------------------------------

def init_bert_params(key, vocab, max_pos, H, inter, n_layers, num_heads):
    def normal(k, shape, scale=0.02, dtype=jnp.bfloat16):
        return (scale * jax.random.normal(k, shape, dtype=jnp.float32)
                ).astype(dtype)

    dh = H // num_heads
    q_scale = 1.0 / float(dh) ** 0.5   # folded into w_q / b_q (scores/sqrt(dh))

    keys = iter(jax.random.split(key, 4 + n_layers * 8))
    params = {
        "word_emb": normal(next(keys), (vocab, H), dtype=jnp.float32),
        "pos_emb": normal(next(keys), (max_pos, H), dtype=jnp.float32),
        "type_emb": normal(next(keys), (2, H), dtype=jnp.float32),
        "emb_ln_g": jnp.ones((H,), jnp.float32),
        "emb_ln_b": jnp.zeros((H,), jnp.float32),
        "layers": [],
    }
    for _ in range(n_layers):
        wq = (normal(next(keys), (H, H)).astype(jnp.float32) * q_scale
              ).astype(jnp.bfloat16)
        wk = normal(next(keys), (H, H))
        wv = normal(next(keys), (H, H))
        params["layers"].append({
            # fused QKV projection, stacked (3, H, H); q-slab (and its bias)
            # carry the 1/sqrt(dh) attention scale.
            "w_qkv": jnp.stack([wq, wk, wv], axis=0),
            "b_qkv": jnp.zeros((3, 1, H), jnp.float32),
            "wo": normal(next(keys), (H, H)),
            "bo": jnp.zeros((H,), jnp.float32),
            "ln1_g": jnp.ones((H,), jnp.float32),
            "ln1_b": jnp.zeros((H,), jnp.float32),
            "wi": normal(next(keys), (H, inter)),
            "bi": jnp.zeros((inter,), jnp.float32),
            "wf": normal(next(keys), (inter, H)),
            "bf": jnp.zeros((H,), jnp.float32),
            "ln2_g": jnp.ones((H,), jnp.float32),
            "ln2_b": jnp.zeros((H,), jnp.float32),
        })
    return params


# --------------------------------------------------------------------------
# Forward pass (mirrors BERT.forward)
# --------------------------------------------------------------------------

def bert_forward(params, input_ids, attention_mask, *, enc_num, num_heads):
    B, S = input_ids.shape
    H = params["word_emb"].shape[1]

    # embedding lookup as a row gather (O(B*S*H) bytes, no one-hot matmul)
    ids = input_ids.reshape(-1)
    word = jnp.take(params["word_emb"], ids, axis=0)            # (B*S, H) f32

    # mask = ~mask.to(torch.bool)  (True == padding in the returned tensor)
    out_mask = jnp.logical_not(attention_mask.astype(jnp.bool_))

    if enc_num <= 0:
        # self.bert.embeddings.word_embeddings(ids)
        return word.reshape(B, S, H), out_mask

    # embeddings = LN(word + position + token_type[0]); h stays bf16 from here
    h = embed_layernorm(word, params["pos_emb"][:S], params["type_emb"][0:1],
                        params["emb_ln_g"], params["emb_ln_b"])   # (B*S,H) bf16

    # HF extended attention mask: 0 where attend, -10000 where padded
    mbias = ((1.0 - attention_mask.astype(jnp.float32)) *
             jnp.float32(-10000.0)).reshape(B, 1, S)

    hidden_states = []
    for lyr in params["layers"]:
        # fused QKV projection -> stacked (3, B*S, H) bf16, no XLA slices
        qkv = dense_qkv(h, lyr["w_qkv"], lyr["b_qkv"])
        ctx = attention(qkv.reshape(3, B, S, H), mbias,
                        num_heads).reshape(B * S, H)

        # output projection + bias + residual + LayerNorm, fused; bf16 out
        h = dense_res_ln(ctx, lyr["wo"], lyr["bo"], h,
                         lyr["ln1_g"], lyr["ln1_b"])

        # FFN: up-proj + GELU, then down-proj + bias + residual + LN, fused
        inter = dense(h, lyr["wi"], lyr["bi"], activation="gelu")
        h = dense_res_ln(inter, lyr["wf"], lyr["bf"], h,
                         lyr["ln2_g"], lyr["ln2_b"])

        hidden_states.append(h.reshape(B, S, H))

    # torch.stack(all_encoder_layers[-3:], 1).mean(1)
    xs = avg_last3(hidden_states[-3], hidden_states[-2], hidden_states[-1])
    return xs, out_mask


# --------------------------------------------------------------------------

if __name__ == "__main__":
    # small BERT config: hidden=32, heads=4, intermediate=64, layers=4
    B, S = 2, 8
    H, NH, INTER, N_LAYERS = 32, 4, 64, 4
    VOCAB, MAX_POS = 128, 16

    key = jax.random.PRNGKey(0)
    pkey, ikey = jax.random.split(key)
    params = init_bert_params(pkey, VOCAB, MAX_POS, H, INTER, N_LAYERS, NH)

    input_ids = jax.random.randint(ikey, (B, S), 0, VOCAB, dtype=jnp.int32)
    attention_mask = jnp.array(
        [[1, 1, 1, 1, 1, 1, 0, 0],
         [1, 1, 1, 1, 0, 0, 0, 0]], dtype=jnp.int32)

    fwd = jax.jit(functools.partial(bert_forward, enc_num=12, num_heads=NH))
    xs, out_mask = fwd(params, input_ids, attention_mask)
    jax.block_until_ready(xs)
    jax.block_until_ready(out_mask)

    assert xs.shape == (B, S, H) and xs.dtype == jnp.float32
    assert out_mask.shape == (B, S) and out_mask.dtype == jnp.bool_
    # TODO(synk): pretrained HF weight loading / NestedTensor wrapper class
    # are out of scope; outputs are returned as a plain (features, mask) tuple.
    print("KERNEL_OK")
</pallas_src>

<mosaic_0001>
module attributes {stable_mosaic.version = 11 : i64} {
  func.func @_embed_ln_kernel(%arg0: i32, %arg1: memref<8x32xf32, #tpu.memory_space<vmem>>, %arg2: memref<8x32xf32, #tpu.memory_space<vmem>>, %arg3: memref<1x32xf32, #tpu.memory_space<vmem>>, %arg4: memref<1x32xf32, #tpu.memory_space<vmem>>, %arg5: memref<1x32xf32, #tpu.memory_space<vmem>>, %arg6: memref<8x32xbf16, #tpu.memory_space<vmem>>) attributes {dimension_semantics = [#tpu.dimension_semantics<parallel>], iteration_bounds = array<i64: 2>, scalar_prefetch = 0 : i64, scratch_operands = 0 : i64, tpu.core_type = #tpu.core_type<tc>, window_params = [{transform_indices = @transform_0, window_bounds = array<i64: 8, 32>}, {pipeline_mode = #tpu.pipeline_mode<synchronous>, transform_indices = @transform_1, window_bounds = array<i64: 8, 32>}, {pipeline_mode = #tpu.pipeline_mode<synchronous>, transform_indices = @transform_2, window_bounds = array<i64: 1, 32>}, {pipeline_mode = #tpu.pipeline_mode<synchronous>, transform_indices = @transform_3, window_bounds = array<i64: 1, 32>}, {pipeline_mode = #tpu.pipeline_mode<synchronous>, transform_indices = @transform_4, window_bounds = array<i64: 1, 32>}, {transform_indices = @transform_5, window_bounds = array<i64: 8, 32>}]} {
    %c0 = arith.constant 0 : index
    %c0_0 = arith.constant 0 : index
    %0 = vector.load %arg1[%c0, %c0_0] : memref<8x32xf32, #tpu.memory_space<vmem>>, vector<8x32xf32>
    %c0_1 = arith.constant 0 : index
    %c0_2 = arith.constant 0 : index
    %1 = vector.load %arg2[%c0_1, %c0_2] : memref<8x32xf32, #tpu.memory_space<vmem>>, vector<8x32xf32>
    %2 = arith.addf %0, %1 : vector<8x32xf32>
    %c0_3 = arith.constant 0 : index
    %c0_4 = arith.constant 0 : index
    %3 = vector.load %arg3[%c0_3, %c0_4] : memref<1x32xf32, #tpu.memory_space<vmem>>, vector<1x32xf32>
    %4 = vector.broadcast %3 : vector<1x32xf32> to vector<8x32xf32>
    %5 = arith.addf %2, %4 : vector<8x32xf32>
    %cst = arith.constant dense<0.000000e+00> : vector<8xf32>
    %6 = vector.multi_reduction <add>, %5, %cst [1] : vector<8x32xf32> to vector<8xf32>
    %7 = vector.shape_cast %6 : vector<8xf32> to vector<8x1xf32>
    %cst_5 = arith.constant 3.200000e+01 : f32
    %8 = vector.broadcast %cst_5 : f32 to vector<8x1xf32>
    %9 = arith.divf %7, %8 : vector<8x1xf32>
    %10 = vector.broadcast %9 : vector<8x1xf32> to vector<8x32xf32>
    %11 = arith.subf %5, %10 : vector<8x32xf32>
    %12 = arith.mulf %11, %11 : vector<8x32xf32>
    %cst_6 = arith.constant dense<0.000000e+00> : vector<8xf32>
    %13 = vector.multi_reduction <add>, %12, %cst_6 [1] : vector<8x32xf32> to vector<8xf32>
    %14 = vector.shape_cast %13 : vector<8xf32> to vector<8x1xf32>
    %cst_7 = arith.constant 3.200000e+01 : f32
    %15 = vector.broadcast %cst_7 : f32 to vector<8x1xf32>
    %16 = arith.divf %14, %15 : vector<8x1xf32>
    %17 = vector.broadcast %9 : vector<8x1xf32> to vector<8x32xf32>
    %18 = arith.subf %5, %17 : vector<8x32xf32>
    %cst_8 = arith.constant 9.99999996E-13 : f32
    %19 = vector.broadcast %cst_8 : f32 to vector<8x1xf32>
    %20 = arith.addf %16, %19 : vector<8x1xf32>
    %21 = math.rsqrt %20 : vector<8x1xf32>
    %22 = vector.broadcast %21 : vector<8x1xf32> to vector<8x32xf32>
    %23 = arith.mulf %18, %22 : vector<8x32xf32>
    %c0_9 = arith.constant 0 : index
    %c0_10 = arith.constant 0 : index
    %24 = vector.load %arg4[%c0_9, %c0_10] : memref<1x32xf32, #tpu.memory_space<vmem>>, vector<1x32xf32>
    %25 = vector.broadcast %24 : vector<1x32xf32> to vector<8x32xf32>
    %26 = arith.mulf %23, %25 : vector<8x32xf32>
    %c0_11 = arith.constant 0 : index
    %c0_12 = arith.constant 0 : index
    %27 = vector.load %arg5[%c0_11, %c0_12] : memref<1x32xf32, #tpu.memory_space<vmem>>, vector<1x32xf32>
    %28 = vector.broadcast %27 : vector<1x32xf32> to vector<8x32xf32>
    %29 = arith.addf %26, %28 : vector<8x32xf32>
    %30 = arith.truncf %29 : vector<8x32xf32> to vector<8x32xbf16>
    %c0_13 = arith.constant 0 : index
    %c0_14 = arith.constant 0 : index
    %31 = vector.load %arg6[%c0_13, %c0_14] : memref<8x32xbf16, #tpu.memory_space<vmem>>, vector<8x32xbf16>
    tpu.vector_store %arg6[%c0_13, %c0_14], %30 {strides = array<i32>} : memref<8x32xbf16, #tpu.memory_space<vmem>>, vector<8x32xbf16>,
    return
  }
  func.func @transform_0(%arg0: i32) -> (i32, i32) {
    %c0_i32 = arith.constant 0 : i32
    %c0_i32_0 = arith.constant 0 : i32
    return %arg0, %c0_i32 : i32, i32
  }
  func.func @transform_1(%arg0: i32) -> (i32, i32) {
    %c0_i32 = arith.constant 0 : i32
    %c0_i32_0 = arith.constant 0 : i32
    %c0_i32_1 = arith.constant 0 : i32
    return %c0_i32, %c0_i32_0 : i32, i32
  }
  func.func @transform_2(%arg0: i32) -> (i32, i32) {
    %c0_i32 = arith.constant 0 : i32
    %c0_i32_0 = arith.constant 0 : i32
    %c0_i32_1 = arith.constant 0 : i32
    return %c0_i32, %c0_i32_0 : i32, i32
  }
  func.func @transform_3(%arg0: i32) -> (i32, i32) {
    %c0_i32 = arith.constant 0 : i32
    %c0_i32_0 = arith.constant 0 : i32
    %c0_i32_1 = arith.constant 0 : i32
    return %c0_i32, %c0_i32_0 : i32, i32
  }
  func.func @transform_4(%arg0: i32) -> (i32, i32) {
    %c0_i32 = arith.constant 0 : i32
    %c0_i32_0 = arith.constant 0 : i32
    %c0_i32_1 = arith.constant 0 : i32
    return %c0_i32, %c0_i32_0 : i32, i32
  }
  func.func @transform_5(%arg0: i32) -> (i32, i32) {
    %c0_i32 = arith.constant 0 : i32
    %c0_i32_0 = arith.constant 0 : i32
    return %arg0, %c0_i32 : i32, i32
  }
}

module attributes {stable_mosaic.version = 11 : i64} {
  func.func @_matmul_bias_kernel(%arg0: i32, %arg1: i32, %arg2: i32, %arg3: memref<16x32xbf16, #tpu.memory_space<vmem>>, %arg4: memref<1x32x32xbf16, #tpu.memory_space<vmem>>, %arg5: memref<1x1x32xf32, #tpu.memory_space<vmem>>, %arg6: memref<1x16x32xbf16, #tpu.memory_space<vmem>>, %arg7: memref<16x32xf32, #tpu.memory_space<vmem>>) attributes {dimension_semantics = [#tpu.dimension_semantics<parallel>, #tpu.dimension_semantics<parallel>, #tpu.dimension_semantics<arbitrary>], iteration_bounds = array<i64: 1, 3, 1>, scalar_prefetch = 0 : i64, scratch_operands = 1 : i64, tpu.core_type = #tpu.core_type<tc>, window_params = [{transform_indices = @transform_0, window_bounds = array<i64: 16, 32>}, {transform_indices = @transform_1, window_bounds = array<i64: 1, 32, 32>}, {transform_indices = @transform_2, window_bounds = array<i64: 1, 1, 32>}, {transform_indices = @transform_3, window_bounds = array<i64: 1, 16, 32>}]} {
    %c0_i32 = arith.constant 0 : i32
    %0 = arith.cmpi eq, %arg2, %c0_i32 : i32
    %1 = arith.extui %0 : i1 to i32
    %c0_i32_0 = arith.constant 0 : i32
    %2 = arith.cmpi ne, %1, %c0_i32_0 : i32
    scf.if %2 {
      %cst_11 = arith.constant 0.000000e+00 : f32
      %13 = vector.broadcast %cst_11 : f32 to vector<16x32xf32>
      %c0_12 = arith.constant 0 : index
      %c0_13 = arith.constant 0 : index
      %14 = vector.load %arg7[%c0_12, %c0_13] : memref<16x32xf32, #tpu.memory_space<vmem>>, vector<16x32xf32>
      tpu.vector_store %arg7[%c0_12, %c0_13], %13 {strides = array<i32>} : memref<16x32xf32, #tpu.memory_space<vmem>>, vector<16x32xf32>,
    } else {
    }
    %c0 = arith.constant 0 : index
    %c0_1 = arith.constant 0 : index
    %3 = vector.load %arg7[%c0, %c0_1] : memref<16x32xf32, #tpu.memory_space<vmem>>, vector<16x32xf32>
    %c0_2 = arith.constant 0 : index
    %c0_3 = arith.constant 0 : index
    %4 = vector.load %arg3[%c0_2, %c0_3] : memref<16x32xbf16, #tpu.memory_space<vmem>>, vector<16x32xbf16>
    %c0_4 = arith.constant 0 : index
    %c0_5 = arith.constant 0 : index
    %c0_6 = arith.constant 0 : index
    %5 = vector.load %arg4[%c0_4, %c0_5, %c0_6] : memref<1x32x32xbf16, #tpu.memory_space<vmem>>, vector<1x32x32xbf16>
    %6 = vector.shape_cast %5 : vector<1x32x32xbf16> to vector<32x32xbf16>
    %cst = arith.constant dense<0.000000e+00> : vector<16x32xf32>
    %7 = tpu.matmul %4, %6, %cst {dimension_numbers = #tpu.dot_dimension_numbers<[1], [0], [0], [1], [0, 0, 1, 1], [], []>} : vector<16x32xbf16>, vector<32x32xbf16>, vector<16x32xf32> -> vector<16x32xf32>
    %8 = arith.addf %3, %7 : vector<16x32xf32>
    %c0_7 = arith.constant 0 : index
    %c0_8 = arith.constant 0 : index
    %9 = vector.load %arg7[%c0_7, %c0_8] : memref<16x32xf32, #tpu.memory_space<vmem>>, vector<16x32xf32>
    tpu.vector_store %arg7[%c0_7, %c0_8], %8 {strides = array<i32>} : memref<16x32xf32, #tpu.memory_space<vmem>>, vector<16x32xf32>,
    %c0_i32_9 = arith.constant 0 : i32
    %10 = arith.cmpi eq, %arg2, %c0_i32_9 : i32
    %11 = arith.extui %10 : i1 to i32
    %c0_i32_10 = arith.constant 0 : i32
    %12 = arith.cmpi ne, %11, %c0_i32_10 : i32
    scf.if %12 {
      %c0_11 = arith.constant 0 : index
      %c0_12 = arith.constant 0 : index
      %13 = vector.load %arg7[%c0_11, %c0_12] : memref<16x32xf32, #tpu.memory_space<vmem>>, vector<16x32xf32>
      %c0_13 = arith.constant 0 : index
      %c0_14 = arith.constant 0 : index
      %c0_15 = arith.constant 0 : index
      %14 = vector.load %arg5[%c0_13, %c0_14, %c0_15] : memref<1x1x32xf32, #tpu.memory_space<vmem>>, vector<1x1x32xf32>
      %15 = vector.shape_cast %14 : vector<1x1x32xf32> to vector<1x32xf32>
      %16 = vector.broadcast %15 : vector<1x32xf32> to vector<16x32xf32>
      %17 = arith.addf %13, %16 : vector<16x32xf32>
      %18 = arith.truncf %17 : vector<16x32xf32> to vector<16x32xbf16>
      %c0_16 = arith.constant 0 : index
      %c0_17 = arith.constant 0 : index
      %c0_18 = arith.constant 0 : index
      %19 = vector.load %arg6[%c0_16, %c0_17, %c0_18] : memref<1x16x32xbf16, #tpu.memory_space<vmem>>, vector<1x16x32xbf16>
      %20 = vector.shape_cast %19 : vector<1x16x32xbf16> to vector<16x32xbf16>
      %21 = vector.shape_cast %18 : vector<16x32xbf16> to vector<1x16x32xbf16>
      tpu.vector_store %arg6[%c0_16, %c0_17, %c0_18], %21 {strides = array<i32>} : memref<1x16x32xbf16, #tpu.memory_space<vmem>>, vector<1x16x32xbf16>,
    } else {
    }
    return
  }
  func.func @transform_0(%arg0: i32, %arg1: i32, %arg2: i32) -> (i32, i32) {
    %c0_i32 = arith.constant 0 : i32
    return %arg0, %arg2 : i32, i32
  }
  func.func @transform_1(%arg0: i32, %arg1: i32, %arg2: i32) -> (i32, i32, i32) {
    %c0_i32 = arith.constant 0 : i32
    %c0_i32_0 = arith.constant 0 : i32
    return %arg1, %arg2, %c0_i32 : i32, i32, i32
  }
  func.func @transform_2(%arg0: i32, %arg1: i32, %arg2: i32) -> (i32, i32, i32) {
    %c0_i32 = arith.constant 0 : i32
    %c0_i32_0 = arith.constant 0 : i32
    %c0_i32_1 = arith.constant 0 : i32
    return %arg1, %c0_i32, %c0_i32_0 : i32, i32, i32
  }
  func.func @transform_3(%arg0: i32, %arg1: i32, %arg2: i32) -> (i32, i32, i32) {
    %c0_i32 = arith.constant 0 : i32
    %c0_i32_0 = arith.constant 0 : i32
    return %arg1, %arg0, %c0_i32 : i32, i32, i32
  }
}

module attributes {stable_mosaic.version = 11 : i64} {
  func.func @_matmul_res_ln_kernel(%arg0: i32, %arg1: i32, %arg2: memref<16x32xbf16, #tpu.memory_space<vmem>>, %arg3: memref<32x32xbf16, #tpu.memory_space<vmem>>, %arg4: memref<1x32xf32, #tpu.memory_space<vmem>>, %arg5: memref<16x32xbf16, #tpu.memory_space<vmem>>, %arg6: memref<1x32xf32, #tpu.memory_space<vmem>>, %arg7: memref<1x32xf32, #tpu.memory_space<vmem>>, %arg8: memref<16x32xbf16, #tpu.memory_space<vmem>>, %arg9: memref<16x32xf32, #tpu.memory_space<vmem>>) attributes {dimension_semantics = [#tpu.dimension_semantics<parallel>, #tpu.dimension_semantics<arbitrary>], iteration_bounds = array<i64: 1, 1>, scalar_prefetch = 0 : i64, scratch_operands = 1 : i64, tpu.core_type = #tpu.core_type<tc>, window_params = [{transform_indices = @transform_0, window_bounds = array<i64: 16, 32>}, {transform_indices = @transform_1, window_bounds = array<i64: 32, 32>}, {pipeline_mode = #tpu.pipeline_mode<synchronous>, transform_indices = @transform_2, window_bounds = array<i64: 1, 32>}, {transform_indices = @transform_3, window_bounds = array<i64: 16, 32>}, {pipeline_mode = #tpu.pipeline_mode<synchronous>, transform_indices = @transform_4, window_bounds = array<i64: 1, 32>}, {pipeline_mode = #tpu.pipeline_mode<synchronous>, transform_indices = @transform_5, window_bounds = array<i64: 1, 32>}, {transform_indices = @transform_6, window_bounds = array<i64: 16, 32>}]} {
    %c0_i32 = arith.constant 0 : i32
    %0 = arith.cmpi eq, %arg1, %c0_i32 : i32
    %1 = arith.extui %0 : i1 to i32
    %c0_i32_0 = arith.constant 0 : i32
    %2 = arith.cmpi ne, %1, %c0_i32_0 : i32
    scf.if %2 {
      %cst_10 = arith.constant 0.000000e+00 : f32
      %12 = vector.broadcast %cst_10 : f32 to vector<16x32xf32>
      %c0_11 = arith.constant 0 : index
      %c0_12 = arith.constant 0 : index
      %13 = vector.load %arg9[%c0_11, %c0_12] : memref<16x32xf32, #tpu.memory_space<vmem>>, vector<16x32xf32>
      tpu.vector_store %arg9[%c0_11, %c0_12], %12 {strides = array<i32>} : memref<16x32xf32, #tpu.memory_space<vmem>>, vector<16x32xf32>,
    } else {
    }
    %c0 = arith.constant 0 : index
    %c0_1 = arith.constant 0 : index
    %3 = vector.load %arg9[%c0, %c0_1] : memref<16x32xf32, #tpu.memory_space<vmem>>, vector<16x32xf32>
    %c0_2 = arith.constant 0 : index
    %c0_3 = arith.constant 0 : index
    %4 = vector.load %arg2[%c0_2, %c0_3] : memref<16x32xbf16, #tpu.memory_space<vmem>>, vector<16x32xbf16>
    %c0_4 = arith.constant 0 : index
    %c0_5 = arith.constant 0 : index
    %5 = vector.load %arg3[%c0_4, %c0_5] : memref<32x32xbf16, #tpu.memory_space<vmem>>, vector<32x32xbf16>
    %cst = arith.constant dense<0.000000e+00> : vector<16x32xf32>
    %6 = tpu.matmul %4, %5, %cst {dimension_numbers = #tpu.dot_dimension_numbers<[1], [0], [0], [1], [0, 0, 1, 1], [], []>} : vector<16x32xbf16>, vector<32x32xbf16>, vector<16x32xf32> -> vector<16x32xf32>
    %7 = arith.addf %3, %6 : vector<16x32xf32>
    %c0_6 = arith.constant 0 : index
    %c0_7 = arith.constant 0 : index
    %8 = vector.load %arg9[%c0_6, %c0_7] : memref<16x32xf32, #tpu.memory_space<vmem>>, vector<16x32xf32>
    tpu.vector_store %arg9[%c0_6, %c0_7], %7 {strides = array<i32>} : memref<16x32xf32, #tpu.memory_space<vmem>>, vector<16x32xf32>,
    %c0_i32_8 = arith.constant 0 : i32
    %9 = arith.cmpi eq, %arg1, %c0_i32_8 : i32
    %10 = arith.extui %9 : i1 to i32
    %c0_i32_9 = arith.constant 0 : i32
    %11 = arith.cmpi ne, %10, %c0_i32_9 : i32
    scf.if %11 {
      %c0_10 = arith.constant 0 : index
      %c0_11 = arith.constant 0 : index
      %12 = vector.load %arg9[%c0_10, %c0_11] : memref<16x32xf32, #tpu.memory_space<vmem>>, vector<16x32xf32>
      %c0_12 = arith.constant 0 : index
      %c0_13 = arith.constant 0 : index
      %13 = vector.load %arg4[%c0_12, %c0_13] : memref<1x32xf32, #tpu.memory_space<vmem>>, vector<1x32xf32>
      %14 = vector.broadcast %13 : vector<1x32xf32> to vector<16x32xf32>
      %15 = arith.addf %12, %14 : vector<16x32xf32>
      %c0_14 = arith.constant 0 : index
      %c0_15 = arith.constant 0 : index
      %16 = vector.load %arg5[%c0_14, %c0_15] : memref<16x32xbf16, #tpu.memory_space<vmem>>, vector<16x32xbf16>
      %17 = arith.extf %16 : vector<16x32xbf16> to vector<16x32xf32>
      %18 = arith.addf %15, %17 : vector<16x32xf32>
      %cst_16 = arith.constant dense<0.000000e+00> : vector<16xf32>
      %19 = vector.multi_reduction <add>, %18, %cst_16 [1] : vector<16x32xf32> to vector<16xf32>
      %20 = vector.shape_cast %19 : vector<16xf32> to vector<16x1xf32>
      %cst_17 = arith.constant 3.200000e+01 : f32
      %21 = vector.broadcast %cst_17 : f32 to vector<16x1xf32>
      %22 = arith.divf %20, %21 : vector<16x1xf32>
      %23 = vector.broadcast %22 : vector<16x1xf32> to vector<16x32xf32>
      %24 = arith.subf %18, %23 : vector<16x32xf32>
      %25 = arith.mulf %24, %24 : vector<16x32xf32>
      %cst_18 = arith.constant dense<0.000000e+00> : vector<16xf32>
      %26 = vector.multi_reduction <add>, %25, %cst_18 [1] : vector<16x32xf32> to vector<16xf32>
      %27 = vector.shape_cast %26 : vector<16xf32> to vector<16x1xf32>
      %cst_19 = arith.constant 3.200000e+01 : f32
      %28 = vector.broadcast %cst_19 : f32 to vector<16x1xf32>
      %29 = arith.divf %27, %28 : vector<16x1xf32>
      %30 = vector.broadcast %22 : vector<16x1xf32> to vector<16x32xf32>
      %31 = arith.subf %18, %30 : vector<16x32xf32>
      %cst_20 = arith.constant 9.99999996E-13 : f32
      %32 = vector.broadcast %cst_20 : f32 to vector<16x1xf32>
      %33 = arith.addf %29, %32 : vector<16x1xf32>
      %34 = math.rsqrt %33 : vector<16x1xf32>
      %35 = vector.broadcast %34 : vector<16x1xf32> to vector<16x32xf32>
      %36 = arith.mulf %31, %35 : vector<16x32xf32>
      %c0_21 = arith.constant 0 : index
      %c0_22 = arith.constant 0 : index
      %37 = vector.load %arg6[%c0_21, %c0_22] : memref<1x32xf32, #tpu.memory_space<vmem>>, vector<1x32xf32>
      %38 = vector.broadcast %37 : vector<1x32xf32> to vector<16x32xf32>
      %39 = arith.mulf %36, %38 : vector<16x32xf32>
      %c0_23 = arith.constant 0 : index
      %c0_24 = arith.constant 0 : index
      %40 = vector.load %arg7[%c0_23, %c0_24] : memref<1x32xf32, #tpu.memory_space<vmem>>, vector<1x32xf32>
      %41 = vector.broadcast %40 : vector<1x32xf32> to vector<16x32xf32>
      %42 = arith.addf %39, %41 : vector<16x32xf32>
      %43 = arith.truncf %42 : vector<16x32xf32> to vector<16x32xbf16>
      %c0_25 = arith.constant 0 : index
      %c0_26 = arith.constant 0 : index
      %44 = vector.load %arg8[%c0_25, %c0_26] : memref<16x32xbf16, #tpu.memory_space<vmem>>, vector<16x32xbf16>
      tpu.vector_store %arg8[%c0_25, %c0_26], %43 {strides = array<i32>} : memref<16x32xbf16, #tpu.memory_space<vmem>>, vector<16x32xbf16>,
    } else {
    }
    return
  }
  func.func @transform_0(%arg0: i32, %arg1: i32) -> (i32, i32) {
    %c0_i32 = arith.constant 0 : i32
    return %arg0, %arg1 : i32, i32
  }
  func.func @transform_1(%arg0: i32, %arg1: i32) -> (i32, i32) {
    %c0_i32 = arith.constant 0 : i32
    %c0_i32_0 = arith.constant 0 : i32
    return %arg1, %c0_i32 : i32, i32
  }
  func.func @transform_2(%arg0: i32, %arg1: i32) -> (i32, i32) {
    %c0_i32 = arith.constant 0 : i32
    %c0_i32_0 = arith.constant 0 : i32
    %c0_i32_1 = arith.constant 0 : i32
    return %c0_i32, %c0_i32_0 : i32, i32
  }
  func.func @transform_3(%arg0: i32, %arg1: i32) -> (i32, i32) {
    %c0_i32 = arith.constant 0 : i32
    %c0_i32_0 = arith.constant 0 : i32
    return %arg0, %c0_i32 : i32, i32
  }
  func.func @transform_4(%arg0: i32, %arg1: i32) -> (i32, i32) {
    %c0_i32 = arith.constant 0 : i32
    %c0_i32_0 = arith.constant 0 : i32
    %c0_i32_1 = arith.constant 0 : i32
    return %c0_i32, %c0_i32_0 : i32, i32
  }
  func.func @transform_5(%arg0: i32, %arg1: i32) -> (i32, i32) {
    %c0_i32 = arith.constant 0 : i32
    %c0_i32_0 = arith.constant 0 : i32
    %c0_i32_1 = arith.constant 0 : i32
    return %c0_i32, %c0_i32_0 : i32, i32
  }
  func.func @transform_6(%arg0: i32, %arg1: i32) -> (i32, i32) {
    %c0_i32 = arith.constant 0 : i32
    %c0_i32_0 = arith.constant 0 : i32
    return %arg0, %c0_i32 : i32, i32
  }
}

module attributes {stable_mosaic.version = 11 : i64} {
  func.func @_attention_kernel(%arg0: i32, %arg1: i32, %arg2: i32, %arg3: memref<1x1x8x32xbf16, #tpu.memory_space<vmem>>, %arg4: memref<1x1x8x32xbf16, #tpu.memory_space<vmem>>, %arg5: memref<1x1x8x32xbf16, #tpu.memory_space<vmem>>, %arg6: memref<1x1x8xf32, #tpu.memory_space<vmem>>, %arg7: memref<1x8x32xbf16, #tpu.memory_space<vmem>>) attributes {dimension_semantics = [#tpu.dimension_semantics<parallel>, #tpu.dimension_semantics<parallel>, #tpu.dimension_semantics<parallel>], iteration_bounds = array<i64: 2, 1, 1>, scalar_prefetch = 0 : i64, scratch_operands = 0 : i64, tpu.core_type = #tpu.core_type<tc>, window_params = [{transform_indices = @transform_0, window_bounds = array<i64: 1, 1, 8, 32>}, {transform_indices = @transform_1, window_bounds = array<i64: 1, 1, 8, 32>}, {transform_indices = @transform_2, window_bounds = array<i64: 1, 1, 8, 32>}, {transform_indices = @transform_3, window_bounds = array<i64: 1, 1, 8>}, {transform_indices = @transform_4, window_bounds = array<i64: 1, 8, 32>}]} {
    %c0 = arith.constant 0 : index
    %c0_0 = arith.constant 0 : index
    %c0_1 = arith.constant 0 : index
    %0 = vector.load %arg6[%c0, %c0_0, %c0_1] : memref<1x1x8xf32, #tpu.memory_space<vmem>>, vector<1x1x8xf32>
    %1 = vector.shape_cast %0 : vector<1x1x8xf32> to vector<1x8xf32>
    %c0_2 = arith.constant 0 : index
    %c0_3 = arith.constant 0 : index
    %c0_4 = arith.constant 0 : index
    %c0_5 = arith.constant 0 : index
    %2 = vector.load %arg3[%c0_2, %c0_3, %c0_4, %c0_5] : memref<1x1x8x32xbf16, #tpu.memory_space<vmem>>, vector<1x1x8x8xbf16>
    %3 = vector.shape_cast %2 : vector<1x1x8x8xbf16> to vector<8x8xbf16>
    %c0_6 = arith.constant 0 : index
    %c0_7 = arith.constant 0 : index
    %c0_8 = arith.constant 0 : index
    %c0_9 = arith.constant 0 : index
    %4 = vector.load %arg4[%c0_6, %c0_7, %c0_8, %c0_9] : memref<1x1x8x32xbf16, #tpu.memory_space<vmem>>, vector<1x1x8x8xbf16>
    %5 = vector.shape_cast %4 : vector<1x1x8x8xbf16> to vector<8x8xbf16>
    %c0_10 = arith.constant 0 : index
    %c0_11 = arith.constant 0 : index
    %c0_12 = arith.constant 0 : index
    %c0_13 = arith.constant 0 : index
    %6 = vector.load %arg5[%c0_10, %c0_11, %c0_12, %c0_13] : memref<1x1x8x32xbf16, #tpu.memory_space<vmem>>, vector<1x1x8x8xbf16>
    %7 = vector.shape_cast %6 : vector<1x1x8x8xbf16> to vector<8x8xbf16>
    %cst = arith.constant dense<0.000000e+00> : vector<8x8xf32>
    %8 = tpu.matmul %3, %5, %cst {dimension_numbers = #tpu.dot_dimension_numbers<[1], [1], [0], [0], [0, 0, 1, 0], [], []>} : vector<8x8xbf16>, vector<8x8xbf16>, vector<8x8xf32> -> vector<8x8xf32>
    %9 = vector.broadcast %1 : vector<1x8xf32> to vector<8x8xf32>
    %10 = arith.addf %8, %9 : vector<8x8xf32>
    %cst_14 = arith.constant dense<0xFF800000> : vector<8xf32>
    %11 = vector.multi_reduction <maximumf>, %10, %cst_14 [1] : vector<8x8xf32> to vector<8xf32>
    %12 = vector.shape_cast %11 : vector<8xf32> to vector<8x1xf32>
    %13 = vector.broadcast %12 : vector<8x1xf32> to vector<8x8xf32>
    %14 = arith.subf %10, %13 : vector<8x8xf32>
    %15 = math.exp %14 : vector<8x8xf32>
    %cst_15 = arith.constant dense<0.000000e+00> : vector<8xf32>
    %16 = vector.multi_reduction <add>, %15, %cst_15 [1] : vector<8x8xf32> to vector<8xf32>
    %17 = vector.shape_cast %16 : vector<8xf32> to vector<8x1xf32>
    %18 = tpu.reciprocal %17 {approx = true} : vector<8x1xf32> -> vector<8x1xf32>
    %19 = vector.broadcast %18 : vector<8x1xf32> to vector<8x8xf32>
    %20 = arith.mulf %15, %19 : vector<8x8xf32>
    %21 = arith.truncf %20 : vector<8x8xf32> to vector<8x8xbf16>
    %cst_16 = arith.constant dense<0.000000e+00> : vector<8x8xf32>
    %22 = tpu.matmul %21, %7, %cst_16 {dimension_numbers = #tpu.dot_dimension_numbers<[1], [0], [0], [1], [0, 0, 1, 1], [], []>} : vector<8x8xbf16>, vector<8x8xbf16>, vector<8x8xf32> -> vector<8x8xf32>
    %c0_17 = arith.constant 0 : index
    %c0_18 = arith.constant 0 : index
    %c0_19 = arith.constant 0 : index
    %c8 = arith.constant 8 : index
    %23 = vector.load %arg3[%c0_17, %c0_18, %c0_19, %c8] : memref<1x1x8x32xbf16, #tpu.memory_space<vmem>>, vector<1x1x8x8xbf16>
    %24 = vector.shape_cast %23 : vector<1x1x8x8xbf16> to vector<8x8xbf16>
    %c0_20 = arith.constant 0 : index
    %c0_21 = arith.constant 0 : index
    %c0_22 = arith.constant 0 : index
    %c8_23 = arith.constant 8 : index
    %25 = vector.load %arg4[%c0_20, %c0_21, %c0_22, %c8_23] : memref<1x1x8x32xbf16, #tpu.memory_space<vmem>>, vector<1x1x8x8xbf16>
    %26 = vector.shape_cast %25 : vector<1x1x8x8xbf16> to vector<8x8xbf16>
    %c0_24 = arith.constant 0 : index
    %c0_25 = arith.constant 0 : index
    %c0_26 = arith.constant 0 : index
    %c8_27 = arith.constant 8 : index
    %27 = vector.load %arg5[%c0_24, %c0_25, %c0_26, %c8_27] : memref<1x1x8x32xbf16, #tpu.memory_space<vmem>>, vector<1x1x8x8xbf16>
    %28 = vector.shape_cast %27 : vector<1x1x8x8xbf16> to vector<8x8xbf16>
    %cst_28 = arith.constant dense<0.000000e+00> : vector<8x8xf32>
    %29 = tpu.matmul %24, %26, %cst_28 {dimension_numbers = #tpu.dot_dimension_numbers<[1], [1], [0], [0], [0, 0, 1, 0], [], []>} : vector<8x8xbf16>, vector<8x8xbf16>, vector<8x8xf32> -> vector<8x8xf32>
    %30 = vector.broadcast %1 : vector<1x8xf32> to vector<8x8xf32>
    %31 = arith.addf %29, %30 : vector<8x8xf32>
    %cst_29 = arith.constant dense<0xFF800000> : vector<8xf32>
    %32 = vector.multi_reduction <maximumf>, %31, %cst_29 [1] : vector<8x8xf32> to vector<8xf32>
    %33 = vector.shape_cast %32 : vector<8xf32> to vector<8x1xf32>
    %34 = vector.broadcast %33 : vector<8x1xf32> to vector<8x8xf32>
    %35 = arith.subf %31, %34 : vector<8x8xf32>
    %36 = math.exp %35 : vector<8x8xf32>
    %cst_30 = arith.constant dense<0.000000e+00> : vector<8xf32>
    %37 = vector.multi_reduction <add>, %36, %cst_30 [1] : vector<8x8xf32> to vector<8xf32>
    %38 = vector.shape_cast %37 : vector<8xf32> to vector<8x1xf32>
    %39 = tpu.reciprocal %38 {approx = true} : vector<8x1xf32> -> vector<8x1xf32>
    %40 = vector.broadcast %39 : vector<8x1xf32> to vector<8x8xf32>
    %41 = arith.mulf %36, %40 : vector<8x8xf32>
    %42 = arith.truncf %41 : vector<8x8xf32> to vector<8x8xbf16>
    %cst_31 = arith.constant dense<0.000000e+00> : vector<8x8xf32>
    %43 = tpu.matmul %42, %28, %cst_31 {dimension_numbers = #tpu.dot_dimension_numbers<[1], [0], [0], [1], [0, 0, 1, 1], [], []>} : vector<8x8xbf16>, vector<8x8xbf16>, vector<8x8xf32> -> vector<8x8xf32>
    %c0_32 = arith.constant 0 : index
    %c0_33 = arith.constant 0 : index
    %c0_34 = arith.constant 0 : index
    %c16 = arith.constant 16 : index
    %44 = vector.load %arg3[%c0_32, %c0_33, %c0_34, %c16] : memref<1x1x8x32xbf16, #tpu.memory_space<vmem>>, vector<1x1x8x8xbf16>
    %45 = vector.shape_cast %44 : vector<1x1x8x8xbf16> to vector<8x8xbf16>
    %c0_35 = arith.constant 0 : index
    %c0_36 = arith.constant 0 : index
    %c0_37 = arith.constant 0 : index
    %c16_38 = arith.constant 16 : index
    %46 = vector.load %arg4[%c0_35, %c0_36, %c0_37, %c16_38] : memref<1x1x8x32xbf16, #tpu.memory_space<vmem>>, vector<1x1x8x8xbf16>
    %47 = vector.shape_cast %46 : vector<1x1x8x8xbf16> to vector<8x8xbf16>
    %c0_39 = arith.constant 0 : index
    %c0_40 = arith.constant 0 : index
    %c0_41 = arith.constant 0 : index
    %c16_42 = arith.constant 16 : index
    %48 = vector.load %arg5[%c0_39, %c0_40, %c0_41, %c16_42] : memref<1x1x8x32xbf16, #tpu.memory_space<vmem>>, vector<1x1x8x8xbf16>
    %49 = vector.shape_cast %48 : vector<1x1x8x8xbf16> to vector<8x8xbf16>
    %cst_43 = arith.constant dense<0.000000e+00> : vector<8x8xf32>
    %50 = tpu.matmul %45, %47, %cst_43 {dimension_numbers = #tpu.dot_dimension_numbers<[1], [1], [0], [0], [0, 0, 1, 0], [], []>} : vector<8x8xbf16>, vector<8x8xbf16>, vector<8x8xf32> -> vector<8x8xf32>
    %51 = vector.broadcast %1 : vector<1x8xf32> to vector<8x8xf32>
    %52 = arith.addf %50, %51 : vector<8x8xf32>
    %cst_44 = arith.constant dense<0xFF800000> : vector<8xf32>
    %53 = vector.multi_reduction <maximumf>, %52, %cst_44 [1] : vector<8x8xf32> to vector<8xf32>
    %54 = vector.shape_cast %53 : vector<8xf32> to vector<8x1xf32>
    %55 = vector.broadcast %54 : vector<8x1xf32> to vector<8x8xf32>
    %56 = arith.subf %52, %55 : vector<8x8xf32>
    %57 = math.exp %56 : vector<8x8xf32>
    %cst_45 = arith.constant dense<0.000000e+00> : vector<8xf32>
    %58 = vector.multi_reduction <add>, %57, %cst_45 [1] : vector<8x8xf32> to vector<8xf32>
    %59 = vector.shape_cast %58 : vector<8xf32> to vector<8x1xf32>
    %60 = tpu.reciprocal %59 {approx = true} : vector<8x1xf32> -> vector<8x1xf32>
    %61 = vector.broadcast %60 : vector<8x1xf32> to vector<8x8xf32>
    %62 = arith.mulf %57, %61 : vector<8x8xf32>
    %63 = arith.truncf %62 : vector<8x8xf32> to vector<8x8xbf16>
    %cst_46 = arith.constant dense<0.000000e+00> : vector<8x8xf32>
    %64 = tpu.matmul %63, %49, %cst_46 {dimension_numbers = #tpu.dot_dimension_numbers<[1], [0], [0], [1], [0, 0, 1, 1], [], []>} : vector<8x8xbf16>, vector<8x8xbf16>, vector<8x8xf32> -> vector<8x8xf32>
    %c0_47 = arith.constant 0 : index
    %c0_48 = arith.constant 0 : index
    %c0_49 = arith.constant 0 : index
    %c24 = arith.constant 24 : index
    %65 = vector.load %arg3[%c0_47, %c0_48, %c0_49, %c24] : memref<1x1x8x32xbf16, #tpu.memory_space<vmem>>, vector<1x1x8x8xbf16>
    %66 = vector.shape_cast %65 : vector<1x1x8x8xbf16> to vector<8x8xbf16>
    %c0_50 = arith.constant 0 : index
    %c0_51 = arith.constant 0 : index
    %c0_52 = arith.constant 0 : index
    %c24_53 = arith.constant 24 : index
    %67 = vector.load %arg4[%c0_50, %c0_51, %c0_52, %c24_53] : memref<1x1x8x32xbf16, #tpu.memory_space<vmem>>, vector<1x1x8x8xbf16>
    %68 = vector.shape_cast %67 : vector<1x1x8x8xbf16> to vector<8x8xbf16>
    %c0_54 = arith.constant 0 : index
    %c0_55 = arith.constant 0 : index
    %c0_56 = arith.constant 0 : index
    %c24_57 = arith.constant 24 : index
    %69 = vector.load %arg5[%c0_54, %c0_55, %c0_56, %c24_57] : memref<1x1x8x32xbf16, #tpu.memory_space<vmem>>, vector<1x1x8x8xbf16>
    %70 = vector.shape_cast %69 : vector<1x1x8x8xbf16> to vector<8x8xbf16>
    %cst_58 = arith.constant dense<0.000000e+00> : vector<8x8xf32>
    %71 = tpu.matmul %66, %68, %cst_58 {dimension_numbers = #tpu.dot_dimension_numbers<[1], [1], [0], [0], [0, 0, 1, 0], [], []>} : vector<8x8xbf16>, vector<8x8xbf16>, vector<8x8xf32> -> vector<8x8xf32>
    %72 = vector.broadcast %1 : vector<1x8xf32> to vector<8x8xf32>
    %73 = arith.addf %71, %72 : vector<8x8xf32>
    %cst_59 = arith.constant dense<0xFF800000> : vector<8xf32>
    %74 = vector.multi_reduction <maximumf>, %73, %cst_59 [1] : vector<8x8xf32> to vector<8xf32>
    %75 = vector.shape_cast %74 : vector<8xf32> to vector<8x1xf32>
    %76 = vector.broadcast %75 : vector<8x1xf32> to vector<8x8xf32>
    %77 = arith.subf %73, %76 : vector<8x8xf32>
    %78 = math.exp %77 : vector<8x8xf32>
    %cst_60 = arith.constant dense<0.000000e+00> : vector<8xf32>
    %79 = vector.multi_reduction <add>, %78, %cst_60 [1] : vector<8x8xf32> to vector<8xf32>
    %80 = vector.shape_cast %79 : vector<8xf32> to vector<8x1xf32>
    %81 = tpu.reciprocal %80 {approx = true} : vector<8x1xf32> -> vector<8x1xf32>
    %82 = vector.broadcast %81 : vector<8x1xf32> to vector<8x8xf32>
    %83 = arith.mulf %78, %82 : vector<8x8xf32>
    %84 = arith.truncf %83 : vector<8x8xf32> to vector<8x8xbf16>
    %cst_61 = arith.constant dense<0.000000e+00> : vector<8x8xf32>
    %85 = tpu.matmul %84, %70, %cst_61 {dimension_numbers = #tpu.dot_dimension_numbers<[1], [0], [0], [1], [0, 0, 1, 1], [], []>} : vector<8x8xbf16>, vector<8x8xbf16>, vector<8x8xf32> -> vector<8x8xf32>
    %86 = tpu.concatenate %22, %43, %64, %85 in 1 : vector<8x8xf32>, vector<8x8xf32>, vector<8x8xf32>, vector<8x8xf32> -> vector<8x32xf32>
    %87 = arith.truncf %86 : vector<8x32xf32> to vector<8x32xbf16>
    %c0_62 = arith.constant 0 : index
    %c0_63 = arith.constant 0 : index
    %c0_64 = arith.constant 0 : index
    %88 = vector.load %arg7[%c0_62, %c0_63, %c0_64] : memref<1x8x32xbf16, #tpu.memory_space<vmem>>, vector<1x8x32xbf16>
    %89 = vector.shape_cast %88 : vector<1x8x32xbf16> to vector<8x32xbf16>
    %90 = vector.shape_cast %87 : vector<8x32xbf16> to vector<1x8x32xbf16>
    tpu.vector_store %arg7[%c0_62, %c0_63, %c0_64], %90 {strides = array<i32>} : memref<1x8x32xbf16, #tpu.memory_space<vmem>>, vector<1x8x32xbf16>,
    return
  }
  func.func @transform_0(%arg0: i32, %arg1: i32, %arg2: i32) -> (i32, i32, i32, i32) {
    %c0_i32 = arith.constant 0 : i32
    %c0_i32_0 = arith.constant 0 : i32
    return %c0_i32, %arg0, %arg2, %arg1 : i32, i32, i32, i32
  }
  func.func @transform_1(%arg0: i32, %arg1: i32, %arg2: i32) -> (i32, i32, i32, i32) {
    %c1_i32 = arith.constant 1 : i32
    %c0_i32 = arith.constant 0 : i32
    %c0_i32_0 = arith.constant 0 : i32
    return %c1_i32, %arg0, %c0_i32, %arg1 : i32, i32, i32, i32
  }
  func.func @transform_2(%arg0: i32, %arg1: i32, %arg2: i32) -> (i32, i32, i32, i32) {
    %c2_i32 = arith.constant 2 : i32
    %c0_i32 = arith.constant 0 : i32
    %c0_i32_0 = arith.constant 0 : i32
    return %c2_i32, %arg0, %c0_i32, %arg1 : i32, i32, i32, i32
  }
  func.func @transform_3(%arg0: i32, %arg1: i32, %arg2: i32) -> (i32, i32, i32) {
    %c0_i32 = arith.constant 0 : i32
    %c0_i32_0 = arith.constant 0 : i32
    %c0_i32_1 = arith.constant 0 : i32
    return %arg0, %c0_i32, %c0_i32_0 : i32, i32, i32
  }
  func.func @transform_4(%arg0: i32, %arg1: i32, %arg2: i32) -> (i32, i32, i32) {
    %c0_i32 = arith.constant 0 : i32
    return %arg0, %arg2, %arg1 : i32, i32, i32
  }
}

module attributes {stable_mosaic.version = 11 : i64} {
  func.func @_matmul_bias_kernel(%arg0: i32, %arg1: i32, %arg2: i32, %arg3: memref<16x32xbf16, #tpu.memory_space<vmem>>, %arg4: memref<32x64xbf16, #tpu.memory_space<vmem>>, %arg5: memref<1x64xf32, #tpu.memory_space<vmem>>, %arg6: memref<16x64xbf16, #tpu.memory_space<vmem>>, %arg7: memref<16x64xf32, #tpu.memory_space<vmem>>) attributes {dimension_semantics = [#tpu.dimension_semantics<parallel>, #tpu.dimension_semantics<parallel>, #tpu.dimension_semantics<arbitrary>], iteration_bounds = array<i64: 1, 1, 1>, scalar_prefetch = 0 : i64, scratch_operands = 1 : i64, tpu.core_type = #tpu.core_type<tc>, window_params = [{transform_indices = @transform_0, window_bounds = array<i64: 16, 32>}, {transform_indices = @transform_1, window_bounds = array<i64: 32, 64>}, {transform_indices = @transform_2, window_bounds = array<i64: 1, 64>}, {transform_indices = @transform_3, window_bounds = array<i64: 16, 64>}]} {
    %c0_i32 = arith.constant 0 : i32
    %0 = arith.cmpi eq, %arg2, %c0_i32 : i32
    %1 = arith.extui %0 : i1 to i32
    %c0_i32_0 = arith.constant 0 : i32
    %2 = arith.cmpi ne, %1, %c0_i32_0 : i32
    scf.if %2 {
      %cst_10 = arith.constant 0.000000e+00 : f32
      %12 = vector.broadcast %cst_10 : f32 to vector<16x64xf32>
      %c0_11 = arith.constant 0 : index
      %c0_12 = arith.constant 0 : index
      %13 = vector.load %arg7[%c0_11, %c0_12] : memref<16x64xf32, #tpu.memory_space<vmem>>, vector<16x64xf32>
      tpu.vector_store %arg7[%c0_11, %c0_12], %12 {strides = array<i32>} : memref<16x64xf32, #tpu.memory_space<vmem>>, vector<16x64xf32>,
    } else {
    }
    %c0 = arith.constant 0 : index
    %c0_1 = arith.constant 0 : index
    %3 = vector.load %arg7[%c0, %c0_1] : memref<16x64xf32, #tpu.memory_space<vmem>>, vector<16x64xf32>
    %c0_2 = arith.constant 0 : index
    %c0_3 = arith.constant 0 : index
    %4 = vector.load %arg3[%c0_2, %c0_3] : memref<16x32xbf16, #tpu.memory_space<vmem>>, vector<16x32xbf16>
    %c0_4 = arith.constant 0 : index
    %c0_5 = arith.constant 0 : index
    %5 = vector.load %arg4[%c0_4, %c0_5] : memref<32x64xbf16, #tpu.memory_space<vmem>>, vector<32x64xbf16>
    %cst = arith.constant dense<0.000000e+00> : vector<16x64xf32>
    %6 = tpu.matmul %4, %5, %cst {dimension_numbers = #tpu.dot_dimension_numbers<[1], [0], [0], [1], [0, 0, 1, 1], [], []>} : vector<16x32xbf16>, vector<32x64xbf16>, vector<16x64xf32> -> vector<16x64xf32>
    %7 = arith.addf %3, %6 : vector<16x64xf32>
    %c0_6 = arith.constant 0 : index
    %c0_7 = arith.constant 0 : index
    %8 = vector.load %arg7[%c0_6, %c0_7] : memref<16x64xf32, #tpu.memory_space<vmem>>, vector<16x64xf32>
    tpu.vector_store %arg7[%c0_6, %c0_7], %7 {strides = array<i32>} : memref<16x64xf32, #tpu.memory_space<vmem>>, vector<16x64xf32>,
    %c0_i32_8 = arith.constant 0 : i32
    %9 = arith.cmpi eq, %arg2, %c0_i32_8 : i32
    %10 = arith.extui %9 : i1 to i32
    %c0_i32_9 = arith.constant 0 : i32
    %11 = arith.cmpi ne, %10, %c0_i32_9 : i32
    scf.if %11 {
      %c0_10 = arith.constant 0 : index
      %c0_11 = arith.constant 0 : index
      %12 = vector.load %arg7[%c0_10, %c0_11] : memref<16x64xf32, #tpu.memory_space<vmem>>, vector<16x64xf32>
      %c0_12 = arith.constant 0 : index
      %c0_13 = arith.constant 0 : index
      %13 = vector.load %arg5[%c0_12, %c0_13] : memref<1x64xf32, #tpu.memory_space<vmem>>, vector<1x64xf32>
      %14 = vector.broadcast %13 : vector<1x64xf32> to vector<16x64xf32>
      %15 = arith.addf %12, %14 : vector<16x64xf32>
      %cst_14 = arith.constant 5.000000e-01 : f32
      %16 = vector.broadcast %cst_14 : f32 to vector<16x64xf32>
      %17 = arith.mulf %16, %15 : vector<16x64xf32>
      %cst_15 = arith.constant 4.471500e-02 : f32
      %18 = vector.broadcast %cst_15 : f32 to vector<16x64xf32>
      %19 = arith.mulf %18, %15 : vector<16x64xf32>
      %20 = arith.mulf %19, %15 : vector<16x64xf32>
      %21 = arith.mulf %20, %15 : vector<16x64xf32>
      %22 = arith.addf %15, %21 : vector<16x64xf32>
      %cst_16 = arith.constant 0.797884583 : f32
      %23 = vector.broadcast %cst_16 : f32 to vector<16x64xf32>
      %24 = arith.mulf %23, %22 : vector<16x64xf32>
      %25 = math.tanh %24 : vector<16x64xf32>
      %cst_17 = arith.constant 1.000000e+00 : f32
      %26 = vector.broadcast %cst_17 : f32 to vector<16x64xf32>
      %27 = arith.addf %26, %25 : vector<16x64xf32>
      %28 = arith.mulf %17, %27 : vector<16x64xf32>
      %29 = arith.truncf %28 : vector<16x64xf32> to vector<16x64xbf16>
      %c0_18 = arith.constant 0 : index
      %c0_19 = arith.constant 0 : index
      %30 = vector.load %arg6[%c0_18, %c0_19] : memref<16x64xbf16, #tpu.memory_space<vmem>>, vector<16x64xbf16>
      tpu.vector_store %arg6[%c0_18, %c0_19], %29 {strides = array<i32>} : memref<16x64xbf16, #tpu.memory_space<vmem>>, vector<16x64xbf16>,
    } else {
    }
    return
  }
  func.func @transform_0(%arg0: i32, %arg1: i32, %arg2: i32) -> (i32, i32) {
    %c0_i32 = arith.constant 0 : i32
    return %arg0, %arg2 : i32, i32
  }
  func.func @transform_1(%arg0: i32, %arg1: i32, %arg2: i32) -> (i32, i32) {
    %c0_i32 = arith.constant 0 : i32
    return %arg2, %arg1 : i32, i32
  }
  func.func @transform_2(%arg0: i32, %arg1: i32, %arg2: i32) -> (i32, i32) {
    %c0_i32 = arith.constant 0 : i32
    %c0_i32_0 = arith.constant 0 : i32
    return %c0_i32, %arg1 : i32, i32
  }
  func.func @transform_3(%arg0: i32, %arg1: i32, %arg2: i32) -> (i32, i32) {
    %c0_i32 = arith.constant 0 : i32
    return %arg0, %arg1 : i32, i32
  }
}

module attributes {stable_mosaic.version = 11 : i64} {
  func.func @_matmul_res_ln_kernel(%arg0: i32, %arg1: i32, %arg2: memref<16x64xbf16, #tpu.memory_space<vmem>>, %arg3: memref<64x32xbf16, #tpu.memory_space<vmem>>, %arg4: memref<1x32xf32, #tpu.memory_space<vmem>>, %arg5: memref<16x32xbf16, #tpu.memory_space<vmem>>, %arg6: memref<1x32xf32, #tpu.memory_space<vmem>>, %arg7: memref<1x32xf32, #tpu.memory_space<vmem>>, %arg8: memref<16x32xbf16, #tpu.memory_space<vmem>>, %arg9: memref<16x32xf32, #tpu.memory_space<vmem>>) attributes {dimension_semantics = [#tpu.dimension_semantics<parallel>, #tpu.dimension_semantics<arbitrary>], iteration_bounds = array<i64: 1, 1>, scalar_prefetch = 0 : i64, scratch_operands = 1 : i64, tpu.core_type = #tpu.core_type<tc>, window_params = [{transform_indices = @transform_0, window_bounds = array<i64: 16, 64>}, {transform_indices = @transform_1, window_bounds = array<i64: 64, 32>}, {pipeline_mode = #tpu.pipeline_mode<synchronous>, transform_indices = @transform_2, window_bounds = array<i64: 1, 32>}, {transform_indices = @transform_3, window_bounds = array<i64: 16, 32>}, {pipeline_mode = #tpu.pipeline_mode<synchronous>, transform_indices = @transform_4, window_bounds = array<i64: 1, 32>}, {pipeline_mode = #tpu.pipeline_mode<synchronous>, transform_indices = @transform_5, window_bounds = array<i64: 1, 32>}, {transform_indices = @transform_6, window_bounds = array<i64: 16, 32>}]} {
    %c0_i32 = arith.constant 0 : i32
    %0 = arith.cmpi eq, %arg1, %c0_i32 : i32
    %1 = arith.extui %0 : i1 to i32
    %c0_i32_0 = arith.constant 0 : i32
    %2 = arith.cmpi ne, %1, %c0_i32_0 : i32
    scf.if %2 {
      %cst_10 = arith.constant 0.000000e+00 : f32
      %12 = vector.broadcast %cst_10 : f32 to vector<16x32xf32>
      %c0_11 = arith.constant 0 : index
      %c0_12 = arith.constant 0 : index
      %13 = vector.load %arg9[%c0_11, %c0_12] : memref<16x32xf32, #tpu.memory_space<vmem>>, vector<16x32xf32>
      tpu.vector_store %arg9[%c0_11, %c0_12], %12 {strides = array<i32>} : memref<16x32xf32, #tpu.memory_space<vmem>>, vector<16x32xf32>,
    } else {
    }
    %c0 = arith.constant 0 : index
    %c0_1 = arith.constant 0 : index
    %3 = vector.load %arg9[%c0, %c0_1] : memref<16x32xf32, #tpu.memory_space<vmem>>, vector<16x32xf32>
    %c0_2 = arith.constant 0 : index
    %c0_3 = arith.constant 0 : index
    %4 = vector.load %arg2[%c0_2, %c0_3] : memref<16x64xbf16, #tpu.memory_space<vmem>>, vector<16x64xbf16>
    %c0_4 = arith.constant 0 : index
    %c0_5 = arith.constant 0 : index
    %5 = vector.load %arg3[%c0_4, %c0_5] : memref<64x32xbf16, #tpu.memory_space<vmem>>, vector<64x32xbf16>
    %cst = arith.constant dense<0.000000e+00> : vector<16x32xf32>
    %6 = tpu.matmul %4, %5, %cst {dimension_numbers = #tpu.dot_dimension_numbers<[1], [0], [0], [1], [0, 0, 1, 1], [], []>} : vector<16x64xbf16>, vector<64x32xbf16>, vector<16x32xf32> -> vector<16x32xf32>
    %7 = arith.addf %3, %6 : vector<16x32xf32>
    %c0_6 = arith.constant 0 : index
    %c0_7 = arith.constant 0 : index
    %8 = vector.load %arg9[%c0_6, %c0_7] : memref<16x32xf32, #tpu.memory_space<vmem>>, vector<16x32xf32>
    tpu.vector_store %arg9[%c0_6, %c0_7], %7 {strides = array<i32>} : memref<16x32xf32, #tpu.memory_space<vmem>>, vector<16x32xf32>,
    %c0_i32_8 = arith.constant 0 : i32
    %9 = arith.cmpi eq, %arg1, %c0_i32_8 : i32
    %10 = arith.extui %9 : i1 to i32
    %c0_i32_9 = arith.constant 0 : i32
    %11 = arith.cmpi ne, %10, %c0_i32_9 : i32
    scf.if %11 {
      %c0_10 = arith.constant 0 : index
      %c0_11 = arith.constant 0 : index
      %12 = vector.load %arg9[%c0_10, %c0_11] : memref<16x32xf32, #tpu.memory_space<vmem>>, vector<16x32xf32>
      %c0_12 = arith.constant 0 : index
      %c0_13 = arith.constant 0 : index
      %13 = vector.load %arg4[%c0_12, %c0_13] : memref<1x32xf32, #tpu.memory_space<vmem>>, vector<1x32xf32>
      %14 = vector.broadcast %13 : vector<1x32xf32> to vector<16x32xf32>
      %15 = arith.addf %12, %14 : vector<16x32xf32>
      %c0_14 = arith.constant 0 : index
      %c0_15 = arith.constant 0 : index
      %16 = vector.load %arg5[%c0_14, %c0_15] : memref<16x32xbf16, #tpu.memory_space<vmem>>, vector<16x32xbf16>
      %17 = arith.extf %16 : vector<16x32xbf16> to vector<16x32xf32>
      %18 = arith.addf %15, %17 : vector<16x32xf32>
      %cst_16 = arith.constant dense<0.000000e+00> : vector<16xf32>
      %19 = vector.multi_reduction <add>, %18, %cst_16 [1] : vector<16x32xf32> to vector<16xf32>
      %20 = vector.shape_cast %19 : vector<16xf32> to vector<16x1xf32>
      %cst_17 = arith.constant 3.200000e+01 : f32
      %21 = vector.broadcast %cst_17 : f32 to vector<16x1xf32>
      %22 = arith.divf %20, %21 : vector<16x1xf32>
      %23 = vector.broadcast %22 : vector<16x1xf32> to vector<16x32xf32>
      %24 = arith.subf %18, %23 : vector<16x32xf32>
      %25 = arith.mulf %24, %24 : vector<16x32xf32>
      %cst_18 = arith.constant dense<0.000000e+00> : vector<16xf32>
      %26 = vector.multi_reduction <add>, %25, %cst_18 [1] : vector<16x32xf32> to vector<16xf32>
      %27 = vector.shape_cast %26 : vector<16xf32> to vector<16x1xf32>
      %cst_19 = arith.constant 3.200000e+01 : f32
      %28 = vector.broadcast %cst_19 : f32 to vector<16x1xf32>
      %29 = arith.divf %27, %28 : vector<16x1xf32>
      %30 = vector.broadcast %22 : vector<16x1xf32> to vector<16x32xf32>
      %31 = arith.subf %18, %30 : vector<16x32xf32>
      %cst_20 = arith.constant 9.99999996E-13 : f32
      %32 = vector.broadcast %cst_20 : f32 to vector<16x1xf32>
      %33 = arith.addf %29, %32 : vector<16x1xf32>
      %34 = math.rsqrt %33 : vector<16x1xf32>
      %35 = vector.broadcast %34 : vector<16x1xf32> to vector<16x32xf32>
      %36 = arith.mulf %31, %35 : vector<16x32xf32>
      %c0_21 = arith.constant 0 : index
      %c0_22 = arith.constant 0 : index
      %37 = vector.load %arg6[%c0_21, %c0_22] : memref<1x32xf32, #tpu.memory_space<vmem>>, vector<1x32xf32>
      %38 = vector.broadcast %37 : vector<1x32xf32> to vector<16x32xf32>
      %39 = arith.mulf %36, %38 : vector<16x32xf32>
      %c0_23 = arith.constant 0 : index
      %c0_24 = arith.constant 0 : index
      %40 = vector.load %arg7[%c0_23, %c0_24] : memref<1x32xf32, #tpu.memory_space<vmem>>, vector<1x32xf32>
      %41 = vector.broadcast %40 : vector<1x32xf32> to vector<16x32xf32>
      %42 = arith.addf %39, %41 : vector<16x32xf32>
      %43 = arith.truncf %42 : vector<16x32xf32> to vector<16x32xbf16>
      %c0_25 = arith.constant 0 : index
      %c0_26 = arith.constant 0 : index
      %44 = vector.load %arg8[%c0_25, %c0_26] : memref<16x32xbf16, #tpu.memory_space<vmem>>, vector<16x32xbf16>
      tpu.vector_store %arg8[%c0_25, %c0_26], %43 {strides = array<i32>} : memref<16x32xbf16, #tpu.memory_space<vmem>>, vector<16x32xbf16>,
    } else {
    }
    return
  }
  func.func @transform_0(%arg0: i32, %arg1: i32) -> (i32, i32) {
    %c0_i32 = arith.constant 0 : i32
    return %arg0, %arg1 : i32, i32
  }
  func.func @transform_1(%arg0: i32, %arg1: i32) -> (i32, i32) {
    %c0_i32 = arith.constant 0 : i32
    %c0_i32_0 = arith.constant 0 : i32
    return %arg1, %c0_i32 : i32, i32
  }
  func.func @transform_2(%arg0: i32, %arg1: i32) -> (i32, i32) {
    %c0_i32 = arith.constant 0 : i32
    %c0_i32_0 = arith.constant 0 : i32
    %c0_i32_1 = arith.constant 0 : i32
    return %c0_i32, %c0_i32_0 : i32, i32
  }
  func.func @transform_3(%arg0: i32, %arg1: i32) -> (i32, i32) {
    %c0_i32 = arith.constant 0 : i32
    %c0_i32_0 = arith.constant 0 : i32
    return %arg0, %c0_i32 : i32, i32
  }
  func.func @transform_4(%arg0: i32, %arg1: i32) -> (i32, i32) {
    %c0_i32 = arith.constant 0 : i32
    %c0_i32_0 = arith.constant 0 : i32
    %c0_i32_1 = arith.constant 0 : i32
    return %c0_i32, %c0_i32_0 : i32, i32
  }
  func.func @transform_5(%arg0: i32, %arg1: i32) -> (i32, i32) {
    %c0_i32 = arith.constant 0 : i32
    %c0_i32_0 = arith.constant 0 : i32
    %c0_i32_1 = arith.constant 0 : i32
    return %c0_i32, %c0_i32_0 : i32, i32
  }
  func.func @transform_6(%arg0: i32, %arg1: i32) -> (i32, i32) {
    %c0_i32 = arith.constant 0 : i32
    %c0_i32_0 = arith.constant 0 : i32
    return %arg0, %c0_i32 : i32, i32
  }
}

module attributes {stable_mosaic.version = 11 : i64} {
  func.func @_avg3_kernel(%arg0: i32, %arg1: memref<16x32xbf16, #tpu.memory_space<vmem>>, %arg2: memref<16x32xbf16, #tpu.memory_space<vmem>>, %arg3: memref<16x32xbf16, #tpu.memory_space<vmem>>, %arg4: memref<16x32xf32, #tpu.memory_space<vmem>>) attributes {dimension_semantics = [#tpu.dimension_semantics<parallel>], iteration_bounds = array<i64: 1>, scalar_prefetch = 0 : i64, scratch_operands = 0 : i64, tpu.core_type = #tpu.core_type<tc>, window_params = [{transform_indices = @transform_0, window_bounds = array<i64: 16, 32>}, {transform_indices = @transform_1, window_bounds = array<i64: 16, 32>}, {transform_indices = @transform_2, window_bounds = array<i64: 16, 32>}, {transform_indices = @transform_3, window_bounds = array<i64: 16, 32>}]} {
    %c0 = arith.constant 0 : index
    %c0_0 = arith.constant 0 : index
    %0 = vector.load %arg1[%c0, %c0_0] : memref<16x32xbf16, #tpu.memory_space<vmem>>, vector<16x32xbf16>
    %1 = arith.extf %0 : vector<16x32xbf16> to vector<16x32xf32>
    %c0_1 = arith.constant 0 : index
    %c0_2 = arith.constant 0 : index
    %2 = vector.load %arg2[%c0_1, %c0_2] : memref<16x32xbf16, #tpu.memory_space<vmem>>, vector<16x32xbf16>
    %3 = arith.extf %2 : vector<16x32xbf16> to vector<16x32xf32>
    %4 = arith.addf %1, %3 : vector<16x32xf32>
    %c0_3 = arith.constant 0 : index
    %c0_4 = arith.constant 0 : index
    %5 = vector.load %arg3[%c0_3, %c0_4] : memref<16x32xbf16, #tpu.memory_space<vmem>>, vector<16x32xbf16>
    %6 = arith.extf %5 : vector<16x32xbf16> to vector<16x32xf32>
    %7 = arith.addf %4, %6 : vector<16x32xf32>
    %cst = arith.constant 0.333333343 : f32
    %8 = vector.broadcast %cst : f32 to vector<16x32xf32>
    %9 = arith.mulf %7, %8 : vector<16x32xf32>
    %c0_5 = arith.constant 0 : index
    %c0_6 = arith.constant 0 : index
    %10 = vector.load %arg4[%c0_5, %c0_6] : memref<16x32xf32, #tpu.memory_space<vmem>>, vector<16x32xf32>
    tpu.vector_store %arg4[%c0_5, %c0_6], %9 {strides = array<i32>} : memref<16x32xf32, #tpu.memory_space<vmem>>, vector<16x32xf32>,
    return
  }
  func.func @transform_0(%arg0: i32) -> (i32, i32) {
    %c0_i32 = arith.constant 0 : i32
    %c0_i32_0 = arith.constant 0 : i32
    return %arg0, %c0_i32 : i32, i32
  }
  func.func @transform_1(%arg0: i32) -> (i32, i32) {
    %c0_i32 = arith.constant 0 : i32
    %c0_i32_0 = arith.constant 0 : i32
    return %arg0, %c0_i32 : i32, i32
  }
  func.func @transform_2(%arg0: i32) -> (i32, i32) {
    %c0_i32 = arith.constant 0 : i32
    %c0_i32_0 = arith.constant 0 : i32
    return %arg0, %c0_i32 : i32, i32
  }
  func.func @transform_3(%arg0: i32) -> (i32, i32) {
    %c0_i32 = arith.constant 0 : i32
    %c0_i32_0 = arith.constant 0 : i32
    return %arg0, %c0_i32 : i32, i32
  }
}

</mosaic_0001>

<llo_original>
// kernel: bert_forward.25
$region0: #{bert_forward.25}
  #allocation0 [shape = 'u32[]', space=smem, size = 0x4, offset = 0x4, fixed_abs, tag = 'smem constant byte address 0x4 - core index']
  #allocation1 [shape = 'u32[144,128]{1,0:T(1,128)}', space=vmem, size = 0x12000, scoped, tag = 'internal scratch']
  #allocation2 [shape = 'f32[16,32]{1,0:T(8,128)}', space=vmem, size = 0x2000, scoped, tag = 'scratch operand']
  %s0 = inlined_call_operand.hbm [shape: bf16[16,32], index: 0, kind: input, shape index: {}]
  %s1 = inlined_call_operand.hbm [shape: bf16[32,32], index: 1, kind: input, shape index: {}]
  %s2 = inlined_call_operand.hbm [shape: f32[1,32], index: 2, kind: input, shape index: {}]
  %s3 = inlined_call_operand.hbm [shape: bf16[16,32], index: 3, kind: input, shape index: {}]
  %s4 = inlined_call_operand.hbm [shape: f32[1,32], index: 4, kind: input, shape index: {}]
  %s5 = inlined_call_operand.hbm [shape: f32[1,32], index: 5, kind: input, shape index: {}]
  %s6 = inlined_call_operand.hbm [shape: bf16[16,32], index: 6, kind: output, shape index: {}]
  %s7 = sld [smem:[#allocation0]]
  $region66: #{bert_forward.25} parent=0
    _
  %s9 = ssub.s32 1, %s7
  %s10 = scalar_select 0, %s9, %s7
  $region1: #{bert_forward.25} parent=0
    #allocation3 [shape = 'u8[4096]{0}', space=vmem, size = 0x1000, scoped, tag = 'input window, operand 0, single buffered']
    #allocation4 [shape = 's32[1]{0}', space=sflag, size = 0x4, scoped, tag = 'scoped memory for bert_forward.25']
    #allocation5 [shape = 's32[1]{0}', space=sflag, size = 0x4, scoped, tag = 'scoped memory for bert_forward.25']
    #allocation6 [shape = 'u8[8192]{0}', space=vmem, size = 0x2000, scoped, tag = 'input window, operand 1, single buffered']
    #allocation7 [shape = 's32[1]{0}', space=sflag, size = 0x4, scoped, tag = 'scoped memory for bert_forward.25']
    #allocation8 [shape = 'u8[512]{0}', space=vmem, size = 0x400, scoped, tag = 'input window, operand 2, single buffered']
    #allocation9 [shape = 'u8[4096]{0}', space=vmem, size = 0x1000, scoped, tag = 'input window, operand 3, single buffered']
    #allocation10 [shape = 's32[1]{0}', space=sflag, size = 0x4, scoped, tag = 'scoped memory for bert_forward.25']
    #allocation11 [shape = 'u8[512]{0}', space=vmem, size = 0x400, scoped, tag = 'input window, operand 4, single buffered']
    #allocation12 [shape = 'u8[512]{0}', space=vmem, size = 0x400, scoped, tag = 'input window, operand 5, single buffered']
    #allocation13 [shape = 's32[1]{0}', space=sflag, size = 0x4, scoped, tag = 'scoped memory for bert_forward.25']
    #allocation14 [shape = 'u8[4096]{0}', space=vmem, size = 0x1000, scoped, tag = 'output window, operand 0, single buffered']
    %11 = vsyncpa [#allocation4], 0
    %12 = vsyncpa [#allocation7], 0
    %13 = vsyncpa [#allocation10], 0
    %14 = vsyncpa [#allocation13], 0
    %15 = vsyncpa [#allocation5], 0
    // Predicated region
    $region2: #{bert_forward.25} parent=1 // pred_check
      _
    $region3: #{bert_forward.25} parent=1 // pred_check_branch
      %17 = sbr.rel (0) target = $region5
    $region4: #{bert_forward.25} parent=1 // pred_region
      %s19 = ssub.s32 128, 128
      %20 = vsyncadd [#allocation4], %s19
      %s21 = sshll.u32 [#allocation3], 4
      %s22 = int_to_ptr.vmem [resolvable:$true] %s21
      %27 = dma.hbm_to_vmem [thread:$0]  %s0, 128, %s22, [#allocation4], 64, 64, 4
    $region5: #{bert_forward.25} parent=1 // pred_fallthru
      _
    // Predicated region
    $region6: #{bert_forward.25} parent=1 // pred_check
      _
    $region7: #{bert_forward.25} parent=1 // pred_check_branch
      %29 = sbr.rel (0) target = $region9
    $region8: #{bert_forward.25} parent=1 // pred_region
      %s31 = ssub.s32 256, 256
      %32 = vsyncadd [#allocation7], %s31
      %s33 = sshll.u32 [#allocation6], 4
      %s34 = int_to_ptr.vmem [resolvable:$true] %s33
      %39 = dma.hbm_to_vmem [thread:$0]  %s1, 256, %s34, [#allocation7], 64, 64, 4
    $region9: #{bert_forward.25} parent=1 // pred_fallthru
      _
    // Predicated region
    $region10: #{bert_forward.25} parent=1 // pred_check
      _
    $region11: #{bert_forward.25} parent=1 // pred_check_branch
      %41 = sbr.rel (0) target = $region13
    $region12: #{bert_forward.25} parent=1 // pred_region
      %s43 = ssub.s32 16, 16
      %44 = vsyncadd [#allocation7], %s43
      %s46 = sshll.u32 [#allocation8], 4
      %s47 = int_to_ptr.vmem [resolvable:$true] %s46
      %49 = dma.hbm_to_vmem [thread:$0]  %s2, 16, %s47, [#allocation7]
    $region13: #{bert_forward.25} parent=1 // pred_fallthru
      _
    // Predicated region
    $region14: #{bert_forward.25} parent=1 // pred_check
      _
    $region15: #{bert_forward.25} parent=1 // pred_check_branch
      %51 = sbr.rel (0) target = $region17
    $region16: #{bert_forward.25} parent=1 // pred_region
      %s53 = ssub.s32 128, 128
      %54 = vsyncadd [#allocation10], %s53
      %s55 = sshll.u32 [#allocation9], 4
      %s56 = int_to_ptr.vmem [resolvable:$true] %s55
      %61 = dma.hbm_to_vmem [thread:$0]  %s3, 128, %s56, [#allocation10], 64, 64, 4
    $region17: #{bert_forward.25} parent=1 // pred_fallthru
      _
    // Predicated region
    $region18: #{bert_forward.25} parent=1 // pred_check
      _
    $region19: #{bert_forward.25} parent=1 // pred_check_branch
      %63 = sbr.rel (0) target = $region21
    $region20: #{bert_forward.25} parent=1 // pred_region
      %s65 = ssub.s32 16, 16
      %66 = vsyncadd [#allocation10], %s65
      %s68 = sshll.u32 [#allocation11], 4
      %s69 = int_to_ptr.vmem [resolvable:$true] %s68
      %71 = dma.hbm_to_vmem [thread:$0]  %s4, 16, %s69, [#allocation10]
    $region21: #{bert_forward.25} parent=1 // pred_fallthru
      _
    // Predicated region
    $region22: #{bert_forward.25} parent=1 // pred_check
      _
    $region23: #{bert_forward.25} parent=1 // pred_check_branch
      %73 = sbr.rel (0) target = $region25
    $region24: #{bert_forward.25} parent=1 // pred_region
      %s75 = ssub.s32 16, 16
      %76 = vsyncadd [#allocation13], %s75
      %s78 = sshll.u32 [#allocation12], 4
      %s79 = int_to_ptr.vmem [resolvable:$true] %s78
      %81 = dma.hbm_to_vmem [thread:$0]  %s5, 16, %s79, [#allocation13]
    $region25: #{bert_forward.25} parent=1 // pred_fallthru
      _
    // Predicated region
    $region26: #{bert_forward.25} parent=1 // pred_check
      _
    $region27: #{bert_forward.25} parent=1 // pred_check_branch
      %83 = sbr.rel (0) target = $region29
    $region28: #{bert_forward.25} parent=1 // pred_region
      %84 = dma.done [#allocation4], 128
    $region29: #{bert_forward.25} parent=1 // pred_fallthru
      _
    // Predicated region
    $region30: #{bert_forward.25} parent=1 // pred_check
      _
    $region31: #{bert_forward.25} parent=1 // pred_check_branch
      %86 = sbr.rel (0) target = $region33
    $region32: #{bert_forward.25} parent=1 // pred_region
      %87 = dma.done [#allocation7], 256
    $region33: #{bert_forward.25} parent=1 // pred_fallthru
      _
    // Predicated region
    $region34: #{bert_forward.25} parent=1 // pred_check
      _
    $region35: #{bert_forward.25} parent=1 // pred_check_branch
      %89 = sbr.rel (0) target = $region37
    $region36: #{bert_forward.25} parent=1 // pred_region
      %90 = dma.done [#allocation7], 16
    $region37: #{bert_forward.25} parent=1 // pred_fallthru
      _
    // Predicated region
    $region38: #{bert_forward.25} parent=1 // pred_check
      _
    $region39: #{bert_forward.25} parent=1 // pred_check_branch
      %92 = sbr.rel (0) target = $region41
    $region40: #{bert_forward.25} parent=1 // pred_region
      %93 = dma.done [#allocation10], 128
    $region41: #{bert_forward.25} parent=1 // pred_fallthru
      _
    // Predicated region
    $region42: #{bert_forward.25} parent=1 // pred_check
      _
    $region43: #{bert_forward.25} parent=1 // pred_check_branch
      %95 = sbr.rel (0) target = $region45
    $region44: #{bert_forward.25} parent=1 // pred_region
      %96 = dma.done [#allocation10], 16
    $region45: #{bert_forward.25} parent=1 // pred_fallthru
      _
    // Predicated region
    $region46: #{bert_forward.25} parent=1 // pred_check
      _
    $region47: #{bert_forward.25} parent=1 // pred_check_branch
      %98 = sbr.rel (0) target = $region49
    $region48: #{bert_forward.25} parent=1 // pred_region
      %99 = dma.done [#allocation13], 16
    $region49: #{bert_forward.25} parent=1 // pred_fallthru
      _
    %p101 = scmp.eq.s32.totalorder 0, 0
    // Predicated region
    $region50: #{bert_forward.25} parent=1 // pred_check
      %p102 = pneg %p101
    $region51: #{bert_forward.25} parent=1 // pred_check_branch
      %104 = sbr.rel (%p102) target = $region53
    $region52: #{bert_forward.25} parent=1 // pred_region
      %vm105 = vcmask 261120
      %106 = vst.msk [vmem:[#allocation2] sm:$0xff] %vm105, 0.0
      %107 = vst.msk [vmem:[#allocation2 + $0x8] sm:$0xff] %vm105, 0.0
    $region53: #{bert_forward.25} parent=1 // pred_fallthru
      _
    %v108 = vld [vmem:[#allocation2] sm:$0xff]
    %v109 = vld [vmem:[#allocation2 + $0x8] sm:$0xff]
    %v110 = vld [vmem:[#allocation3] sm:$0xf]
    %v111 = vld [vmem:[#allocation3 + $0x4] sm:$0xf]
    %v112 = vld [vmem:[#allocation6] sm:$0xf]
    %v113 = vld [vmem:[#allocation6 + $0x4] sm:$0xf]
    %v114 = vld [vmem:[#allocation6 + $0x8] sm:$0xf]
    %v115 = vld [vmem:[#allocation6 + $0xc] sm:$0xf]
    %v118 = vunpack.c.l.b16 %v110
    %v119 = vunpack.c.l.b16 %v111
    %v120 = vpack.c.b16 %v119, %v118
    %v125 = vunpack.c.l.b16 %v112
    %v126 = vunpack.c.l.b16 %v113
    %v127 = vunpack.c.l.b16 %v114
    %v128 = vunpack.c.l.b16 %v115
    %v129 = vpack.c.b16 %v126, %v125
    %v130 = vpack.c.b16 %v128, %v127
    %vm133 = vcmask 261120
    %v135 = vsel %vm133, %v120, 0
    %137 = vmatprep.subr.bf16.mxu0 0
    %138 = vmatpush1.bf16.msra.mxu0 %v129
    %139 = vmatprep.subr.bf16.mxu0 0
    %140 = vmatpush1.bf16.msra.mxu0 %v130
    %141 = vmatprep.subr.bf16.mxu0 0
    %142 = vmatpush1.bf16.msra.mxu0 0
    %143 = vmatprep.subr.bf16.mxu0 0
    %144 = vmatpush1.bf16.msra.mxu0 0
    %145 = vmatprep.subr.bf16.mxu0 0
    %146 = vmatpush1.bf16.msra.mxu0 0
    %147 = vmatprep.subr.bf16.mxu0 0
    %148 = vmatpush1.bf16.msra.mxu0 0
    %149 = vmatprep.subr.bf16.mxu0 0
    %150 = vmatpush1.bf16.msra.mxu0 0
    %151 = vmatprep.subr.bf16.mxu0 0
    %152 = vmatpush1.bf16.msra.mxu0 0
    %153 = vmatprep.subr.bf16.mxu0 0
    %154 = vmatpush1.bf16.msra.mxu0 0
    %155 = vmatprep.subr.bf16.mxu0 0
    %156 = vmatpush1.bf16.msra.mxu0 0
    %157 = vmatprep.subr.bf16.mxu0 0
    %158 = vmatpush1.bf16.msra.mxu0 0
    %159 = vmatprep.subr.bf16.mxu0 0
    %160 = vmatpush1.bf16.msra.mxu0 0
    %161 = vmatprep.subr.bf16.mxu0 0
    %162 = vmatpush1.bf16.msra.mxu0 0
    %163 = vmatprep.subr.bf16.mxu0 0
    %164 = vmatpush1.bf16.msra.mxu0 0
    %165 = vmatprep.subr.bf16.mxu0 0
    %166 = vmatpush1.bf16.msra.mxu0 0
    %167 = vmatprep.subr.bf16.mxu0 0
    %168 = vmatpush1.bf16.msra.mxu0 0
    %169 = vmatprep.mubr.bf16.mxu0 0
    %170 = vmatmul.mubr.bf16.gmra.mrb[0].mxu0 %v135
    %v171 = vpop.f32.mrb[0].mxu0
    %v172 = vadd.f32 0.0, %v171
    %v173 = vpop.f32.mrb[0].mxu0
    %v174 = vpop.f32.mrb[0].mxu0
    %v175 = vadd.f32 0.0, %v174
    %v176 = vpop.f32.mrb[0].mxu0
    %177 = vdwg.mxu0
    %v178 = vadd.f32 %v108, %v172
    %v179 = vadd.f32 %v109, %v175
    %180 = vst.msk [vmem:[#allocation2] sm:$0xff] %vm133, %v178
    %181 = vst.msk [vmem:[#allocation2 + $0x8] sm:$0xff] %vm133, %v179
    // Predicated region
    $region54: #{bert_forward.25} parent=1 // pred_check
      %p182 = pneg %p101
    $region55: #{bert_forward.25} parent=1 // pred_check_branch
      %184 = sbr.rel (%p182) target = $region57
    $region56: #{bert_forward.25} parent=1 // pred_region
      %v185 = vld [vmem:[#allocation2] sm:$0xff]
      %v186 = vld [vmem:[#allocation2 + $0x8] sm:$0xff]
      %v187 = vld [vmem:[#allocation8] sm:$0x1]
      %v189 = vlaneseq
      %v190 = vshrl.u32 %v189, 7
      %v191 = vsub.s32 0, %v190
      %v192 = vrot.slane %v187, %v191
      %v194 = vadd.f32 %v185, %v192
      %v195 = vadd.f32 %v186, %v192
      %v196 = vld [vmem:[#allocation9] sm:$0xf]
      %v197 = vld [vmem:[#allocation9 + $0x4] sm:$0xf]
      %v198 = vunpack.c.l.bf16 %v196
      %v199 = vunpack.c.l.bf16 %v197
      %v200 = vadd.f32 %v194, %v198
      %v201 = vadd.f32 %v195, %v199
      %v202 = vsel %vm133, %v200, 0.0
      %203 = vadd.xlane.f32.xlu0 %v202
      %v204 = vpop.xlane.xlu0 %203
      %v205 = vsel %vm133, %v201, 0.0
      %206 = vadd.xlane.f32.xlu0 %v205
      %v207 = vpop.xlane.xlu0 %206
      %v208 = vrcp.pop 32.0
      %v209 = vmul.f32 %v204, %v208
      %v210 = vmul.f32 %v207, %v208
      %v211 = vsub.f32 %v200, %v209
      %v212 = vsub.f32 %v201, %v210
      %v213 = vmul.f32 %v211, %v211
      %v214 = vmul.f32 %v212, %v212
      %v215 = vsel %vm133, %v213, 0.0
      %216 = vadd.xlane.f32.xlu0 %v215
      %v217 = vpop.xlane.xlu0 %216
      %v218 = vsel %vm133, %v214, 0.0
      %219 = vadd.xlane.f32.xlu0 %v218
      %v220 = vpop.xlane.xlu0 %219
      %v221 = vmul.f32 %v217, %v208
      %v222 = vmul.f32 %v220, %v208
      %v223 = vadd.f32 %v221, 1e-12
      %v224 = vadd.f32 %v222, 1e-12
      %v225 = vrsqrt.pop %v223
      %v226 = vrsqrt.pop %v224
      %v227 = vmul.f32 %v211, %v225
      %v228 = vmul.f32 %v212, %v226
      %v229 = vld [vmem:[#allocation11] sm:$0x1]
      %v231 = vlaneseq
      %v232 = vshrl.u32 %v231, 7
      %v233 = vsub.s32 0, %v232
      %v234 = vrot.slane %v229, %v233
      %v236 = vmul.f32 %v227, %v234
      %v237 = vmul.f32 %v228, %v234
      %v238 = vld [vmem:[#allocation12] sm:$0x1]
      %v240 = vlaneseq
      %v241 = vshrl.u32 %v240, 7
      %v242 = vsub.s32 0, %v241
      %v243 = vrot.slane %v238, %v242
      %v245 = vadd.f32 %v236, %v243
      %v246 = vadd.f32 %v237, %v243
      %v247 = vpack.c.bf16 %v246, %v245
      %v249 = vunpack.c.l.b16 %v247
      %v250 = vunpack.c.h.b16 %v247
      %v251 = vpack.c.b16 %v249, %v249
      %v252 = vpack.c.b16 %v250, %v250
      %vm255 = vcmask 257024
      %256 = vst.msk [vmem:[#allocation14] sm:$0xf] %vm255, %v251
      %257 = vst.msk [vmem:[#allocation14 + $0x4] sm:$0xf] %vm255, %v252
    $region57: #{bert_forward.25} parent=1 // pred_fallthru
      _
    // Predicated region
    $region58: #{bert_forward.25} parent=1 // pred_check
      _
    $region59: #{bert_forward.25} parent=1 // pred_check_branch
      %259 = sbr.rel (0) target = $region61
    $region60: #{bert_forward.25} parent=1 // pred_region
      %s261 = ssub.s32 128, 128
      %262 = vsyncadd [#allocation5], %s261
      %s263 = sshll.u32 [#allocation14], 4
      %s264 = int_to_ptr.vmem [resolvable:$true] %s263
      %269 = dma.vmem_to_hbm [thread:$0]  %s264, 128, %s6, [#allocation5], 64, 64, 4
    $region61: #{bert_forward.25} parent=1 // pred_fallthru
      _
    // Predicated region
    $region62: #{bert_forward.25} parent=1 // pred_check
      _
    $region63: #{bert_forward.25} parent=1 // pred_check_branch
      %271 = sbr.rel (0) target = $region65
    $region64: #{bert_forward.25} parent=1 // pred_region
      %272 = dma.done [#allocation5], 128
    $region65: #{bert_forward.25} parent=1 // pred_fallthru
      _
    %273 = vsyncpa [#allocation4], 1
    %274 = vsyncpa [#allocation7], 1
    %275 = vsyncpa [#allocation10], 1
    %276 = vsyncpa [#allocation13], 1
    %277 = vsyncpa [#allocation5], 1

// kernel: bert_forward.22
$region0: #{bert_forward.22}
  #allocation0 [shape = 'u32[]', space=smem, size = 0x4, offset = 0x4, fixed_abs, tag = 'smem constant byte address 0x4 - core index']
  #allocation1 [shape = 'u32[144,128]{1,0:T(1,128)}', space=vmem, size = 0x12000, scoped, tag = 'internal scratch']
  %s0 = inlined_call_operand.vmem [shape: f32[16,32], index: 0, kind: input, shape index: {}]
  %s1 = inlined_call_operand.vmem [shape: f32[8,32], index: 1, kind: input, shape index: {}]
  %s2 = inlined_call_operand.vmem [shape: f32[1,32], index: 2, kind: input, shape index: {}]
  %s3 = inlined_call_operand.vmem [shape: f32[1,32], index: 3, kind: input, shape index: {}]
  %s4 = inlined_call_operand.vmem [shape: f32[1,32], index: 4, kind: input, shape index: {}]
  %s5 = inlined_call_operand.hbm [shape: bf16[16,32], index: 5, kind: output, shape index: {}]
  %s6 = sld [smem:[#allocation0]]
  $region53: #{bert_forward.22} parent=0
    _
  %s8 = ssub.s32 1, %s6
  %s9 = scalar_select 0, %s8, %s6
  $region1: #{bert_forward.22} parent=0
    #allocation2 [shape = 'u8[4096]{0}', space=vmem, size = 0x1000, scoped, tag = 'output window, operand 0']
    #allocation3 [shape = 's32[2]{0}', space=sflag, size = 0x8, scoped, tag = 'scoped memory for bert_forward.22']
    %10 = vsyncpa [#allocation3], 0
    %s11 = scalar_lea.sflag [#allocation3], 1
    %12 = vsyncpa %s11, 0
    loop: start=0, step=1, limit=4
    $region2: #{bert_forward.22} parent=1 // loop_pre_header
      _
    $region3: #{bert_forward.22} parent=1 // loop_header
      %s14 = sphi 0, %s18
      %p15 = scmp.ge.s32.totalorder %s14, 4
      %s24 = sphi 0, %s26
      %s27 = sphi 0, %s24
      %s28 = sphi 0, %s27
      %s44 = sphi 0, %s28
      %s48 = sphi 0, %s48
      %s50 = sphi 0, %s48
      %s51 = sphi 0, %s50
      %s65 = sphi 0, %s51
      %s69 = sphi 0, %s69
      %s71 = sphi 0, %s69
      %s72 = sphi 0, %s71
      %s86 = sphi 0, %s72
      %s90 = sphi 0, %s90
      %s92 = sphi 0, %s90
      %s93 = sphi 0, %s92
      %s107 = sphi 0, %s93
      %s111 = sphi 0, %s111
      %s113 = sphi 0, %s111
      %s114 = sphi 0, %s113
      %s128 = sphi 0, %s114
      %s134 = sphi 0, %s136
      %s137 = sphi 0, %s134
      %s138 = sphi 0, %s137
      %s154 = sphi 0, %s138
    $region4: #{bert_forward.22} parent=1 // loop_header_branch
      %17 = sbr.rel (%p15) target = $region8
    $region5: #{bert_forward.22} parent=1 // loop_body
      %s19 = ssub.s32 %s14, 1
      %s20 = ssub.s32 %s14, 2
      %s21 = sadd.s32 %s14, 1
      %s22 = ssub.s32 %s14, %s21
      %p23 = scmp.eq.s32.totalorder %s22, 0
      %s25 = sadd.s32 %s24, 1
      %s26 = scalar_select %p23, %s24, %s25
      %p29 = pneg %p23
      %p30 = scmp.eq.s32.totalorder %s14, 1
      %p31 = por %p29, %p30
      %p32 = scmp.ne.s32.totalorder %s24, %s27
      %p33 = scmp.eq.s32.totalorder %s14, 0
      %p34 = por %p32, %p33
      %p35 = scmp.ne.s32.totalorder %s24, %s27
      %p36 = scmp.eq.s32.totalorder %s19, 1
      %p37 = por %p35, %p36
      %p38 = scmp.ne.s32.totalorder %s27, %s28
      %p39 = scmp.eq.s32.totalorder %s19, 0
      %p40 = por %p38, %p39
      %p41 = scmp.ne.s32.totalorder %s27, %s28
      %p42 = scmp.eq.s32.totalorder %s20, 1
      %p43 = por %p41, %p42
      %p45 = scmp.ne.s32.totalorder %s28, %s44
      %p46 = scmp.eq.s32.totalorder %s20, 0
      %p47 = por %p45, %p46
      %s49 = sadd.s32 %s48, 1
      %p52 = scmp.eq.s32.totalorder %s14, 1
      %p53 = scmp.ne.s32.totalorder %s48, %s50
      %p54 = scmp.eq.s32.totalorder %s14, 0
      %p55 = por %p53, %p54
      %p56 = scmp.ne.s32.totalorder %s48, %s50
      %p57 = scmp.eq.s32.totalorder %s19, 1
      %p58 = por %p56, %p57
      %p59 = scmp.ne.s32.totalorder %s50, %s51
      %p60 = scmp.eq.s32.totalorder %s19, 0
      %p61 = por %p59, %p60
      %p62 = scmp.ne.s32.totalorder %s50, %s51
      %p63 = scmp.eq.s32.totalorder %s20, 1
      %p64 = por %p62, %p63
      %p66 = scmp.ne.s32.totalorder %s51, %s65
      %p67 = scmp.eq.s32.totalorder %s20, 0
      %p68 = por %p66, %p67
      %s70 = sadd.s32 %s69, 1
      %p73 = scmp.eq.s32.totalorder %s14, 1
      %p74 = scmp.ne.s32.totalorder %s69, %s71
      %p75 = scmp.eq.s32.totalorder %s14, 0
      %p76 = por %p74, %p75
      %p77 = scmp.ne.s32.totalorder %s69, %s71
      %p78 = scmp.eq.s32.totalorder %s19, 1
      %p79 = por %p77, %p78
      %p80 = scmp.ne.s32.totalorder %s71, %s72
      %p81 = scmp.eq.s32.totalorder %s19, 0
      %p82 = por %p80, %p81
      %p83 = scmp.ne.s32.totalorder %s71, %s72
      %p84 = scmp.eq.s32.totalorder %s20, 1
      %p85 = por %p83, %p84
      %p87 = scmp.ne.s32.totalorder %s72, %s86
      %p88 = scmp.eq.s32.totalorder %s20, 0
      %p89 = por %p87, %p88
      %s91 = sadd.s32 %s90, 1
      %p94 = scmp.eq.s32.totalorder %s14, 1
      %p95 = scmp.ne.s32.totalorder %s90, %s92
      %p96 = scmp.eq.s32.totalorder %s14, 0
      %p97 = por %p95, %p96
      %p98 = scmp.ne.s32.totalorder %s90, %s92
      %p99 = scmp.eq.s32.totalorder %s19, 1
      %p100 = por %p98, %p99
      %p101 = scmp.ne.s32.totalorder %s92, %s93
      %p102 = scmp.eq.s32.totalorder %s19, 0
      %p103 = por %p101, %p102
      %p104 = scmp.ne.s32.totalorder %s92, %s93
      %p105 = scmp.eq.s32.totalorder %s20, 1
      %p106 = por %p104, %p105
      %p108 = scmp.ne.s32.totalorder %s93, %s107
      %p109 = scmp.eq.s32.totalorder %s20, 0
      %p110 = por %p108, %p109
      %s112 = sadd.s32 %s111, 1
      %p115 = scmp.eq.s32.totalorder %s14, 1
      %p116 = scmp.ne.s32.totalorder %s111, %s113
      %p117 = scmp.eq.s32.totalorder %s14, 0
      %p118 = por %p116, %p117
      %p119 = scmp.ne.s32.totalorder %s111, %s113
      %p120 = scmp.eq.s32.totalorder %s19, 1
      %p121 = por %p119, %p120
      %p122 = scmp.ne.s32.totalorder %s113, %s114
      %p123 = scmp.eq.s32.totalorder %s19, 0
      %p124 = por %p122, %p123
      %p125 = scmp.ne.s32.totalorder %s113, %s114
      %p126 = scmp.eq.s32.totalorder %s20, 1
      %p127 = por %p125, %p126
      %p129 = scmp.ne.s32.totalorder %s114, %s128
      %p130 = scmp.eq.s32.totalorder %s20, 0
      %p131 = por %p129, %p130
      %s132 = ssub.s32 %s14, %s21
      %p133 = scmp.eq.s32.totalorder %s132, 0
      %s135 = sadd.s32 %s134, 1
      %s136 = scalar_select %p133, %s134, %s135
      %p139 = pneg %p133
      %p140 = scmp.eq.s32.totalorder %s14, 1
      %p141 = por %p139, %p140
      %p142 = scmp.ne.s32.totalorder %s134, %s137
      %p143 = scmp.eq.s32.totalorder %s14, 0
      %p144 = por %p142, %p143
      %p145 = scmp.ne.s32.totalorder %s134, %s137
      %p146 = scmp.eq.s32.totalorder %s19, 1
      %p147 = por %p145, %p146
      %p148 = scmp.ne.s32.totalorder %s137, %s138
      %p149 = scmp.eq.s32.totalorder %s19, 0
      %p150 = por %p148, %p149
      %p151 = scmp.ne.s32.totalorder %s137, %s138
      %p152 = scmp.eq.s32.totalorder %s20, 1
      %p153 = por %p151, %p152
      %p155 = scmp.ne.s32.totalorder %s138, %s154
      %p156 = scmp.eq.s32.totalorder %s20, 0
      %p157 = por %p155, %p156
      %p158 = scmp.le.s32.totalorder 1, %s14
      %p159 = scmp.lt.s32.totalorder %s14, 3
      %p160 = pnand %p158, %p159
      %p161 = pneg %p160
      // Predicated region
      $region9: #{bert_forward.22} parent=5 // pred_check
        _
      $region10: #{bert_forward.22} parent=5 // pred_check_branch
        %163 = sbr.rel (%p160) target = $region12
      $region11: #{bert_forward.22} parent=5 // pred_region
        %s164 = ssub.s32 %s14, 1
        // Predicated region
        $region13: #{bert_forward.22} parent=11 // pred_check
          %p165 = pneg %p61
        $region14: #{bert_forward.22} parent=11 // pred_check_branch
          %167 = sbr.rel (%p165) target = $region16
        $region15: #{bert_forward.22} parent=11 // pred_region
          _
        $region16: #{bert_forward.22} parent=11 // pred_fallthru
          _
        // Predicated region
        $region17: #{bert_forward.22} parent=11 // pred_check
          %p168 = pneg %p82
        $region18: #{bert_forward.22} parent=11 // pred_check_branch
          %170 = sbr.rel (%p168) target = $region20
        $region19: #{bert_forward.22} parent=11 // pred_region
          _
        $region20: #{bert_forward.22} parent=11 // pred_fallthru
          _
        // Predicated region
        $region21: #{bert_forward.22} parent=11 // pred_check
          %p171 = pneg %p103
        $region22: #{bert_forward.22} parent=11 // pred_check_branch
          %173 = sbr.rel (%p171) target = $region24
        $region23: #{bert_forward.22} parent=11 // pred_region
          _
        $region24: #{bert_forward.22} parent=11 // pred_fallthru
          _
        // Predicated region
        $region25: #{bert_forward.22} parent=11 // pred_check
          %p174 = pneg %p124
        $region26: #{bert_forward.22} parent=11 // pred_check_branch
          %176 = sbr.rel (%p174) target = $region28
        $region27: #{bert_forward.22} parent=11 // pred_region
          _
        $region28: #{bert_forward.22} parent=11 // pred_fallthru
          _
      $region12: #{bert_forward.22} parent=5 // pred_fallthru
        _
      %p177 = scmp.lt.s32.totalorder %s14, 2
      // Predicated region
      $region29: #{bert_forward.22} parent=5 // pred_check
        %p178 = pneg %p177
      $region30: #{bert_forward.22} parent=5 // pred_check_branch
        %180 = sbr.rel (%p178) target = $region32
      $region31: #{bert_forward.22} parent=5 // pred_region
        // Predicated region
        $region33: #{bert_forward.22} parent=31 // pred_check
          %p181 = pneg %p34
        $region34: #{bert_forward.22} parent=31 // pred_check_branch
          %183 = sbr.rel (%p181) target = $region36
        $region35: #{bert_forward.22} parent=31 // pred_region
          %p184 = scmp.lt.s32.totalorder %s14, 1
          %s185 = scalar_select %p184, %s14, 1
          %s186 = smul.addr %s185, 8
          %s187 = scalar_lea.vmem %s0, %s186
        $region36: #{bert_forward.22} parent=31 // pred_fallthru
          _
      $region32: #{bert_forward.22} parent=5 // pred_fallthru
        _
      %p188 = scmp.le.s32.totalorder 1, %s14
      %p189 = scmp.lt.s32.totalorder %s14, 3
      %p190 = pnand %p188, %p189
      %p191 = pneg %p190
      // Predicated region
      $region37: #{bert_forward.22} parent=5 // pred_check
        _
      $region38: #{bert_forward.22} parent=5 // pred_check_branch
        %193 = sbr.rel (%p190) target = $region40
      $region39: #{bert_forward.22} parent=5 // pred_region
        %s194 = ssub.s32 %s14, 1
        %p195 = scmp.lt.s32.totalorder %s19, 1
        %s196 = scalar_select %p195, %s19, 1
        %s197 = smul.addr %s196, 8
        %s198 = scalar_lea.vmem %s0, %s197
        %p199 = pneg %p40
        %p200 = pneg %p37
        %p201 = pneg %p61
        %p202 = pneg %p58
        %p203 = pneg %p82
        %p204 = pneg %p79
        %p205 = pneg %p103
        %p206 = pneg %p100
        %p207 = pneg %p124
        %p208 = pneg %p121
        %p209 = pneg %p150
        %p210 = pneg %p147
        %s211 = sand.u32 %s137, 1
        %s212 = scalar_lea.sflag [#allocation3], %s211
        %s213 = sand.u32 %s137, 1
        %s214 = smul.addr %s213, 4
        %s215 = scalar_lea.vmem [#allocation2], %s214
        %p216 = scmp.lt.s32.totalorder %s19, 1
        %s217 = scalar_select %p216, %s19, 1
        %s218 = smul.addr %s217, 8
        %s219 = scalar_lea.vmem %s0, %s218
        %v220 = vld [vmem:[%s219] sm:$0xff]
        %v221 = vld [vmem:[%s1] sm:$0xff]
        %v222 = vadd.f32 %v220, %v221
        %v223 = vld [vmem:[%s2] sm:$0x1]
        %v225 = vlaneseq
        %v226 = vshrl.u32 %v225, 7
        %v227 = vsub.s32 0, %v226
        %v228 = vrot.slane %v223, %v227
        %v230 = vadd.f32 %v222, %v228
        %vm231 = vcmask 261120
        %v232 = vsel %vm231, %v230, 0.0
        %233 = vadd.xlane.f32.xlu0 %v232
        %v234 = vpop.xlane.xlu0 %233
        %v235 = vrcp.pop 32.0
        %v236 = vmul.f32 %v234, %v235
        %v237 = vsub.f32 %v230, %v236
        %v238 = vmul.f32 %v237, %v237
        %v239 = vsel %vm231, %v238, 0.0
        %240 = vadd.xlane.f32.xlu0 %v239
        %v241 = vpop.xlane.xlu0 %240
        %v242 = vmul.f32 %v241, %v235
        %v243 = vadd.f32 %v242, 1e-12
        %v244 = vrsqrt.pop %v243
        %v245 = vmul.f32 %v237, %v244
        %v246 = vld [vmem:[%s3] sm:$0x1]
        %v248 = vlaneseq
        %v249 = vshrl.u32 %v248, 7
        %v250 = vsub.s32 0, %v249
        %v251 = vrot.slane %v246, %v250
        %v253 = vmul.f32 %v245, %v251
        %v254 = vld [vmem:[%s4] sm:$0x1]
        %v256 = vlaneseq
        %v257 = vshrl.u32 %v256, 7
        %v258 = vsub.s32 0, %v257
        %v259 = vrot.slane %v254, %v258
        %v261 = vadd.f32 %v253, %v259
        %v262 = vpack.c.bf16 %v261, %v261
        %vm263 = vcmask 257024
        %264 = vst.msk [vmem:[%s215] sm:$0xf] %vm263, %v262
        %s265 = sand.u32 %s137, 1
        %s266 = scalar_lea.sflag [#allocation3], %s265
        %s267 = sand.u32 %s137, 1
        %s268 = smul.addr %s267, 4
        %s269 = scalar_lea.vmem [#allocation2], %s268
        // Predicated region
        $region41: #{bert_forward.22} parent=39 // pred_check
          %p270 = pneg %p147
        $region42: #{bert_forward.22} parent=39 // pred_check_branch
          %272 = sbr.rel (%p270) target = $region44
        $region43: #{bert_forward.22} parent=39 // pred_region
          %s274 = ssub.s32 64, 64
          %275 = vsyncadd %s266, %s274
          %s276 = smul.addr %s19, 64
          %s277 = scalar_lea.hbm %s5, %s276
          %s279 = sshll.u32 %s269, 4
          %s280 = int_to_ptr.vmem [resolvable:$true] %s279
          %282 = dma.vmem_to_hbm [thread:$0]  %s280, 64, %s277, %s266
        $region44: #{bert_forward.22} parent=39 // pred_fallthru
          _
      $region40: #{bert_forward.22} parent=5 // pred_fallthru
        _
      %p283 = scmp.le.s32.totalorder 2, %s14
      // Predicated region
      $region45: #{bert_forward.22} parent=5 // pred_check
        %p284 = pneg %p283
      $region46: #{bert_forward.22} parent=5 // pred_check_branch
        %286 = sbr.rel (%p284) target = $region48
      $region47: #{bert_forward.22} parent=5 // pred_region
        %s287 = ssub.s32 %s14, 2
        // Predicated region
        $region49: #{bert_forward.22} parent=47 // pred_check
          %p288 = pneg %p153
        $region50: #{bert_forward.22} parent=47 // pred_check_branch
          %290 = sbr.rel (%p288) target = $region52
        $region51: #{bert_forward.22} parent=47 // pred_region
          %s291 = sand.u32 %s138, 1
          %s292 = scalar_lea.sflag [#allocation3], %s291
          %s293 = sand.u32 %s138, 1
          %s294 = smul.addr %s293, 4
          %s295 = scalar_lea.vmem [#allocation2], %s294
          %296 = dma.done %s292, 64
        $region52: #{bert_forward.22} parent=47 // pred_fallthru
          _
      $region48: #{bert_forward.22} parent=5 // pred_fallthru
        _
    $region6: #{bert_forward.22} parent=1 // loop_footer
      %s18 = sadd.s32 1, %s14
    $region7: #{bert_forward.22} parent=1 // loop_footer_branch
      %13 = sbr.rel target = $region3
    $region8: #{bert_forward.22} parent=1 // loop_exit
      _
    %297 = vsyncpa [#allocation3], 1
    %s298 = scalar_lea.sflag [#allocation3], 1
    %299 = vsyncpa %s298, 1

// kernel: bert_forward.23
$region0: #{bert_forward.23}
  #allocation0 [shape = 'u32[]', space=smem, size = 0x4, offset = 0x4, fixed_abs, tag = 'smem constant byte address 0x4 - core index']
  #allocation1 [shape = 'u32[144,128]{1,0:T(1,128)}', space=vmem, size = 0x12000, scoped, tag = 'internal scratch']
  #allocation2 [shape = 'f32[16,32]{1,0:T(8,128)}', space=vmem, size = 0x2000, scoped, tag = 'scratch operand']
  %s0 = inlined_call_operand.hbm [shape: bf16[16,32], index: 0, kind: input, shape index: {}]
  %s1 = inlined_call_operand.hbm [shape: bf16[3,32,32], index: 1, kind: input, shape index: {}]
  %s2 = inlined_call_operand.hbm [shape: f32[3,1,32], index: 2, kind: input, shape index: {}]
  %s3 = inlined_call_operand.hbm [shape: bf16[3,16,32], index: 3, kind: output, shape index: {}]
  %s4 = sld [smem:[#allocation0]]
  $region65: #{bert_forward.23} parent=0
    _
  %s6 = ssub.s32 1, %s4
  %s7 = scalar_select 0, %s6, %s4
  $region1: #{bert_forward.23} parent=0
    #allocation3 [shape = 'u8[4096]{0}', space=vmem, size = 0x1000, scoped, tag = 'input window, operand 0, single buffered']
    #allocation4 [shape = 's32[2]{0}', space=sflag, size = 0x8, scoped, tag = 'scoped memory for bert_forward.23']
    #allocation5 [shape = 's32[2]{0}', space=sflag, size = 0x8, scoped, tag = 'scoped memory for bert_forward.23']
    #allocation6 [shape = 'u8[16384]{0}', space=vmem, size = 0x4000, scoped, tag = 'input window, operand 1']
    #allocation7 [shape = 's32[2]{0}', space=sflag, size = 0x8, scoped, tag = 'scoped memory for bert_forward.23']
    #allocation8 [shape = 'u8[1024]{0}', space=vmem, size = 0x400, scoped, tag = 'input window, operand 2']
    #allocation9 [shape = 'u8[8192]{0}', space=vmem, size = 0x2000, scoped, tag = 'output window, operand 0']
    %8 = vsyncpa [#allocation4], 0
    %9 = vsyncpa [#allocation7], 0
    %s10 = scalar_lea.sflag [#allocation7], 1
    %11 = vsyncpa %s10, 0
    %12 = vsyncpa [#allocation5], 0
    %s13 = scalar_lea.sflag [#allocation5], 1
    %14 = vsyncpa %s13, 0
    loop: start=0, step=1, limit=5
    $region2: #{bert_forward.23} parent=1 // loop_pre_header
      _
    $region3: #{bert_forward.23} parent=1 // loop_header
      %s16 = sphi 0, %s20
      %p17 = scmp.ge.s32.totalorder %s16, 5
      %s23 = sphi 0, %s42
      %s24 = sphi 0, %s38
      %s25 = sphi 0, %s34
      %s26 = sphi 0, %s23
      %s27 = sphi 0, %s24
      %s28 = sphi 0, %s25
      %s29 = sphi 0, %s26
      %s30 = sphi 0, %s27
      %s31 = sphi 0, %s28
      %s47 = sphi 0, %s49
      %s50 = sphi 0, %s47
      %s51 = sphi 0, %s50
      %s67 = sphi 0, %s51
      %s75 = sphi 0, %s77
      %s78 = sphi 0, %s75
      %s79 = sphi 0, %s78
      %s95 = sphi 0, %s79
      %s101 = sphi 0, %s103
      %s104 = sphi 0, %s101
      %s105 = sphi 0, %s104
      %s121 = sphi 0, %s105
      %s129 = sphi 0, %s131
      %s132 = sphi 0, %s129
      %s133 = sphi 0, %s132
      %s149 = sphi 0, %s133
    $region4: #{bert_forward.23} parent=1 // loop_header_branch
      %19 = sbr.rel (%p17) target = $region8
    $region5: #{bert_forward.23} parent=1 // loop_body
      %s21 = ssub.s32 %s16, 1
      %s22 = ssub.s32 %s16, 2
      %s32 = sadd.s32 1, %s25
      %p33 = scmp.ge.s32.totalorder %s32, 1
      %s34 = scalar_select %p33, 0, %s32
      %s35 = sadd.s32 1, %s24
      %s36 = scalar_select %p33, %s35, %s24
      %p37 = scmp.ge.s32.totalorder %s36, 3
      %s38 = scalar_select %p37, 0, %s36
      %s39 = sadd.s32 1, %s23
      %s40 = scalar_select %p37, %s39, %s23
      %p41 = scmp.ge.s32.totalorder %s40, 1
      %s42 = scalar_select %p41, 0, %s40
      %s43 = ssub.s32 %s23, %s42
      %s44 = ssub.s32 %s25, %s34
      %s45 = sor.u32 %s43, %s44
      %p46 = scmp.eq.s32.totalorder %s45, 0
      %s48 = sadd.s32 %s47, 1
      %s49 = scalar_select %p46, %s47, %s48
      %p52 = pneg %p46
      %p53 = scmp.eq.s32.totalorder %s16, 2
      %p54 = por %p52, %p53
      %p55 = scmp.ne.s32.totalorder %s47, %s50
      %p56 = scmp.eq.s32.totalorder %s16, 0
      %p57 = por %p55, %p56
      %p58 = scmp.ne.s32.totalorder %s47, %s50
      %p59 = scmp.eq.s32.totalorder %s21, 2
      %p60 = por %p58, %p59
      %p61 = scmp.ne.s32.totalorder %s50, %s51
      %p62 = scmp.eq.s32.totalorder %s21, 0
      %p63 = por %p61, %p62
      %p64 = scmp.ne.s32.totalorder %s50, %s51
      %p65 = scmp.eq.s32.totalorder %s22, 2
      %p66 = por %p64, %p65
      %p68 = scmp.ne.s32.totalorder %s51, %s67
      %p69 = scmp.eq.s32.totalorder %s22, 0
      %p70 = por %p68, %p69
      %s71 = ssub.s32 %s24, %s38
      %s72 = ssub.s32 %s25, %s34
      %s73 = sor.u32 %s71, %s72
      %p74 = scmp.eq.s32.totalorder %s73, 0
      %s76 = sadd.s32 %s75, 1
      %s77 = scalar_select %p74, %s75, %s76
      %p80 = pneg %p74
      %p81 = scmp.eq.s32.totalorder %s16, 2
      %p82 = por %p80, %p81
      %p83 = scmp.ne.s32.totalorder %s75, %s78
      %p84 = scmp.eq.s32.totalorder %s16, 0
      %p85 = por %p83, %p84
      %p86 = scmp.ne.s32.totalorder %s75, %s78
      %p87 = scmp.eq.s32.totalorder %s21, 2
      %p88 = por %p86, %p87
      %p89 = scmp.ne.s32.totalorder %s78, %s79
      %p90 = scmp.eq.s32.totalorder %s21, 0
      %p91 = por %p89, %p90
      %p92 = scmp.ne.s32.totalorder %s78, %s79
      %p93 = scmp.eq.s32.totalorder %s22, 2
      %p94 = por %p92, %p93
      %p96 = scmp.ne.s32.totalorder %s79, %s95
      %p97 = scmp.eq.s32.totalorder %s22, 0
      %p98 = por %p96, %p97
      %s99 = ssub.s32 %s24, %s38
      %p100 = scmp.eq.s32.totalorder %s99, 0
      %s102 = sadd.s32 %s101, 1
      %s103 = scalar_select %p100, %s101, %s102
      %p106 = pneg %p100
      %p107 = scmp.eq.s32.totalorder %s16, 2
      %p108 = por %p106, %p107
      %p109 = scmp.ne.s32.totalorder %s101, %s104
      %p110 = scmp.eq.s32.totalorder %s16, 0
      %p111 = por %p109, %p110
      %p112 = scmp.ne.s32.totalorder %s101, %s104
      %p113 = scmp.eq.s32.totalorder %s21, 2
      %p114 = por %p112, %p113
      %p115 = scmp.ne.s32.totalorder %s104, %s105
      %p116 = scmp.eq.s32.totalorder %s21, 0
      %p117 = por %p115, %p116
      %p118 = scmp.ne.s32.totalorder %s104, %s105
      %p119 = scmp.eq.s32.totalorder %s22, 2
      %p120 = por %p118, %p119
      %p122 = scmp.ne.s32.totalorder %s105, %s121
      %p123 = scmp.eq.s32.totalorder %s22, 0
      %p124 = por %p122, %p123
      %s125 = ssub.s32 %s24, %s38
      %s126 = ssub.s32 %s23, %s42
      %s127 = sor.u32 %s125, %s126
      %p128 = scmp.eq.s32.totalorder %s127, 0
      %s130 = sadd.s32 %s129, 1
      %s131 = scalar_select %p128, %s129, %s130
      %p134 = pneg %p128
      %p135 = scmp.eq.s32.totalorder %s16, 2
      %p136 = por %p134, %p135
      %p137 = scmp.ne.s32.totalorder %s129, %s132
      %p138 = scmp.eq.s32.totalorder %s16, 0
      %p139 = por %p137, %p138
      %p140 = scmp.ne.s32.totalorder %s129, %s132
      %p141 = scmp.eq.s32.totalorder %s21, 2
      %p142 = por %p140, %p141
      %p143 = scmp.ne.s32.totalorder %s132, %s133
      %p144 = scmp.eq.s32.totalorder %s21, 0
      %p145 = por %p143, %p144
      %p146 = scmp.ne.s32.totalorder %s132, %s133
      %p147 = scmp.eq.s32.totalorder %s22, 2
      %p148 = por %p146, %p147
      %p150 = scmp.ne.s32.totalorder %s133, %s149
      %p151 = scmp.eq.s32.totalorder %s22, 0
      %p152 = por %p150, %p151
      %p153 = scmp.le.s32.totalorder 1, %s16
      %p154 = scmp.lt.s32.totalorder %s16, 4
      %p155 = pnand %p153, %p154
      %p156 = pneg %p155
      // Predicated region
      $region9: #{bert_forward.23} parent=5 // pred_check
        _
      $region10: #{bert_forward.23} parent=5 // pred_check_branch
        %158 = sbr.rel (%p155) target = $region12
      $region11: #{bert_forward.23} parent=5 // pred_region
        %s159 = ssub.s32 %s16, 1
        // Predicated region
        $region13: #{bert_forward.23} parent=11 // pred_check
          %p160 = pneg %p63
        $region14: #{bert_forward.23} parent=11 // pred_check_branch
          %162 = sbr.rel (%p160) target = $region16
        $region15: #{bert_forward.23} parent=11 // pred_region
          %s163 = smul.u32 2, %s26
          %s165 = ssub.s32 128, 128
          %166 = vsyncadd [#allocation4], %s165
          %s167 = sadd.s32 %s28, %s163
          %s168 = smul.addr %s167, 64
          %s169 = scalar_lea.hbm %s0, %s168
          %s170 = sshll.u32 [#allocation3], 4
          %s171 = int_to_ptr.vmem [resolvable:$true] %s170
          %176 = dma.hbm_to_vmem [thread:$0]  %s169, 128, %s171, [#allocation4], 64, 64, 4
        $region16: #{bert_forward.23} parent=11 // pred_fallthru
          _
      $region12: #{bert_forward.23} parent=5 // pred_fallthru
        _
      %p177 = scmp.lt.s32.totalorder %s16, 3
      // Predicated region
      $region17: #{bert_forward.23} parent=5 // pred_check
        %p178 = pneg %p177
      $region18: #{bert_forward.23} parent=5 // pred_check_branch
        %180 = sbr.rel (%p178) target = $region20
      $region19: #{bert_forward.23} parent=5 // pred_region
        // Predicated region
        $region21: #{bert_forward.23} parent=19 // pred_check
          %p181 = pneg %p85
        $region22: #{bert_forward.23} parent=19 // pred_check_branch
          %183 = sbr.rel (%p181) target = $region24
        $region23: #{bert_forward.23} parent=19 // pred_region
          %s184 = sand.u32 %s16, 1
          %s185 = scalar_lea.sflag [#allocation7], %s184
          %s186 = sand.u32 %s75, 1
          %s187 = smul.addr %s186, 16
          %s188 = scalar_lea.vmem [#allocation6], %s187
          %s189 = smul.u32 4, %s25
          %s191 = ssub.s32 256, 256
          %192 = vsyncadd %s185, %s191
          %s193 = smul.addr %s24, 4
          %s194 = sadd.s32 %s189, %s193
          %s195 = smul.addr %s194, 64
          %s196 = scalar_lea.hbm %s1, %s195
          %s197 = sshll.u32 %s188, 4
          %s198 = int_to_ptr.vmem [resolvable:$true] %s197
          %203 = dma.hbm_to_vmem [thread:$0]  %s196, 256, %s198, %s185, 64, 64, 4
        $region24: #{bert_forward.23} parent=19 // pred_fallthru
          _
        // Predicated region
        $region25: #{bert_forward.23} parent=19 // pred_check
          %p204 = pneg %p111
        $region26: #{bert_forward.23} parent=19 // pred_check_branch
          %206 = sbr.rel (%p204) target = $region28
        $region27: #{bert_forward.23} parent=19 // pred_region
          %s207 = sand.u32 %s16, 1
          %s208 = scalar_lea.sflag [#allocation7], %s207
          %s209 = sand.u32 %s101, 1
          %s210 = scalar_lea.vmem [#allocation8], %s209
          %s212 = ssub.s32 16, 16
          %213 = vsyncadd %s208, %s212
          %s214 = smul.addr %s24, 16
          %s215 = scalar_lea.hbm %s2, %s214
          %s217 = sshll.u32 %s210, 4
          %s218 = int_to_ptr.vmem [resolvable:$true] %s217
          %220 = dma.hbm_to_vmem [thread:$0]  %s215, 16, %s218, %s208
        $region28: #{bert_forward.23} parent=19 // pred_fallthru
          _
      $region20: #{bert_forward.23} parent=5 // pred_fallthru
        _
      %p221 = scmp.le.s32.totalorder 1, %s16
      %p222 = scmp.lt.s32.totalorder %s16, 4
      %p223 = pnand %p221, %p222
      %p224 = pneg %p223
      // Predicated region
      $region29: #{bert_forward.23} parent=5 // pred_check
        _
      $region30: #{bert_forward.23} parent=5 // pred_check_branch
        %226 = sbr.rel (%p223) target = $region32
      $region31: #{bert_forward.23} parent=5 // pred_region
        %s227 = ssub.s32 %s16, 1
        // Predicated region
        $region33: #{bert_forward.23} parent=31 // pred_check
          %p228 = pneg %p63
        $region34: #{bert_forward.23} parent=31 // pred_check_branch
          %230 = sbr.rel (%p228) target = $region36
        $region35: #{bert_forward.23} parent=31 // pred_region
          %231 = dma.done [#allocation4], 128
        $region36: #{bert_forward.23} parent=31 // pred_fallthru
          _
        %s232 = sand.u32 %s21, 1
        %s233 = scalar_lea.sflag [#allocation7], %s232
        %s234 = sand.u32 %s78, 1
        %s235 = smul.addr %s234, 16
        %s236 = scalar_lea.vmem [#allocation6], %s235
        // Predicated region
        $region37: #{bert_forward.23} parent=31 // pred_check
          %p237 = pneg %p91
        $region38: #{bert_forward.23} parent=31 // pred_check_branch
          %239 = sbr.rel (%p237) target = $region40
        $region39: #{bert_forward.23} parent=31 // pred_region
          %240 = dma.done %s233, 256
        $region40: #{bert_forward.23} parent=31 // pred_fallthru
          _
        %s241 = sand.u32 %s21, 1
        %s242 = scalar_lea.sflag [#allocation7], %s241
        %s243 = sand.u32 %s104, 1
        %s244 = scalar_lea.vmem [#allocation8], %s243
        // Predicated region
        $region41: #{bert_forward.23} parent=31 // pred_check
          %p245 = pneg %p117
        $region42: #{bert_forward.23} parent=31 // pred_check_branch
          %247 = sbr.rel (%p245) target = $region44
        $region43: #{bert_forward.23} parent=31 // pred_region
          %248 = dma.done %s242, 16
        $region44: #{bert_forward.23} parent=31 // pred_fallthru
          _
        %p249 = pneg %p63
        %p250 = pneg %p60
        %s251 = sand.u32 %s21, 1
        %s252 = scalar_lea.sflag [#allocation7], %s251
        %s253 = sand.u32 %s78, 1
        %s254 = smul.addr %s253, 16
        %s255 = scalar_lea.vmem [#allocation6], %s254
        %p256 = pneg %p91
        %p257 = pneg %p88
        %s258 = sand.u32 %s21, 1
        %s259 = scalar_lea.sflag [#allocation7], %s258
        %s260 = sand.u32 %s104, 1
        %s261 = scalar_lea.vmem [#allocation8], %s260
        %p262 = pneg %p117
        %p263 = pneg %p114
        %p264 = pneg %p145
        %p265 = pneg %p142
        %s266 = sand.u32 %s132, 1
        %s267 = scalar_lea.sflag [#allocation5], %s266
        %s268 = sand.u32 %s132, 1
        %s269 = smul.addr %s268, 8
        %s270 = scalar_lea.vmem [#allocation9], %s269
        %s271 = smul.u32 2, %s26
        %s272 = smul.u32 4, %s28
        %s273 = smul.u32 2, %s26
        %p275 = scmp.eq.s32.totalorder %s28, 0
        // Predicated region
        $region45: #{bert_forward.23} parent=31 // pred_check
          %p276 = pneg %p275
        $region46: #{bert_forward.23} parent=31 // pred_check_branch
          %278 = sbr.rel (%p276) target = $region48
        $region47: #{bert_forward.23} parent=31 // pred_region
          %vm279 = vcmask 261120
          %280 = vst.msk [vmem:[#allocation2] sm:$0xff] %vm279, 0.0
          %281 = vst.msk [vmem:[#allocation2 + $0x8] sm:$0xff] %vm279, 0.0
        $region48: #{bert_forward.23} parent=31 // pred_fallthru
          _
        %v282 = vld [vmem:[#allocation2] sm:$0xff]
        %v283 = vld [vmem:[#allocation2 + $0x8] sm:$0xff]
        %v284 = vld [vmem:[#allocation3] sm:$0xf]
        %v285 = vld [vmem:[#allocation3 + $0x4] sm:$0xf]
        %v286 = vld [vmem:[%s236] sm:$0xf]
        %v287 = vld [vmem:[%s236 + $0x4] sm:$0xf]
        %v288 = vld [vmem:[%s236 + $0x8] sm:$0xf]
        %v289 = vld [vmem:[%s236 + $0xc] sm:$0xf]
        %v292 = vunpack.c.l.b16 %v284
        %v293 = vunpack.c.l.b16 %v285
        %v294 = vpack.c.b16 %v293, %v292
        %v299 = vunpack.c.l.b16 %v286
        %v300 = vunpack.c.l.b16 %v287
        %v301 = vunpack.c.l.b16 %v288
        %v302 = vunpack.c.l.b16 %v289
        %v303 = vpack.c.b16 %v300, %v299
        %v304 = vpack.c.b16 %v302, %v301
        %vm307 = vcmask 261120
        %v309 = vsel %vm307, %v294, 0
        %311 = vmatprep.subr.bf16.mxu0 0
        %312 = vmatpush1.bf16.msra.mxu0 %v303
        %313 = vmatprep.subr.bf16.mxu0 0
        %314 = vmatpush1.bf16.msra.mxu0 %v304
        %315 = vmatprep.subr.bf16.mxu0 0
        %316 = vmatpush1.bf16.msra.mxu0 0
        %317 = vmatprep.subr.bf16.mxu0 0
        %318 = vmatpush1.bf16.msra.mxu0 0
        %319 = vmatprep.subr.bf16.mxu0 0
        %320 = vmatpush1.bf16.msra.mxu0 0
        %321 = vmatprep.subr.bf16.mxu0 0
        %322 = vmatpush1.bf16.msra.mxu0 0
        %323 = vmatprep.subr.bf16.mxu0 0
        %324 = vmatpush1.bf16.msra.mxu0 0
        %325 = vmatprep.subr.bf16.mxu0 0
        %326 = vmatpush1.bf16.msra.mxu0 0
        %327 = vmatprep.subr.bf16.mxu0 0
        %328 = vmatpush1.bf16.msra.mxu0 0
        %329 = vmatprep.subr.bf16.mxu0 0
        %330 = vmatpush1.bf16.msra.mxu0 0
        %331 = vmatprep.subr.bf16.mxu0 0
        %332 = vmatpush1.bf16.msra.mxu0 0
        %333 = vmatprep.subr.bf16.mxu0 0
        %334 = vmatpush1.bf16.msra.mxu0 0
        %335 = vmatprep.subr.bf16.mxu0 0
        %336 = vmatpush1.bf16.msra.mxu0 0
        %337 = vmatprep.subr.bf16.mxu0 0
        %338 = vmatpush1.bf16.msra.mxu0 0
        %339 = vmatprep.subr.bf16.mxu0 0
        %340 = vmatpush1.bf16.msra.mxu0 0
        %341 = vmatprep.subr.bf16.mxu0 0
        %342 = vmatpush1.bf16.msra.mxu0 0
        %343 = vmatprep.mubr.bf16.mxu0 0
        %344 = vmatmul.mubr.bf16.gmra.mrb[0].mxu0 %v309
        %v345 = vpop.f32.mrb[0].mxu0
        %v346 = vadd.f32 0.0, %v345
        %v347 = vpop.f32.mrb[0].mxu0
        %v348 = vpop.f32.mrb[0].mxu0
        %v349 = vadd.f32 0.0, %v348
        %v350 = vpop.f32.mrb[0].mxu0
        %351 = vdwg.mxu0
        %v352 = vadd.f32 %v282, %v346
        %v353 = vadd.f32 %v283, %v349
        %354 = vst.msk [vmem:[#allocation2] sm:$0xff] %vm307, %v352
        %355 = vst.msk [vmem:[#allocation2 + $0x8] sm:$0xff] %vm307, %v353
        // Predicated region
        $region49: #{bert_forward.23} parent=31 // pred_check
          %p356 = pneg %p275
        $region50: #{bert_forward.23} parent=31 // pred_check_branch
          %358 = sbr.rel (%p356) target = $region52
        $region51: #{bert_forward.23} parent=31 // pred_region
          %v359 = vld [vmem:[#allocation2] sm:$0xff]
          %v360 = vld [vmem:[#allocation2 + $0x8] sm:$0xff]
          %v361 = vld [vmem:[%s244] sm:$0x1]
          %v363 = vlaneseq
          %v364 = vshrl.u32 %v363, 7
          %v365 = vsub.s32 0, %v364
          %v366 = vrot.slane %v361, %v365
          %v368 = vadd.f32 %v359, %v366
          %v369 = vadd.f32 %v360, %v366
          %v370 = vpack.c.bf16 %v369, %v368
          %v372 = vunpack.c.l.b16 %v370
          %v373 = vunpack.c.h.b16 %v370
          %v374 = vpack.c.b16 %v372, %v372
          %v375 = vpack.c.b16 %v373, %v373
          %vm378 = vcmask 257024
          %379 = vst.msk [vmem:[%s270] sm:$0xf] %vm378, %v374
          %380 = vst.msk [vmem:[%s270 + $0x4] sm:$0xf] %vm378, %v375
        $region52: #{bert_forward.23} parent=31 // pred_fallthru
          _
        %s381 = sand.u32 %s132, 1
        %s382 = scalar_lea.sflag [#allocation5], %s381
        %s383 = sand.u32 %s132, 1
        %s384 = smul.addr %s383, 8
        %s385 = scalar_lea.vmem [#allocation9], %s384
        // Predicated region
        $region53: #{bert_forward.23} parent=31 // pred_check
          %p386 = pneg %p142
        $region54: #{bert_forward.23} parent=31 // pred_check_branch
          %388 = sbr.rel (%p386) target = $region56
        $region55: #{bert_forward.23} parent=31 // pred_region
          %s389 = smul.u32 2, %s26
          %s391 = ssub.s32 128, 128
          %392 = vsyncadd %s382, %s391
          %s393 = smul.addr %s27, 2
          %s394 = sadd.s32 %s389, %s393
          %s395 = smul.addr %s394, 64
          %s396 = scalar_lea.hbm %s3, %s395
          %s397 = sshll.u32 %s385, 4
          %s398 = int_to_ptr.vmem [resolvable:$true] %s397
          %403 = dma.vmem_to_hbm [thread:$0]  %s398, 128, %s396, %s382, 64, 64, 4
        $region56: #{bert_forward.23} parent=31 // pred_fallthru
          _
      $region32: #{bert_forward.23} parent=5 // pred_fallthru
        _
      %p404 = scmp.le.s32.totalorder 2, %s16
      // Predicated region
      $region57: #{bert_forward.23} parent=5 // pred_check
        %p405 = pneg %p404
      $region58: #{bert_forward.23} parent=5 // pred_check_branch
        %407 = sbr.rel (%p405) target = $region60
      $region59: #{bert_forward.23} parent=5 // pred_region
        %s408 = ssub.s32 %s16, 2
        // Predicated region
        $region61: #{bert_forward.23} parent=59 // pred_check
          %p409 = pneg %p148
        $region62: #{bert_forward.23} parent=59 // pred_check_branch
          %411 = sbr.rel (%p409) target = $region64
        $region63: #{bert_forward.23} parent=59 // pred_region
          %s412 = sand.u32 %s133, 1
          %s413 = scalar_lea.sflag [#allocation5], %s412
          %s414 = sand.u32 %s133, 1
          %s415 = smul.addr %s414, 8
          %s416 = scalar_lea.vmem [#allocation9], %s415
          %417 = dma.done %s413, 128
        $region64: #{bert_forward.23} parent=59 // pred_fallthru
          _
      $region60: #{bert_forward.23} parent=5 // pred_fallthru
        _
    $region6: #{bert_forward.23} parent=1 // loop_footer
      %s20 = sadd.s32 1, %s16
    $region7: #{bert_forward.23} parent=1 // loop_footer_branch
      %15 = sbr.rel target = $region3
    $region8: #{bert_forward.23} parent=1 // loop_exit
      _
    %418 = vsyncpa [#allocation4], 1
    %s419 = scalar_lea.sflag [#allocation4], 1
    %420 = vsyncpa %s419, 1
    %421 = vsyncpa [#allocation7], 1
    %s422 = scalar_lea.sflag [#allocation7], 1
    %423 = vsyncpa %s422, 1
    %424 = vsyncpa [#allocation5], 1
    %s425 = scalar_lea.sflag [#allocation5], 1
    %426 = vsyncpa %s425, 1

// kernel: bert_forward.24
$region0: #{bert_forward.24}
  #allocation0 [shape = 'u32[]', space=smem, size = 0x4, offset = 0x4, fixed_abs, tag = 'smem constant byte address 0x4 - core index']
  #allocation1 [shape = 'u32[144,128]{1,0:T(1,128)}', space=vmem, size = 0x12000, scoped, tag = 'internal scratch']
  %s0 = inlined_call_operand.hbm [shape: bf16[3,2,8,32], index: 0, kind: input, shape index: {}, may-alias: {0,1,2}]
  %s1 = inlined_call_operand.hbm [shape: bf16[3,2,8,32], index: 1, kind: input, shape index: {}, may-alias: {0,1,2}]
  %s2 = inlined_call_operand.hbm [shape: bf16[3,2,8,32], index: 2, kind: input, shape index: {}, may-alias: {0,1,2}]
  %s3 = inlined_call_operand.vmem [shape: f32[2,1,8], index: 3, kind: input, shape index: {}]
  %s4 = inlined_call_operand.hbm [shape: bf16[2,8,32], index: 4, kind: output, shape index: {}]
  %s5 = sld [smem:[#allocation0]]
  $region61: #{bert_forward.24} parent=0
    _
  %s7 = ssub.s32 1, %s5
  %s8 = scalar_select 0, %s7, %s5
  $region1: #{bert_forward.24} parent=0
    #allocation2 [shape = 'u8[4096]{0}', space=vmem, size = 0x1000, scoped, tag = 'input window, operand 0']
    #allocation3 [shape = 's32[2]{0}', space=sflag, size = 0x8, scoped, tag = 'scoped memory for bert_forward.24']
    #allocation4 [shape = 's32[2]{0}', space=sflag, size = 0x8, scoped, tag = 'scoped memory for bert_forward.24']
    #allocation5 [shape = 'u8[4096]{0}', space=vmem, size = 0x1000, scoped, tag = 'input window, operand 1']
    #allocation6 [shape = 's32[2]{0}', space=sflag, size = 0x8, scoped, tag = 'scoped memory for bert_forward.24']
    #allocation7 [shape = 'u8[4096]{0}', space=vmem, size = 0x1000, scoped, tag = 'input window, operand 2']
    #allocation8 [shape = 'u8[4096]{0}', space=vmem, size = 0x1000, scoped, tag = 'output window, operand 0']
    %9 = vsyncpa [#allocation3], 0
    %s10 = scalar_lea.sflag [#allocation3], 1
    %11 = vsyncpa %s10, 0
    %12 = vsyncpa [#allocation6], 0
    %s13 = scalar_lea.sflag [#allocation6], 1
    %14 = vsyncpa %s13, 0
    %15 = vsyncpa [#allocation4], 0
    %s16 = scalar_lea.sflag [#allocation4], 1
    %17 = vsyncpa %s16, 0
    loop: start=0, step=1, limit=4
    $region2: #{bert_forward.24} parent=1 // loop_pre_header
      _
    $region3: #{bert_forward.24} parent=1 // loop_header
      %s19 = sphi 0, %s23
      %p20 = scmp.ge.s32.totalorder %s19, 4
      %s26 = sphi 0, %s45
      %s27 = sphi 0, %s41
      %s28 = sphi 0, %s37
      %s29 = sphi 0, %s26
      %s30 = sphi 0, %s27
      %s31 = sphi 0, %s28
      %s32 = sphi 0, %s29
      %s33 = sphi 0, %s30
      %s34 = sphi 0, %s31
      %s52 = sphi 0, %s54
      %s55 = sphi 0, %s52
      %s56 = sphi 0, %s55
      %s72 = sphi 0, %s56
      %s80 = sphi 0, %s82
      %s83 = sphi 0, %s80
      %s84 = sphi 0, %s83
      %s100 = sphi 0, %s84
      %s108 = sphi 0, %s110
      %s111 = sphi 0, %s108
      %s112 = sphi 0, %s111
      %s128 = sphi 0, %s112
      %s134 = sphi 0, %s136
      %s137 = sphi 0, %s134
      %s138 = sphi 0, %s137
      %s154 = sphi 0, %s138
      %s164 = sphi 0, %s166
      %s167 = sphi 0, %s164
      %s168 = sphi 0, %s167
      %s184 = sphi 0, %s168
    $region4: #{bert_forward.24} parent=1 // loop_header_branch
      %22 = sbr.rel (%p20) target = $region8
    $region5: #{bert_forward.24} parent=1 // loop_body
      %s24 = ssub.s32 %s19, 1
      %s25 = ssub.s32 %s19, 2
      %s35 = sadd.s32 1, %s28
      %p36 = scmp.ge.s32.totalorder %s35, 1
      %s37 = scalar_select %p36, 0, %s35
      %s38 = sadd.s32 1, %s27
      %s39 = scalar_select %p36, %s38, %s27
      %p40 = scmp.ge.s32.totalorder %s39, 1
      %s41 = scalar_select %p40, 0, %s39
      %s42 = sadd.s32 1, %s26
      %s43 = scalar_select %p40, %s42, %s26
      %p44 = scmp.ge.s32.totalorder %s43, 2
      %s45 = scalar_select %p44, 0, %s43
      %s46 = ssub.s32 %s26, %s45
      %s47 = ssub.s32 %s28, %s37
      %s48 = sor.u32 %s46, %s47
      %s49 = ssub.s32 %s27, %s41
      %s50 = sor.u32 %s48, %s49
      %p51 = scmp.eq.s32.totalorder %s50, 0
      %s53 = sadd.s32 %s52, 1
      %s54 = scalar_select %p51, %s52, %s53
      %p57 = pneg %p51
      %p58 = scmp.eq.s32.totalorder %s19, 1
      %p59 = por %p57, %p58
      %p60 = scmp.ne.s32.totalorder %s52, %s55
      %p61 = scmp.eq.s32.totalorder %s19, 0
      %p62 = por %p60, %p61
      %p63 = scmp.ne.s32.totalorder %s52, %s55
      %p64 = scmp.eq.s32.totalorder %s24, 1
      %p65 = por %p63, %p64
      %p66 = scmp.ne.s32.totalorder %s55, %s56
      %p67 = scmp.eq.s32.totalorder %s24, 0
      %p68 = por %p66, %p67
      %p69 = scmp.ne.s32.totalorder %s55, %s56
      %p70 = scmp.eq.s32.totalorder %s25, 1
      %p71 = por %p69, %p70
      %p73 = scmp.ne.s32.totalorder %s56, %s72
      %p74 = scmp.eq.s32.totalorder %s25, 0
      %p75 = por %p73, %p74
      %s76 = ssub.s32 %s26, %s45
      %s77 = ssub.s32 %s27, %s41
      %s78 = sor.u32 %s76, %s77
      %p79 = scmp.eq.s32.totalorder %s78, 0
      %s81 = sadd.s32 %s80, 1
      %s82 = scalar_select %p79, %s80, %s81
      %p85 = pneg %p79
      %p86 = scmp.eq.s32.totalorder %s19, 1
      %p87 = por %p85, %p86
      %p88 = scmp.ne.s32.totalorder %s80, %s83
      %p89 = scmp.eq.s32.totalorder %s19, 0
      %p90 = por %p88, %p89
      %p91 = scmp.ne.s32.totalorder %s80, %s83
      %p92 = scmp.eq.s32.totalorder %s24, 1
      %p93 = por %p91, %p92
      %p94 = scmp.ne.s32.totalorder %s83, %s84
      %p95 = scmp.eq.s32.totalorder %s24, 0
      %p96 = por %p94, %p95
      %p97 = scmp.ne.s32.totalorder %s83, %s84
      %p98 = scmp.eq.s32.totalorder %s25, 1
      %p99 = por %p97, %p98
      %p101 = scmp.ne.s32.totalorder %s84, %s100
      %p102 = scmp.eq.s32.totalorder %s25, 0
      %p103 = por %p101, %p102
      %s104 = ssub.s32 %s26, %s45
      %s105 = ssub.s32 %s27, %s41
      %s106 = sor.u32 %s104, %s105
      %p107 = scmp.eq.s32.totalorder %s106, 0
      %s109 = sadd.s32 %s108, 1
      %s110 = scalar_select %p107, %s108, %s109
      %p113 = pneg %p107
      %p114 = scmp.eq.s32.totalorder %s19, 1
      %p115 = por %p113, %p114
      %p116 = scmp.ne.s32.totalorder %s108, %s111
      %p117 = scmp.eq.s32.totalorder %s19, 0
      %p118 = por %p116, %p117
      %p119 = scmp.ne.s32.totalorder %s108, %s111
      %p120 = scmp.eq.s32.totalorder %s24, 1
      %p121 = por %p119, %p120
      %p122 = scmp.ne.s32.totalorder %s111, %s112
      %p123 = scmp.eq.s32.totalorder %s24, 0
      %p124 = por %p122, %p123
      %p125 = scmp.ne.s32.totalorder %s111, %s112
      %p126 = scmp.eq.s32.totalorder %s25, 1
      %p127 = por %p125, %p126
      %p129 = scmp.ne.s32.totalorder %s112, %s128
      %p130 = scmp.eq.s32.totalorder %s25, 0
      %p131 = por %p129, %p130
      %s132 = ssub.s32 %s26, %s45
      %p133 = scmp.eq.s32.totalorder %s132, 0
      %s135 = sadd.s32 %s134, 1
      %s136 = scalar_select %p133, %s134, %s135
      %p139 = pneg %p133
      %p140 = scmp.eq.s32.totalorder %s19, 1
      %p141 = por %p139, %p140
      %p142 = scmp.ne.s32.totalorder %s134, %s137
      %p143 = scmp.eq.s32.totalorder %s19, 0
      %p144 = por %p142, %p143
      %p145 = scmp.ne.s32.totalorder %s134, %s137
      %p146 = scmp.eq.s32.totalorder %s24, 1
      %p147 = por %p145, %p146
      %p148 = scmp.ne.s32.totalorder %s137, %s138
      %p149 = scmp.eq.s32.totalorder %s24, 0
      %p150 = por %p148, %p149
      %p151 = scmp.ne.s32.totalorder %s137, %s138
      %p152 = scmp.eq.s32.totalorder %s25, 1
      %p153 = por %p151, %p152
      %p155 = scmp.ne.s32.totalorder %s138, %s154
      %p156 = scmp.eq.s32.totalorder %s25, 0
      %p157 = por %p155, %p156
      %s158 = ssub.s32 %s26, %s45
      %s159 = ssub.s32 %s28, %s37
      %s160 = sor.u32 %s158, %s159
      %s161 = ssub.s32 %s27, %s41
      %s162 = sor.u32 %s160, %s161
      %p163 = scmp.eq.s32.totalorder %s162, 0
      %s165 = sadd.s32 %s164, 1
      %s166 = scalar_select %p163, %s164, %s165
      %p169 = pneg %p163
      %p170 = scmp.eq.s32.totalorder %s19, 1
      %p171 = por %p169, %p170
      %p172 = scmp.ne.s32.totalorder %s164, %s167
      %p173 = scmp.eq.s32.totalorder %s19, 0
      %p174 = por %p172, %p173
      %p175 = scmp.ne.s32.totalorder %s164, %s167
      %p176 = scmp.eq.s32.totalorder %s24, 1
      %p177 = por %p175, %p176
      %p178 = scmp.ne.s32.totalorder %s167, %s168
      %p179 = scmp.eq.s32.totalorder %s24, 0
      %p180 = por %p178, %p179
      %p181 = scmp.ne.s32.totalorder %s167, %s168
      %p182 = scmp.eq.s32.totalorder %s25, 1
      %p183 = por %p181, %p182
      %p185 = scmp.ne.s32.totalorder %s168, %s184
      %p186 = scmp.eq.s32.totalorder %s25, 0
      %p187 = por %p185, %p186
      %p188 = scmp.le.s32.totalorder 1, %s19
      %p189 = scmp.lt.s32.totalorder %s19, 3
      %p190 = pnand %p188, %p189
      %p191 = pneg %p190
      // Predicated region
      $region9: #{bert_forward.24} parent=5 // pred_check
        _
      $region10: #{bert_forward.24} parent=5 // pred_check_branch
        %193 = sbr.rel (%p190) target = $region12
      $region11: #{bert_forward.24} parent=5 // pred_region
        %s194 = ssub.s32 %s19, 1
      $region12: #{bert_forward.24} parent=5 // pred_fallthru
        _
      %p195 = scmp.lt.s32.totalorder %s19, 2
      // Predicated region
      $region13: #{bert_forward.24} parent=5 // pred_check
        %p196 = pneg %p195
      $region14: #{bert_forward.24} parent=5 // pred_check_branch
        %198 = sbr.rel (%p196) target = $region16
      $region15: #{bert_forward.24} parent=5 // pred_region
        // Predicated region
        $region17: #{bert_forward.24} parent=15 // pred_check
          %p199 = pneg %p62
        $region18: #{bert_forward.24} parent=15 // pred_check_branch
          %201 = sbr.rel (%p199) target = $region20
        $region19: #{bert_forward.24} parent=15 // pred_region
          %s202 = sand.u32 %s52, 1
          %s203 = scalar_lea.sflag [#allocation3], %s202
          %s204 = sand.u32 %s52, 1
          %s205 = smul.addr %s204, 4
          %s206 = scalar_lea.vmem [#allocation2], %s205
          %s208 = ssub.s32 64, 64
          %209 = vsyncadd %s203, %s208
          %s210 = sadd.s32 %s27, %s28
          %s211 = sadd.s32 %s210, %s26
          %s212 = smul.addr %s211, 64
          %s213 = scalar_lea.hbm %s0, %s212
          %s215 = sshll.u32 %s206, 4
          %s216 = int_to_ptr.vmem [resolvable:$true] %s215
          %218 = dma.hbm_to_vmem [thread:$0]  %s213, 64, %s216, %s203
        $region20: #{bert_forward.24} parent=15 // pred_fallthru
          _
        // Predicated region
        $region21: #{bert_forward.24} parent=15 // pred_check
          %p219 = pneg %p90
        $region22: #{bert_forward.24} parent=15 // pred_check_branch
          %221 = sbr.rel (%p219) target = $region24
        $region23: #{bert_forward.24} parent=15 // pred_region
          %s222 = sand.u32 %s19, 1
          %s223 = scalar_lea.sflag [#allocation6], %s222
          %s224 = sand.u32 %s80, 1
          %s225 = smul.addr %s224, 4
          %s226 = scalar_lea.vmem [#allocation5], %s225
          %s228 = ssub.s32 64, 64
          %229 = vsyncadd %s223, %s228
          %s230 = sadd.s32 %s27, %s26
          %s231 = sadd.s32 %s230, 2
          %s232 = smul.addr %s231, 64
          %s233 = scalar_lea.hbm %s1, %s232
          %s235 = sshll.u32 %s226, 4
          %s236 = int_to_ptr.vmem [resolvable:$true] %s235
          %238 = dma.hbm_to_vmem [thread:$0]  %s233, 64, %s236, %s223
        $region24: #{bert_forward.24} parent=15 // pred_fallthru
          _
        // Predicated region
        $region25: #{bert_forward.24} parent=15 // pred_check
          %p239 = pneg %p118
        $region26: #{bert_forward.24} parent=15 // pred_check_branch
          %241 = sbr.rel (%p239) target = $region28
        $region27: #{bert_forward.24} parent=15 // pred_region
          %s242 = sand.u32 %s19, 1
          %s243 = scalar_lea.sflag [#allocation6], %s242
          %s244 = sand.u32 %s108, 1
          %s245 = smul.addr %s244, 4
          %s246 = scalar_lea.vmem [#allocation7], %s245
          %s248 = ssub.s32 64, 64
          %249 = vsyncadd %s243, %s248
          %s250 = sadd.s32 %s27, %s26
          %s251 = sadd.s32 %s250, 4
          %s252 = smul.addr %s251, 64
          %s253 = scalar_lea.hbm %s2, %s252
          %s255 = sshll.u32 %s246, 4
          %s256 = int_to_ptr.vmem [resolvable:$true] %s255
          %258 = dma.hbm_to_vmem [thread:$0]  %s253, 64, %s256, %s243
        $region28: #{bert_forward.24} parent=15 // pred_fallthru
          _
        // Predicated region
        $region29: #{bert_forward.24} parent=15 // pred_check
          %p259 = pneg %p144
        $region30: #{bert_forward.24} parent=15 // pred_check_branch
          %261 = sbr.rel (%p259) target = $region32
        $region31: #{bert_forward.24} parent=15 // pred_region
          %p262 = scmp.lt.s32.totalorder %s26, 1
          %s263 = scalar_select %p262, %s26, 1
          %s264 = scalar_lea.vmem %s3, %s263
        $region32: #{bert_forward.24} parent=15 // pred_fallthru
          _
      $region16: #{bert_forward.24} parent=5 // pred_fallthru
        _
      %p265 = scmp.le.s32.totalorder 1, %s19
      %p266 = scmp.lt.s32.totalorder %s19, 3
      %p267 = pnand %p265, %p266
      %p268 = pneg %p267
      // Predicated region
      $region33: #{bert_forward.24} parent=5 // pred_check
        _
      $region34: #{bert_forward.24} parent=5 // pred_check_branch
        %270 = sbr.rel (%p267) target = $region36
      $region35: #{bert_forward.24} parent=5 // pred_region
        %s271 = ssub.s32 %s19, 1
        %s272 = sand.u32 %s55, 1
        %s273 = scalar_lea.sflag [#allocation3], %s272
        %s274 = sand.u32 %s55, 1
        %s275 = smul.addr %s274, 4
        %s276 = scalar_lea.vmem [#allocation2], %s275
        // Predicated region
        $region37: #{bert_forward.24} parent=35 // pred_check
          %p277 = pneg %p68
        $region38: #{bert_forward.24} parent=35 // pred_check_branch
          %279 = sbr.rel (%p277) target = $region40
        $region39: #{bert_forward.24} parent=35 // pred_region
          %280 = dma.done %s273, 64
        $region40: #{bert_forward.24} parent=35 // pred_fallthru
          _
        %s281 = sand.u32 %s24, 1
        %s282 = scalar_lea.sflag [#allocation6], %s281
        %s283 = sand.u32 %s83, 1
        %s284 = smul.addr %s283, 4
        %s285 = scalar_lea.vmem [#allocation5], %s284
        // Predicated region
        $region41: #{bert_forward.24} parent=35 // pred_check
          %p286 = pneg %p96
        $region42: #{bert_forward.24} parent=35 // pred_check_branch
          %288 = sbr.rel (%p286) target = $region44
        $region43: #{bert_forward.24} parent=35 // pred_region
          %289 = dma.done %s282, 64
        $region44: #{bert_forward.24} parent=35 // pred_fallthru
          _
        %s290 = sand.u32 %s24, 1
        %s291 = scalar_lea.sflag [#allocation6], %s290
        %s292 = sand.u32 %s111, 1
        %s293 = smul.addr %s292, 4
        %s294 = scalar_lea.vmem [#allocation7], %s293
        // Predicated region
        $region45: #{bert_forward.24} parent=35 // pred_check
          %p295 = pneg %p124
        $region46: #{bert_forward.24} parent=35 // pred_check_branch
          %297 = sbr.rel (%p295) target = $region48
        $region47: #{bert_forward.24} parent=35 // pred_region
          %298 = dma.done %s291, 64
        $region48: #{bert_forward.24} parent=35 // pred_fallthru
          _
        %s299 = sand.u32 %s55, 1
        %s300 = scalar_lea.sflag [#allocation3], %s299
        %s301 = sand.u32 %s55, 1
        %s302 = smul.addr %s301, 4
        %s303 = scalar_lea.vmem [#allocation2], %s302
        %p304 = pneg %p68
        %p305 = pneg %p65
        %s306 = sand.u32 %s24, 1
        %s307 = scalar_lea.sflag [#allocation6], %s306
        %s308 = sand.u32 %s83, 1
        %s309 = smul.addr %s308, 4
        %s310 = scalar_lea.vmem [#allocation5], %s309
        %p311 = pneg %p96
        %p312 = pneg %p93
        %s313 = sand.u32 %s24, 1
        %s314 = scalar_lea.sflag [#allocation6], %s313
        %s315 = sand.u32 %s111, 1
        %s316 = smul.addr %s315, 4
        %s317 = scalar_lea.vmem [#allocation7], %s316
        %p318 = pneg %p124
        %p319 = pneg %p121
        %p320 = scmp.lt.s32.totalorder %s29, 1
        %s321 = scalar_select %p320, %s29, 1
        %s322 = scalar_lea.vmem %s3, %s321
        %p323 = pneg %p150
        %p324 = pneg %p147
        %p325 = pneg %p180
        %p326 = pneg %p177
        %s327 = sand.u32 %s167, 1
        %s328 = scalar_lea.sflag [#allocation4], %s327
        %s329 = sand.u32 %s167, 1
        %s330 = smul.addr %s329, 4
        %s331 = scalar_lea.vmem [#allocation8], %s330
        %p332 = scmp.lt.s32.totalorder %s29, 1
        %s333 = scalar_select %p332, %s29, 1
        %s334 = scalar_lea.vmem %s3, %s333
        %v336 = vld [vmem:[%s334] sm:$0x1]
        %v337 = vld [vmem:[%s276] sm:$0xf]
        %v338 = vld [vmem:[%s285] sm:$0xf]
        %v339 = vld [vmem:[%s294] sm:$0xf]
        %v341 = vlaneseq
        %v342 = vshrl.u32 %v341, 7
        %v343 = vsub.s32 0, %v342
        %v344 = vrot.slane %v336, %v343
        %vm346 = vcmask 64512
        %v348 = vsel %vm346, %v337, 0
        %v351 = vsel %vm346, %v338, 0
        %353 = vmatprep.subr.bf16.mxu0 0
        %354 = vmatpush1.bf16.xpose.msra.mxu0 %v351
        %355 = vmatprep.subr.bf16.mxu0 0
        %356 = vmatpush1.bf16.xpose.msra.mxu0 0
        %357 = vmatprep.subr.bf16.mxu0 0
        %358 = vmatpush1.bf16.xpose.msra.mxu0 0
        %359 = vmatprep.subr.bf16.mxu0 0
        %360 = vmatpush1.bf16.xpose.msra.mxu0 0
        %361 = vmatprep.subr.bf16.mxu0 0
        %362 = vmatpush1.bf16.xpose.msra.mxu0 0
        %363 = vmatprep.subr.bf16.mxu0 0
        %364 = vmatpush1.bf16.xpose.msra.mxu0 0
        %365 = vmatprep.subr.bf16.mxu0 0
        %366 = vmatpush1.bf16.xpose.msra.mxu0 0
        %367 = vmatprep.subr.bf16.mxu0 0
        %368 = vmatpush1.bf16.xpose.msra.mxu0 0
        %369 = vmatprep.subr.bf16.mxu0 0
        %370 = vmatpush1.bf16.xpose.msra.mxu0 0
        %371 = vmatprep.subr.bf16.mxu0 0
        %372 = vmatpush1.bf16.xpose.msra.mxu0 0
        %373 = vmatprep.subr.bf16.mxu0 0
        %374 = vmatpush1.bf16.xpose.msra.mxu0 0
        %375 = vmatprep.subr.bf16.mxu0 0
        %376 = vmatpush1.bf16.xpose.msra.mxu0 0
        %377 = vmatprep.subr.bf16.mxu0 0
        %378 = vmatpush1.bf16.xpose.msra.mxu0 0
        %379 = vmatprep.subr.bf16.mxu0 0
        %380 = vmatpush1.bf16.xpose.msra.mxu0 0
        %381 = vmatprep.subr.bf16.mxu0 0
        %382 = vmatpush1.bf16.xpose.msra.mxu0 0
        %383 = vmatprep.subr.bf16.mxu0 0
        %384 = vmatpush1.bf16.xpose.msra.mxu0 0
        %385 = vmatprep.mubr.bf16.mxu0 0
        %386 = vmatmul.mubr.bf16.gmra.mrb[0].mxu0 %v348
        %v387 = vpop.f32.mrb[0].mxu0
        %v388 = vadd.f32 %v344, %v387
        %v389 = vpop.f32.mrb[0].mxu0
        %v390 = vpop.f32.mrb[0].mxu0
        %v391 = vpop.f32.mrb[0].mxu0
        %392 = vdwg.mxu0
        %v393 = vsel %vm346, %v388, -inf
        %394 = vmax.xlane.f32.xlu0 %v393
        %v395 = vpop.xlane.xlu0 %394
        %v396 = vsub.f32 %v388, %v395
        %v397 = vmul.f32 %v396, 1.442695
        %v398 = vpow.pop %v397
        %v399 = vsel %vm346, %v398, 0.0
        %400 = vadd.xlane.f32.xlu0 %v399
        %v401 = vpop.xlane.xlu0 %400
        %v402 = vrcp.pop %v401
        %v403 = vmul.f32 %v398, %v402
        %v404 = vpack.c.bf16 %v403, %v403
        %v406 = vsel %vm346, %v404, 0
        %vm408 = vcmask 1043456
        %v410 = vsel %vm408, %v339, 0
        %412 = vmatprep.subr.bf16.mxu0 0
        %413 = vmatpush1.bf16.msra.mxu0 %v410
        %414 = vmatprep.subr.bf16.mxu0 0
        %415 = vmatpush1.bf16.msra.mxu0 0
        %416 = vmatprep.subr.bf16.mxu0 0
        %417 = vmatpush1.bf16.msra.mxu0 0
        %418 = vmatprep.subr.bf16.mxu0 0
        %419 = vmatpush1.bf16.msra.mxu0 0
        %420 = vmatprep.subr.bf16.mxu0 0
        %421 = vmatpush1.bf16.msra.mxu0 0
        %422 = vmatprep.subr.bf16.mxu0 0
        %423 = vmatpush1.bf16.msra.mxu0 0
        %424 = vmatprep.subr.bf16.mxu0 0
        %425 = vmatpush1.bf16.msra.mxu0 0
        %426 = vmatprep.subr.bf16.mxu0 0
        %427 = vmatpush1.bf16.msra.mxu0 0
        %428 = vmatprep.subr.bf16.mxu0 0
        %429 = vmatpush1.bf16.msra.mxu0 0
        %430 = vmatprep.subr.bf16.mxu0 0
        %431 = vmatpush1.bf16.msra.mxu0 0
        %432 = vmatprep.subr.bf16.mxu0 0
        %433 = vmatpush1.bf16.msra.mxu0 0
        %434 = vmatprep.subr.bf16.mxu0 0
        %435 = vmatpush1.bf16.msra.mxu0 0
        %436 = vmatprep.subr.bf16.mxu0 0
        %437 = vmatpush1.bf16.msra.mxu0 0
        %438 = vmatprep.subr.bf16.mxu0 0
        %439 = vmatpush1.bf16.msra.mxu0 0
        %440 = vmatprep.subr.bf16.mxu0 0
        %441 = vmatpush1.bf16.msra.mxu0 0
        %442 = vmatprep.subr.bf16.mxu0 0
        %443 = vmatpush1.bf16.msra.mxu0 0
        %444 = vmatprep.mubr.bf16.mxu0 0
        %445 = vmatmul.mubr.bf16.gmra.mrb[0].mxu0 %v406
        %v446 = vpop.f32.mrb[0].mxu0
        %v447 = vadd.f32 0.0, %v446
        %v448 = vpop.f32.mrb[0].mxu0
        %v449 = vpop.f32.mrb[0].mxu0
        %v450 = vpop.f32.mrb[0].mxu0
        %451 = vdwg.mxu0
        %v453 = vunpack.c.l.b16 %v337
        %v454 = vpack.c.b16 %v453, %v453
        %455 = vrot.lane.b32.xlu0 %v454, 120
        %v456 = vpop.permute.xlu0 %455
        %v458 = vunpack.c.l.b16 %v338
        %v459 = vpack.c.b16 %v458, %v458
        %460 = vrot.lane.b32.xlu0 %v459, 120
        %v461 = vpop.permute.xlu0 %460
        %v463 = vsel %vm346, %v456, 0
        %v466 = vsel %vm346, %v461, 0
        %468 = vmatprep.subr.bf16.mxu0 0
        %469 = vmatpush1.bf16.xpose.msra.mxu0 %v466
        %470 = vmatprep.subr.bf16.mxu0 0
        %471 = vmatpush1.bf16.xpose.msra.mxu0 0
        %472 = vmatprep.subr.bf16.mxu0 0
        %473 = vmatpush1.bf16.xpose.msra.mxu0 0
        %474 = vmatprep.subr.bf16.mxu0 0
        %475 = vmatpush1.bf16.xpose.msra.mxu0 0
        %476 = vmatprep.subr.bf16.mxu0 0
        %477 = vmatpush1.bf16.xpose.msra.mxu0 0
        %478 = vmatprep.subr.bf16.mxu0 0
        %479 = vmatpush1.bf16.xpose.msra.mxu0 0
        %480 = vmatprep.subr.bf16.mxu0 0
        %481 = vmatpush1.bf16.xpose.msra.mxu0 0
        %482 = vmatprep.subr.bf16.mxu0 0
        %483 = vmatpush1.bf16.xpose.msra.mxu0 0
        %484 = vmatprep.subr.bf16.mxu0 0
        %485 = vmatpush1.bf16.xpose.msra.mxu0 0
        %486 = vmatprep.subr.bf16.mxu0 0
        %487 = vmatpush1.bf16.xpose.msra.mxu0 0
        %488 = vmatprep.subr.bf16.mxu0 0
        %489 = vmatpush1.bf16.xpose.msra.mxu0 0
        %490 = vmatprep.subr.bf16.mxu0 0
        %491 = vmatpush1.bf16.xpose.msra.mxu0 0
        %492 = vmatprep.subr.bf16.mxu0 0
        %493 = vmatpush1.bf16.xpose.msra.mxu0 0
        %494 = vmatprep.subr.bf16.mxu0 0
        %495 = vmatpush1.bf16.xpose.msra.mxu0 0
        %496 = vmatprep.subr.bf16.mxu0 0
        %497 = vmatpush1.bf16.xpose.msra.mxu0 0
        %498 = vmatprep.subr.bf16.mxu0 0
        %499 = vmatpush1.bf16.xpose.msra.mxu0 0
        %500 = vmatprep.mubr.bf16.mxu0 0
        %501 = vmatmul.mubr.bf16.gmra.mrb[0].mxu0 %v463
        %v502 = vpop.f32.mrb[0].mxu0
        %v503 = vadd.f32 %v344, %v502
        %v504 = vpop.f32.mrb[0].mxu0
        %v505 = vpop.f32.mrb[0].mxu0
        %v506 = vpop.f32.mrb[0].mxu0
        %507 = vdwg.mxu0
        %v508 = vsel %vm346, %v503, -inf
        %509 = vmax.xlane.f32.xlu0 %v508
        %v510 = vpop.xlane.xlu0 %509
        %v511 = vsub.f32 %v503, %v510
        %v512 = vmul.f32 %v511, 1.442695
        %v513 = vpow.pop %v512
        %v514 = vsel %vm346, %v513, 0.0
        %515 = vadd.xlane.f32.xlu0 %v514
        %v516 = vpop.xlane.xlu0 %515
        %v517 = vrcp.pop %v516
        %v518 = vmul.f32 %v513, %v517
        %v519 = vpack.c.bf16 %v518, %v518
        %v521 = vunpack.c.l.b16 %v339
        %v522 = vpack.c.b16 %v521, %v521
        %523 = vrot.lane.b32.xlu0 %v522, 120
        %v524 = vpop.permute.xlu0 %523
        %v526 = vsel %vm346, %v519, 0
        %v529 = vsel %vm408, %v524, 0
        %531 = vmatprep.subr.bf16.mxu0 0
        %532 = vmatpush1.bf16.msra.mxu0 %v529
        %533 = vmatprep.subr.bf16.mxu0 0
        %534 = vmatpush1.bf16.msra.mxu0 0
        %535 = vmatprep.subr.bf16.mxu0 0
        %536 = vmatpush1.bf16.msra.mxu0 0
        %537 = vmatprep.subr.bf16.mxu0 0
        %538 = vmatpush1.bf16.msra.mxu0 0
        %539 = vmatprep.subr.bf16.mxu0 0
        %540 = vmatpush1.bf16.msra.mxu0 0
        %541 = vmatprep.subr.bf16.mxu0 0
        %542 = vmatpush1.bf16.msra.mxu0 0
        %543 = vmatprep.subr.bf16.mxu0 0
        %544 = vmatpush1.bf16.msra.mxu0 0
        %545 = vmatprep.subr.bf16.mxu0 0
        %546 = vmatpush1.bf16.msra.mxu0 0
        %547 = vmatprep.subr.bf16.mxu0 0
        %548 = vmatpush1.bf16.msra.mxu0 0
        %549 = vmatprep.subr.bf16.mxu0 0
        %550 = vmatpush1.bf16.msra.mxu0 0
        %551 = vmatprep.subr.bf16.mxu0 0
        %552 = vmatpush1.bf16.msra.mxu0 0
        %553 = vmatprep.subr.bf16.mxu0 0
        %554 = vmatpush1.bf16.msra.mxu0 0
        %555 = vmatprep.subr.bf16.mxu0 0
        %556 = vmatpush1.bf16.msra.mxu0 0
        %557 = vmatprep.subr.bf16.mxu0 0
        %558 = vmatpush1.bf16.msra.mxu0 0
        %559 = vmatprep.subr.bf16.mxu0 0
        %560 = vmatpush1.bf16.msra.mxu0 0
        %561 = vmatprep.subr.bf16.mxu0 0
        %562 = vmatpush1.bf16.msra.mxu0 0
        %563 = vmatprep.mubr.bf16.mxu0 0
        %564 = vmatmul.mubr.bf16.gmra.mrb[0].mxu0 %v526
        %v565 = vpop.f32.mrb[0].mxu0
        %v566 = vadd.f32 0.0, %v565
        %v567 = vpop.f32.mrb[0].mxu0
        %v568 = vpop.f32.mrb[0].mxu0
        %v569 = vpop.f32.mrb[0].mxu0
        %570 = vdwg.mxu0
        %571 = vrot.lane.b32.xlu0 %v454, 112
        %v572 = vpop.permute.xlu0 %571
        %573 = vrot.lane.b32.xlu0 %v459, 112
        %v574 = vpop.permute.xlu0 %573
        %v576 = vsel %vm346, %v572, 0
        %v579 = vsel %vm346, %v574, 0
        %581 = vmatprep.subr.bf16.mxu0 0
        %582 = vmatpush1.bf16.xpose.msra.mxu0 %v579
        %583 = vmatprep.subr.bf16.mxu0 0
        %584 = vmatpush1.bf16.xpose.msra.mxu0 0
        %585 = vmatprep.subr.bf16.mxu0 0
        %586 = vmatpush1.bf16.xpose.msra.mxu0 0
        %587 = vmatprep.subr.bf16.mxu0 0
        %588 = vmatpush1.bf16.xpose.msra.mxu0 0
        %589 = vmatprep.subr.bf16.mxu0 0
        %590 = vmatpush1.bf16.xpose.msra.mxu0 0
        %591 = vmatprep.subr.bf16.mxu0 0
        %592 = vmatpush1.bf16.xpose.msra.mxu0 0
        %593 = vmatprep.subr.bf16.mxu0 0
        %594 = vmatpush1.bf16.xpose.msra.mxu0 0
        %595 = vmatprep.subr.bf16.mxu0 0
        %596 = vmatpush1.bf16.xpose.msra.mxu0 0
        %597 = vmatprep.subr.bf16.mxu0 0
        %598 = vmatpush1.bf16.xpose.msra.mxu0 0
        %599 = vmatprep.subr.bf16.mxu0 0
        %600 = vmatpush1.bf16.xpose.msra.mxu0 0
        %601 = vmatprep.subr.bf16.mxu0 0
        %602 = vmatpush1.bf16.xpose.msra.mxu0 0
        %603 = vmatprep.subr.bf16.mxu0 0
        %604 = vmatpush1.bf16.xpose.msra.mxu0 0
        %605 = vmatprep.subr.bf16.mxu0 0
        %606 = vmatpush1.bf16.xpose.msra.mxu0 0
        %607 = vmatprep.subr.bf16.mxu0 0
        %608 = vmatpush1.bf16.xpose.msra.mxu0 0
        %609 = vmatprep.subr.bf16.mxu0 0
        %610 = vmatpush1.bf16.xpose.msra.mxu0 0
        %611 = vmatprep.subr.bf16.mxu0 0
        %612 = vmatpush1.bf16.xpose.msra.mxu0 0
        %613 = vmatprep.mubr.bf16.mxu0 0
        %614 = vmatmul.mubr.bf16.gmra.mrb[0].mxu0 %v576
        %v615 = vpop.f32.mrb[0].mxu0
        %v616 = vadd.f32 %v344, %v615
        %v617 = vpop.f32.mrb[0].mxu0
        %v618 = vpop.f32.mrb[0].mxu0
        %v619 = vpop.f32.mrb[0].mxu0
        %620 = vdwg.mxu0
        %v621 = vsel %vm346, %v616, -inf
        %622 = vmax.xlane.f32.xlu0 %v621
        %v623 = vpop.xlane.xlu0 %622
        %v624 = vsub.f32 %v616, %v623
        %v625 = vmul.f32 %v624, 1.442695
        %v626 = vpow.pop %v625
        %v627 = vsel %vm346, %v626, 0.0
        %628 = vadd.xlane.f32.xlu0 %v627
        %v629 = vpop.xlane.xlu0 %628
        %v630 = vrcp.pop %v629
        %v631 = vmul.f32 %v626, %v630
        %v632 = vpack.c.bf16 %v631, %v631
        %633 = vrot.lane.b32.xlu0 %v522, 112
        %v634 = vpop.permute.xlu0 %633
        %v636 = vsel %vm346, %v632, 0
        %v639 = vsel %vm408, %v634, 0
        %641 = vmatprep.subr.bf16.mxu0 0
        %642 = vmatpush1.bf16.msra.mxu0 %v639
        %643 = vmatprep.subr.bf16.mxu0 0
        %644 = vmatpush1.bf16.msra.mxu0 0
        %645 = vmatprep.subr.bf16.mxu0 0
        %646 = vmatpush1.bf16.msra.mxu0 0
        %647 = vmatprep.subr.bf16.mxu0 0
        %648 = vmatpush1.bf16.msra.mxu0 0
        %649 = vmatprep.subr.bf16.mxu0 0
        %650 = vmatpush1.bf16.msra.mxu0 0
        %651 = vmatprep.subr.bf16.mxu0 0
        %652 = vmatpush1.bf16.msra.mxu0 0
        %653 = vmatprep.subr.bf16.mxu0 0
        %654 = vmatpush1.bf16.msra.mxu0 0
        %655 = vmatprep.subr.bf16.mxu0 0
        %656 = vmatpush1.bf16.msra.mxu0 0
        %657 = vmatprep.subr.bf16.mxu0 0
        %658 = vmatpush1.bf16.msra.mxu0 0
        %659 = vmatprep.subr.bf16.mxu0 0
        %660 = vmatpush1.bf16.msra.mxu0 0
        %661 = vmatprep.subr.bf16.mxu0 0
        %662 = vmatpush1.bf16.msra.mxu0 0
        %663 = vmatprep.subr.bf16.mxu0 0
        %664 = vmatpush1.bf16.msra.mxu0 0
        %665 = vmatprep.subr.bf16.mxu0 0
        %666 = vmatpush1.bf16.msra.mxu0 0
        %667 = vmatprep.subr.bf16.mxu0 0
        %668 = vmatpush1.bf16.msra.mxu0 0
        %669 = vmatprep.subr.bf16.mxu0 0
        %670 = vmatpush1.bf16.msra.mxu0 0
        %671 = vmatprep.subr.bf16.mxu0 0
        %672 = vmatpush1.bf16.msra.mxu0 0
        %673 = vmatprep.mubr.bf16.mxu0 0
        %674 = vmatmul.mubr.bf16.gmra.mrb[0].mxu0 %v636
        %v675 = vpop.f32.mrb[0].mxu0
        %v676 = vadd.f32 0.0, %v675
        %v677 = vpop.f32.mrb[0].mxu0
        %v678 = vpop.f32.mrb[0].mxu0
        %v679 = vpop.f32.mrb[0].mxu0
        %680 = vdwg.mxu0
        %681 = vrot.lane.b32.xlu0 %v454, 104
        %v682 = vpop.permute.xlu0 %681
        %683 = vrot.lane.b32.xlu0 %v459, 104
        %v684 = vpop.permute.xlu0 %683
        %v686 = vsel %vm346, %v682, 0
        %v689 = vsel %vm346, %v684, 0
        %691 = vmatprep.subr.bf16.mxu0 0
        %692 = vmatpush1.bf16.xpose.msra.mxu0 %v689
        %693 = vmatprep.subr.bf16.mxu0 0
        %694 = vmatpush1.bf16.xpose.msra.mxu0 0
        %695 = vmatprep.subr.bf16.mxu0 0
        %696 = vmatpush1.bf16.xpose.msra.mxu0 0
        %697 = vmatprep.subr.bf16.mxu0 0
        %698 = vmatpush1.bf16.xpose.msra.mxu0 0
        %699 = vmatprep.subr.bf16.mxu0 0
        %700 = vmatpush1.bf16.xpose.msra.mxu0 0
        %701 = vmatprep.subr.bf16.mxu0 0
        %702 = vmatpush1.bf16.xpose.msra.mxu0 0
        %703 = vmatprep.subr.bf16.mxu0 0
        %704 = vmatpush1.bf16.xpose.msra.mxu0 0
        %705 = vmatprep.subr.bf16.mxu0 0
        %706 = vmatpush1.bf16.xpose.msra.mxu0 0
        %707 = vmatprep.subr.bf16.mxu0 0
        %708 = vmatpush1.bf16.xpose.msra.mxu0 0
        %709 = vmatprep.subr.bf16.mxu0 0
        %710 = vmatpush1.bf16.xpose.msra.mxu0 0
        %711 = vmatprep.subr.bf16.mxu0 0
        %712 = vmatpush1.bf16.xpose.msra.mxu0 0
        %713 = vmatprep.subr.bf16.mxu0 0
        %714 = vmatpush1.bf16.xpose.msra.mxu0 0
        %715 = vmatprep.subr.bf16.mxu0 0
        %716 = vmatpush1.bf16.xpose.msra.mxu0 0
        %717 = vmatprep.subr.bf16.mxu0 0
        %718 = vmatpush1.bf16.xpose.msra.mxu0 0
        %719 = vmatprep.subr.bf16.mxu0 0
        %720 = vmatpush1.bf16.xpose.msra.mxu0 0
        %721 = vmatprep.subr.bf16.mxu0 0
        %722 = vmatpush1.bf16.xpose.msra.mxu0 0
        %723 = vmatprep.mubr.bf16.mxu0 0
        %724 = vmatmul.mubr.bf16.gmra.mrb[0].mxu0 %v686
        %v725 = vpop.f32.mrb[0].mxu0
        %v726 = vadd.f32 %v344, %v725
        %v727 = vpop.f32.mrb[0].mxu0
        %v728 = vpop.f32.mrb[0].mxu0
        %v729 = vpop.f32.mrb[0].mxu0
        %730 = vdwg.mxu0
        %v731 = vsel %vm346, %v726, -inf
        %732 = vmax.xlane.f32.xlu0 %v731
        %v733 = vpop.xlane.xlu0 %732
        %v734 = vsub.f32 %v726, %v733
        %v735 = vmul.f32 %v734, 1.442695
        %v736 = vpow.pop %v735
        %v737 = vsel %vm346, %v736, 0.0
        %738 = vadd.xlane.f32.xlu0 %v737
        %v739 = vpop.xlane.xlu0 %738
        %v740 = vrcp.pop %v739
        %v741 = vmul.f32 %v736, %v740
        %v742 = vpack.c.bf16 %v741, %v741
        %743 = vrot.lane.b32.xlu0 %v522, 104
        %v744 = vpop.permute.xlu0 %743
        %v746 = vsel %vm346, %v742, 0
        %v749 = vsel %vm408, %v744, 0
        %751 = vmatprep.subr.bf16.mxu0 0
        %752 = vmatpush1.bf16.msra.mxu0 %v749
        %753 = vmatprep.subr.bf16.mxu0 0
        %754 = vmatpush1.bf16.msra.mxu0 0
        %755 = vmatprep.subr.bf16.mxu0 0
        %756 = vmatpush1.bf16.msra.mxu0 0
        %757 = vmatprep.subr.bf16.mxu0 0
        %758 = vmatpush1.bf16.msra.mxu0 0
        %759 = vmatprep.subr.bf16.mxu0 0
        %760 = vmatpush1.bf16.msra.mxu0 0
        %761 = vmatprep.subr.bf16.mxu0 0
        %762 = vmatpush1.bf16.msra.mxu0 0
        %763 = vmatprep.subr.bf16.mxu0 0
        %764 = vmatpush1.bf16.msra.mxu0 0
        %765 = vmatprep.subr.bf16.mxu0 0
        %766 = vmatpush1.bf16.msra.mxu0 0
        %767 = vmatprep.subr.bf16.mxu0 0
        %768 = vmatpush1.bf16.msra.mxu0 0
        %769 = vmatprep.subr.bf16.mxu0 0
        %770 = vmatpush1.bf16.msra.mxu0 0
        %771 = vmatprep.subr.bf16.mxu0 0
        %772 = vmatpush1.bf16.msra.mxu0 0
        %773 = vmatprep.subr.bf16.mxu0 0
        %774 = vmatpush1.bf16.msra.mxu0 0
        %775 = vmatprep.subr.bf16.mxu0 0
        %776 = vmatpush1.bf16.msra.mxu0 0
        %777 = vmatprep.subr.bf16.mxu0 0
        %778 = vmatpush1.bf16.msra.mxu0 0
        %779 = vmatprep.subr.bf16.mxu0 0
        %780 = vmatpush1.bf16.msra.mxu0 0
        %781 = vmatprep.subr.bf16.mxu0 0
        %782 = vmatpush1.bf16.msra.mxu0 0
        %783 = vmatprep.mubr.bf16.mxu0 0
        %784 = vmatmul.mubr.bf16.gmra.mrb[0].mxu0 %v746
        %v785 = vpop.f32.mrb[0].mxu0
        %v786 = vadd.f32 0.0, %v785
        %v787 = vpop.f32.mrb[0].mxu0
        %v788 = vpop.f32.mrb[0].mxu0
        %v789 = vpop.f32.mrb[0].mxu0
        %790 = vdwg.mxu0
        %792 = vrot.lane.b32.xlu0 %v566, 8
        %v793 = vpop.permute.xlu0 %792
        %796 = vrot.lane.b32.xlu0 %v676, 16
        %v797 = vpop.permute.xlu0 %796
        %800 = vrot.lane.b32.xlu0 %v786, 24
        %v801 = vpop.permute.xlu0 %800
        %v803 = vsel %vm346, %v447, %v793
        %vm804 = vcmask 130048
        %v805 = vsel %vm804, %v803, %v797
        %vm806 = vcmask 195584
        %v807 = vsel %vm806, %v805, %v801
        %v808 = vpack.c.bf16 %v807, %v807
        %vm809 = vcmask 257024
        %810 = vst.msk [vmem:[%s331] sm:$0xf] %vm809, %v808
        %s811 = sand.u32 %s167, 1
        %s812 = scalar_lea.sflag [#allocation4], %s811
        %s813 = sand.u32 %s167, 1
        %s814 = smul.addr %s813, 4
        %s815 = scalar_lea.vmem [#allocation8], %s814
        // Predicated region
        $region49: #{bert_forward.24} parent=35 // pred_check
          %p816 = pneg %p177
        $region50: #{bert_forward.24} parent=35 // pred_check_branch
          %818 = sbr.rel (%p816) target = $region52
        $region51: #{bert_forward.24} parent=35 // pred_region
          %s820 = ssub.s32 64, 64
          %821 = vsyncadd %s812, %s820
          %s822 = sadd.s32 %s30, %s31
          %s823 = sadd.s32 %s822, %s29
          %s824 = smul.addr %s823, 64
          %s825 = scalar_lea.hbm %s4, %s824
          %s827 = sshll.u32 %s815, 4
          %s828 = int_to_ptr.vmem [resolvable:$true] %s827
          %830 = dma.vmem_to_hbm [thread:$0]  %s828, 64, %s825, %s812
        $region52: #{bert_forward.24} parent=35 // pred_fallthru
          _
      $region36: #{bert_forward.24} parent=5 // pred_fallthru
        _
      %p831 = scmp.le.s32.totalorder 2, %s19
      // Predicated region
      $region53: #{bert_forward.24} parent=5 // pred_check
        %p832 = pneg %p831
      $region54: #{bert_forward.24} parent=5 // pred_check_branch
        %834 = sbr.rel (%p832) target = $region56
      $region55: #{bert_forward.24} parent=5 // pred_region
        %s835 = ssub.s32 %s19, 2
        // Predicated region
        $region57: #{bert_forward.24} parent=55 // pred_check
          %p836 = pneg %p183
        $region58: #{bert_forward.24} parent=55 // pred_check_branch
          %838 = sbr.rel (%p836) target = $region60
        $region59: #{bert_forward.24} parent=55 // pred_region
          %s839 = sand.u32 %s168, 1
          %s840 = scalar_lea.sflag [#allocation4], %s839
          %s841 = sand.u32 %s168, 1
          %s842 = smul.addr %s841, 4
          %s843 = scalar_lea.vmem [#allocation8], %s842
          %844 = dma.done %s840, 64
        $region60: #{bert_forward.24} parent=55 // pred_fallthru
          _
      $region56: #{bert_forward.24} parent=5 // pred_fallthru
        _
    $region6: #{bert_forward.24} parent=1 // loop_footer
      %s23 = sadd.s32 1, %s19
    $region7: #{bert_forward.24} parent=1 // loop_footer_branch
      %18 = sbr.rel target = $region3
    $region8: #{bert_forward.24} parent=1 // loop_exit
      _
    %845 = vsyncpa [#allocation3], 1
    %s846 = scalar_lea.sflag [#allocation3], 1
    %847 = vsyncpa %s846, 1
    %848 = vsyncpa [#allocation6], 1
    %s849 = scalar_lea.sflag [#allocation6], 1
    %850 = vsyncpa %s849, 1
    %851 = vsyncpa [#allocation4], 1
    %s852 = scalar_lea.sflag [#allocation4], 1
    %853 = vsyncpa %s852, 1

// kernel: bert_forward.43
$region0: #{bert_forward.43}
  #allocation0 [shape = 'u32[]', space=smem, size = 0x4, offset = 0x4, fixed_abs, tag = 'smem constant byte address 0x4 - core index']
  #allocation1 [shape = 'u32[144,128]{1,0:T(1,128)}', space=vmem, size = 0x12000, scoped, tag = 'internal scratch']
  %s0 = inlined_call_operand.hbm [shape: bf16[16,32], index: 0, kind: input, shape index: {}]
  %s1 = inlined_call_operand.hbm [shape: bf16[16,32], index: 1, kind: input, shape index: {}]
  %s2 = inlined_call_operand.hbm [shape: bf16[16,32], index: 2, kind: input, shape index: {}]
  %s3 = inlined_call_operand.hbm [shape: f32[16,32], index: 3, kind: output, shape index: {}]
  %s4 = sld [smem:[#allocation0]]
  $region34: #{bert_forward.43} parent=0
    _
  %s6 = ssub.s32 1, %s4
  %s7 = scalar_select 0, %s6, %s4
  $region1: #{bert_forward.43} parent=0
    #allocation2 [shape = 'u8[4096]{0}', space=vmem, size = 0x1000, scoped, tag = 'input window, operand 0, single buffered']
    #allocation3 [shape = 's32[1]{0}', space=sflag, size = 0x4, scoped, tag = 'scoped memory for bert_forward.43']
    #allocation4 [shape = 's32[1]{0}', space=sflag, size = 0x4, scoped, tag = 'scoped memory for bert_forward.43']
    #allocation5 [shape = 'u8[4096]{0}', space=vmem, size = 0x1000, scoped, tag = 'input window, operand 1, single buffered']
    #allocation6 [shape = 's32[1]{0}', space=sflag, size = 0x4, scoped, tag = 'scoped memory for bert_forward.43']
    #allocation7 [shape = 'u8[4096]{0}', space=vmem, size = 0x1000, scoped, tag = 'input window, operand 2, single buffered']
    #allocation8 [shape = 'u8[8192]{0}', space=vmem, size = 0x2000, scoped, tag = 'output window, operand 0, single buffered']
    %8 = vsyncpa [#allocation3], 0
    %9 = vsyncpa [#allocation6], 0
    %10 = vsyncpa [#allocation4], 0
    // Predicated region
    $region2: #{bert_forward.43} parent=1 // pred_check
      _
    $region3: #{bert_forward.43} parent=1 // pred_check_branch
      %12 = sbr.rel (0) target = $region5
    $region4: #{bert_forward.43} parent=1 // pred_region
      %s14 = ssub.s32 128, 128
      %15 = vsyncadd [#allocation3], %s14
      %s16 = sshll.u32 [#allocation2], 4
      %s17 = int_to_ptr.vmem [resolvable:$true] %s16
      %22 = dma.hbm_to_vmem [thread:$0]  %s0, 128, %s17, [#allocation3], 64, 64, 4
    $region5: #{bert_forward.43} parent=1 // pred_fallthru
      _
    // Predicated region
    $region6: #{bert_forward.43} parent=1 // pred_check
      _
    $region7: #{bert_forward.43} parent=1 // pred_check_branch
      %24 = sbr.rel (0) target = $region9
    $region8: #{bert_forward.43} parent=1 // pred_region
      %s26 = ssub.s32 128, 128
      %27 = vsyncadd [#allocation6], %s26
      %s28 = sshll.u32 [#allocation5], 4
      %s29 = int_to_ptr.vmem [resolvable:$true] %s28
      %34 = dma.hbm_to_vmem [thread:$0]  %s1, 128, %s29, [#allocation6], 64, 64, 4
    $region9: #{bert_forward.43} parent=1 // pred_fallthru
      _
    // Predicated region
    $region10: #{bert_forward.43} parent=1 // pred_check
      _
    $region11: #{bert_forward.43} parent=1 // pred_check_branch
      %36 = sbr.rel (0) target = $region13
    $region12: #{bert_forward.43} parent=1 // pred_region
      %s38 = ssub.s32 128, 128
      %39 = vsyncadd [#allocation6], %s38
      %s40 = sshll.u32 [#allocation7], 4
      %s41 = int_to_ptr.vmem [resolvable:$true] %s40
      %46 = dma.hbm_to_vmem [thread:$0]  %s2, 128, %s41, [#allocation6], 64, 64, 4
    $region13: #{bert_forward.43} parent=1 // pred_fallthru
      _
    // Predicated region
    $region14: #{bert_forward.43} parent=1 // pred_check
      _
    $region15: #{bert_forward.43} parent=1 // pred_check_branch
      %48 = sbr.rel (0) target = $region17
    $region16: #{bert_forward.43} parent=1 // pred_region
      %49 = dma.done [#allocation3], 128
    $region17: #{bert_forward.43} parent=1 // pred_fallthru
      _
    // Predicated region
    $region18: #{bert_forward.43} parent=1 // pred_check
      _
    $region19: #{bert_forward.43} parent=1 // pred_check_branch
      %51 = sbr.rel (0) target = $region21
    $region20: #{bert_forward.43} parent=1 // pred_region
      %52 = dma.done [#allocation6], 128
    $region21: #{bert_forward.43} parent=1 // pred_fallthru
      _
    // Predicated region
    $region22: #{bert_forward.43} parent=1 // pred_check
      _
    $region23: #{bert_forward.43} parent=1 // pred_check_branch
      %54 = sbr.rel (0) target = $region25
    $region24: #{bert_forward.43} parent=1 // pred_region
      %55 = dma.done [#allocation6], 128
    $region25: #{bert_forward.43} parent=1 // pred_fallthru
      _
    %v56 = vld [vmem:[#allocation2] sm:$0xf]
    %v57 = vld [vmem:[#allocation2 + $0x4] sm:$0xf]
    %v58 = vunpack.c.l.bf16 %v56
    %v59 = vunpack.c.l.bf16 %v57
    %v60 = vld [vmem:[#allocation5] sm:$0xf]
    %v61 = vld [vmem:[#allocation5 + $0x4] sm:$0xf]
    %v62 = vunpack.c.l.bf16 %v60
    %v63 = vunpack.c.l.bf16 %v61
    %v64 = vadd.f32 %v58, %v62
    %v65 = vadd.f32 %v59, %v63
    %v66 = vld [vmem:[#allocation7] sm:$0xf]
    %v67 = vld [vmem:[#allocation7 + $0x4] sm:$0xf]
    %v68 = vunpack.c.l.bf16 %v66
    %v69 = vunpack.c.l.bf16 %v67
    %v70 = vadd.f32 %v64, %v68
    %v71 = vadd.f32 %v65, %v69
    %v72 = vmul.f32 %v70, 0.33333334
    %v73 = vmul.f32 %v71, 0.33333334
    %vm74 = vcmask 261120
    %75 = vst.msk [vmem:[#allocation8] sm:$0xff] %vm74, %v72
    %76 = vst.msk [vmem:[#allocation8 + $0x8] sm:$0xff] %vm74, %v73
    // Predicated region
    $region26: #{bert_forward.43} parent=1 // pred_check
      _
    $region27: #{bert_forward.43} parent=1 // pred_check_branch
      %78 = sbr.rel (0) target = $region29
    $region28: #{bert_forward.43} parent=1 // pred_region
      %s80 = ssub.s32 256, 256
      %81 = vsyncadd [#allocation4], %s80
      %s82 = sshll.u32 [#allocation8], 4
      %s83 = int_to_ptr.vmem [resolvable:$true] %s82
      %88 = dma.vmem_to_hbm [thread:$0]  %s83, 256, %s3, [#allocation4], 128, 128, 8
    $region29: #{bert_forward.43} parent=1 // pred_fallthru
      _
    // Predicated region
    $region30: #{bert_forward.43} parent=1 // pred_check
      _
    $region31: #{bert_forward.43} parent=1 // pred_check_branch
      %90 = sbr.rel (0) target = $region33
    $region32: #{bert_forward.43} parent=1 // pred_region
      %91 = dma.done [#allocation4], 256
    $region33: #{bert_forward.43} parent=1 // pred_fallthru
      _
    %92 = vsyncpa [#allocation3], 1
    %93 = vsyncpa [#allocation6], 1
    %94 = vsyncpa [#allocation4], 1

// kernel: bert_forward.26
$region0: #{bert_forward.26}
  #allocation0 [shape = 'u32[]', space=smem, size = 0x4, offset = 0x4, fixed_abs, tag = 'smem constant byte address 0x4 - core index']
  #allocation1 [shape = 'u32[144,128]{1,0:T(1,128)}', space=vmem, size = 0x12000, scoped, tag = 'internal scratch']
  #allocation2 [shape = 'f32[16,64]{1,0:T(8,128)}', space=vmem, size = 0x2000, scoped, tag = 'scratch operand']
  %s0 = inlined_call_operand.hbm [shape: bf16[16,32], index: 0, kind: input, shape index: {}]
  %s1 = inlined_call_operand.hbm [shape: bf16[32,64], index: 1, kind: input, shape index: {}]
  %s2 = inlined_call_operand.hbm [shape: f32[1,64], index: 2, kind: input, shape index: {}]
  %s3 = inlined_call_operand.hbm [shape: bf16[16,64], index: 3, kind: output, shape index: {}]
  %s4 = sld [smem:[#allocation0]]
  $region42: #{bert_forward.26} parent=0
    _
  %s6 = ssub.s32 1, %s4
  %s7 = scalar_select 0, %s6, %s4
  $region1: #{bert_forward.26} parent=0
    #allocation3 [shape = 'u8[4096]{0}', space=vmem, size = 0x1000, scoped, tag = 'input window, operand 0, single buffered']
    #allocation4 [shape = 's32[1]{0}', space=sflag, size = 0x4, scoped, tag = 'scoped memory for bert_forward.26']
    #allocation5 [shape = 's32[1]{0}', space=sflag, size = 0x4, scoped, tag = 'scoped memory for bert_forward.26']
    #allocation6 [shape = 'u8[8192]{0}', space=vmem, size = 0x2000, scoped, tag = 'input window, operand 1, single buffered']
    #allocation7 [shape = 's32[1]{0}', space=sflag, size = 0x4, scoped, tag = 'scoped memory for bert_forward.26']
    #allocation8 [shape = 'u8[512]{0}', space=vmem, size = 0x400, scoped, tag = 'input window, operand 2, single buffered']
    #allocation9 [shape = 'u8[4096]{0}', space=vmem, size = 0x1000, scoped, tag = 'output window, operand 0, single buffered']
    %8 = vsyncpa [#allocation4], 0
    %9 = vsyncpa [#allocation7], 0
    %10 = vsyncpa [#allocation5], 0
    // Predicated region
    $region2: #{bert_forward.26} parent=1 // pred_check
      _
    $region3: #{bert_forward.26} parent=1 // pred_check_branch
      %12 = sbr.rel (0) target = $region5
    $region4: #{bert_forward.26} parent=1 // pred_region
      %s14 = ssub.s32 128, 128
      %15 = vsyncadd [#allocation4], %s14
      %s16 = sshll.u32 [#allocation3], 4
      %s17 = int_to_ptr.vmem [resolvable:$true] %s16
      %22 = dma.hbm_to_vmem [thread:$0]  %s0, 128, %s17, [#allocation4], 64, 64, 4
    $region5: #{bert_forward.26} parent=1 // pred_fallthru
      _
    // Predicated region
    $region6: #{bert_forward.26} parent=1 // pred_check
      _
    $region7: #{bert_forward.26} parent=1 // pred_check_branch
      %24 = sbr.rel (0) target = $region9
    $region8: #{bert_forward.26} parent=1 // pred_region
      %s26 = ssub.s32 256, 256
      %27 = vsyncadd [#allocation7], %s26
      %s28 = sshll.u32 [#allocation6], 4
      %s29 = int_to_ptr.vmem [resolvable:$true] %s28
      %34 = dma.hbm_to_vmem [thread:$0]  %s1, 256, %s29, [#allocation7], 64, 64, 4
    $region9: #{bert_forward.26} parent=1 // pred_fallthru
      _
    // Predicated region
    $region10: #{bert_forward.26} parent=1 // pred_check
      _
    $region11: #{bert_forward.26} parent=1 // pred_check_branch
      %36 = sbr.rel (0) target = $region13
    $region12: #{bert_forward.26} parent=1 // pred_region
      %s38 = ssub.s32 16, 16
      %39 = vsyncadd [#allocation7], %s38
      %s41 = sshll.u32 [#allocation8], 4
      %s42 = int_to_ptr.vmem [resolvable:$true] %s41
      %44 = dma.hbm_to_vmem [thread:$0]  %s2, 16, %s42, [#allocation7]
    $region13: #{bert_forward.26} parent=1 // pred_fallthru
      _
    // Predicated region
    $region14: #{bert_forward.26} parent=1 // pred_check
      _
    $region15: #{bert_forward.26} parent=1 // pred_check_branch
      %46 = sbr.rel (0) target = $region17
    $region16: #{bert_forward.26} parent=1 // pred_region
      %47 = dma.done [#allocation4], 128
    $region17: #{bert_forward.26} parent=1 // pred_fallthru
      _
    // Predicated region
    $region18: #{bert_forward.26} parent=1 // pred_check
      _
    $region19: #{bert_forward.26} parent=1 // pred_check_branch
      %49 = sbr.rel (0) target = $region21
    $region20: #{bert_forward.26} parent=1 // pred_region
      %50 = dma.done [#allocation7], 256
    $region21: #{bert_forward.26} parent=1 // pred_fallthru
      _
    // Predicated region
    $region22: #{bert_forward.26} parent=1 // pred_check
      _
    $region23: #{bert_forward.26} parent=1 // pred_check_branch
      %52 = sbr.rel (0) target = $region25
    $region24: #{bert_forward.26} parent=1 // pred_region
      %53 = dma.done [#allocation7], 16
    $region25: #{bert_forward.26} parent=1 // pred_fallthru
      _
    %p55 = scmp.eq.s32.totalorder 0, 0
    // Predicated region
    $region26: #{bert_forward.26} parent=1 // pred_check
      %p56 = pneg %p55
    $region27: #{bert_forward.26} parent=1 // pred_check_branch
      %58 = sbr.rel (%p56) target = $region29
    $region28: #{bert_forward.26} parent=1 // pred_region
      %vm59 = vcmask 523264
      %60 = vst.msk [vmem:[#allocation2] sm:$0xff] %vm59, 0.0
      %61 = vst.msk [vmem:[#allocation2 + $0x8] sm:$0xff] %vm59, 0.0
    $region29: #{bert_forward.26} parent=1 // pred_fallthru
      _
    %v62 = vld [vmem:[#allocation2] sm:$0xff]
    %v63 = vld [vmem:[#allocation2 + $0x8] sm:$0xff]
    %v64 = vld [vmem:[#allocation3] sm:$0xf]
    %v65 = vld [vmem:[#allocation3 + $0x4] sm:$0xf]
    %v66 = vld [vmem:[#allocation6] sm:$0xf]
    %v67 = vld [vmem:[#allocation6 + $0x4] sm:$0xf]
    %v68 = vld [vmem:[#allocation6 + $0x8] sm:$0xf]
    %v69 = vld [vmem:[#allocation6 + $0xc] sm:$0xf]
    %v72 = vunpack.c.l.b16 %v64
    %v73 = vunpack.c.l.b16 %v65
    %v74 = vpack.c.b16 %v73, %v72
    %v79 = vunpack.c.l.b16 %v66
    %v80 = vunpack.c.l.b16 %v67
    %v81 = vunpack.c.l.b16 %v68
    %v82 = vunpack.c.l.b16 %v69
    %v83 = vpack.c.b16 %v80, %v79
    %v84 = vpack.c.b16 %v82, %v81
    %vm87 = vcmask 261120
    %v89 = vsel %vm87, %v74, 0
    %91 = vmatprep.subr.bf16.mxu0 0
    %92 = vmatpush1.bf16.msra.mxu0 %v83
    %93 = vmatprep.subr.bf16.mxu0 0
    %94 = vmatpush1.bf16.msra.mxu0 %v84
    %95 = vmatprep.subr.bf16.mxu0 0
    %96 = vmatpush1.bf16.msra.mxu0 0
    %97 = vmatprep.subr.bf16.mxu0 0
    %98 = vmatpush1.bf16.msra.mxu0 0
    %99 = vmatprep.subr.bf16.mxu0 0
    %100 = vmatpush1.bf16.msra.mxu0 0
    %101 = vmatprep.subr.bf16.mxu0 0
    %102 = vmatpush1.bf16.msra.mxu0 0
    %103 = vmatprep.subr.bf16.mxu0 0
    %104 = vmatpush1.bf16.msra.mxu0 0
    %105 = vmatprep.subr.bf16.mxu0 0
    %106 = vmatpush1.bf16.msra.mxu0 0
    %107 = vmatprep.subr.bf16.mxu0 0
    %108 = vmatpush1.bf16.msra.mxu0 0
    %109 = vmatprep.subr.bf16.mxu0 0
    %110 = vmatpush1.bf16.msra.mxu0 0
    %111 = vmatprep.subr.bf16.mxu0 0
    %112 = vmatpush1.bf16.msra.mxu0 0
    %113 = vmatprep.subr.bf16.mxu0 0
    %114 = vmatpush1.bf16.msra.mxu0 0
    %115 = vmatprep.subr.bf16.mxu0 0
    %116 = vmatpush1.bf16.msra.mxu0 0
    %117 = vmatprep.subr.bf16.mxu0 0
    %118 = vmatpush1.bf16.msra.mxu0 0
    %119 = vmatprep.subr.bf16.mxu0 0
    %120 = vmatpush1.bf16.msra.mxu0 0
    %121 = vmatprep.subr.bf16.mxu0 0
    %122 = vmatpush1.bf16.msra.mxu0 0
    %123 = vmatprep.mubr.bf16.mxu0 0
    %124 = vmatmul.mubr.bf16.gmra.mrb[0].mxu0 %v89
    %v125 = vpop.f32.mrb[0].mxu0
    %v126 = vadd.f32 0.0, %v125
    %v127 = vpop.f32.mrb[0].mxu0
    %v128 = vpop.f32.mrb[0].mxu0
    %v129 = vadd.f32 0.0, %v128
    %v130 = vpop.f32.mrb[0].mxu0
    %131 = vdwg.mxu0
    %v132 = vadd.f32 %v62, %v126
    %v133 = vadd.f32 %v63, %v129
    %vm134 = vcmask 523264
    %135 = vst.msk [vmem:[#allocation2] sm:$0xff] %vm134, %v132
    %136 = vst.msk [vmem:[#allocation2 + $0x8] sm:$0xff] %vm134, %v133
    // Predicated region
    $region30: #{bert_forward.26} parent=1 // pred_check
      %p137 = pneg %p55
    $region31: #{bert_forward.26} parent=1 // pred_check_branch
      %139 = sbr.rel (%p137) target = $region33
    $region32: #{bert_forward.26} parent=1 // pred_region
      %v140 = vld [vmem:[#allocation2] sm:$0xff]
      %v141 = vld [vmem:[#allocation2 + $0x8] sm:$0xff]
      %v142 = vld [vmem:[#allocation8] sm:$0x1]
      %v144 = vlaneseq
      %v145 = vshrl.u32 %v144, 7
      %v146 = vsub.s32 0, %v145
      %v147 = vrot.slane %v142, %v146
      %v149 = vadd.f32 %v140, %v147
      %v150 = vadd.f32 %v141, %v147
      %v151 = vmul.f32 %v149, 0.5
      %v152 = vmul.f32 %v150, 0.5
      %v153 = vmul.f32 %v149, 0.044715
      %v154 = vmul.f32 %v150, 0.044715
      %v155 = vmul.f32 %v153, %v149
      %v156 = vmul.f32 %v154, %v150
      %v157 = vmul.f32 %v155, %v149
      %v158 = vmul.f32 %v156, %v150
      %v159 = vadd.f32 %v149, %v157
      %v160 = vadd.f32 %v150, %v158
      %v161 = vmul.f32 %v159, 0.7978846
      %v162 = vmul.f32 %v160, 0.7978846
      %v163 = vtanh.pop %v161
      %v164 = vtanh.pop %v162
      %v165 = vadd.f32 %v163, 1.0
      %v166 = vadd.f32 %v164, 1.0
      %v167 = vmul.f32 %v151, %v165
      %v168 = vmul.f32 %v152, %v166
      %v169 = vpack.c.bf16 %v168, %v167
      %v171 = vunpack.c.l.b16 %v169
      %v172 = vunpack.c.h.b16 %v169
      %v173 = vpack.c.b16 %v171, %v171
      %v174 = vpack.c.b16 %v172, %v172
      %vm177 = vcmask 519168
      %178 = vst.msk [vmem:[#allocation9] sm:$0xf] %vm177, %v173
      %179 = vst.msk [vmem:[#allocation9 + $0x4] sm:$0xf] %vm177, %v174
    $region33: #{bert_forward.26} parent=1 // pred_fallthru
      _
    // Predicated region
    $region34: #{bert_forward.26} parent=1 // pred_check
      _
    $region35: #{bert_forward.26} parent=1 // pred_check_branch
      %181 = sbr.rel (0) target = $region37
    $region36: #{bert_forward.26} parent=1 // pred_region
      %s183 = ssub.s32 128, 128
      %184 = vsyncadd [#allocation5], %s183
      %s185 = sshll.u32 [#allocation9], 4
      %s186 = int_to_ptr.vmem [resolvable:$true] %s185
      %191 = dma.vmem_to_hbm [thread:$0]  %s186, 128, %s3, [#allocation5], 64, 64, 4
    $region37: #{bert_forward.26} parent=1 // pred_fallthru
      _
    // Predicated region
    $region38: #{bert_forward.26} parent=1 // pred_check
      _
    $region39: #{bert_forward.26} parent=1 // pred_check_branch
      %193 = sbr.rel (0) target = $region41
    $region40: #{bert_forward.26} parent=1 // pred_region
      %194 = dma.done [#allocation5], 128
    $region41: #{bert_forward.26} parent=1 // pred_fallthru
      _
    %195 = vsyncpa [#allocation4], 1
    %196 = vsyncpa [#allocation7], 1
    %197 = vsyncpa [#allocation5], 1

// kernel: bert_forward.27
$region0: #{bert_forward.27}
  #allocation0 [shape = 'u32[]', space=smem, size = 0x4, offset = 0x4, fixed_abs, tag = 'smem constant byte address 0x4 - core index']
  #allocation1 [shape = 'u32[144,128]{1,0:T(1,128)}', space=vmem, size = 0x12000, scoped, tag = 'internal scratch']
  #allocation2 [shape = 'f32[16,32]{1,0:T(8,128)}', space=vmem, size = 0x2000, scoped, tag = 'scratch operand']
  %s0 = inlined_call_operand.hbm [shape: bf16[16,64], index: 0, kind: input, shape index: {}]
  %s1 = inlined_call_operand.hbm [shape: bf16[64,32], index: 1, kind: input, shape index: {}]
  %s2 = inlined_call_operand.hbm [shape: f32[1,32], index: 2, kind: input, shape index: {}]
  %s3 = inlined_call_operand.hbm [shape: bf16[16,32], index: 3, kind: input, shape index: {}]
  %s4 = inlined_call_operand.hbm [shape: f32[1,32], index: 4, kind: input, shape index: {}]
  %s5 = inlined_call_operand.hbm [shape: f32[1,32], index: 5, kind: input, shape index: {}]
  %s6 = inlined_call_operand.hbm [shape: bf16[16,32], index: 6, kind: output, shape index: {}]
  %s7 = sld [smem:[#allocation0]]
  $region66: #{bert_forward.27} parent=0
    _
  %s9 = ssub.s32 1, %s7
  %s10 = scalar_select 0, %s9, %s7
  $region1: #{bert_forward.27} parent=0
    #allocation3 [shape = 'u8[4096]{0}', space=vmem, size = 0x1000, scoped, tag = 'input window, operand 0, single buffered']
    #allocation4 [shape = 's32[1]{0}', space=sflag, size = 0x4, scoped, tag = 'scoped memory for bert_forward.27']
    #allocation5 [shape = 's32[1]{0}', space=sflag, size = 0x4, scoped, tag = 'scoped memory for bert_forward.27']
    #allocation6 [shape = 'u8[16384]{0}', space=vmem, size = 0x4000, scoped, tag = 'input window, operand 1, single buffered']
    #allocation7 [shape = 's32[1]{0}', space=sflag, size = 0x4, scoped, tag = 'scoped memory for bert_forward.27']
    #allocation8 [shape = 'u8[512]{0}', space=vmem, size = 0x400, scoped, tag = 'input window, operand 2, single buffered']
    #allocation9 [shape = 'u8[4096]{0}', space=vmem, size = 0x1000, scoped, tag = 'input window, operand 3, single buffered']
    #allocation10 [shape = 's32[1]{0}', space=sflag, size = 0x4, scoped, tag = 'scoped memory for bert_forward.27']
    #allocation11 [shape = 'u8[512]{0}', space=vmem, size = 0x400, scoped, tag = 'input window, operand 4, single buffered']
    #allocation12 [shape = 'u8[512]{0}', space=vmem, size = 0x400, scoped, tag = 'input window, operand 5, single buffered']
    #allocation13 [shape = 's32[1]{0}', space=sflag, size = 0x4, scoped, tag = 'scoped memory for bert_forward.27']
    #allocation14 [shape = 'u8[4096]{0}', space=vmem, size = 0x1000, scoped, tag = 'output window, operand 0, single buffered']
    %11 = vsyncpa [#allocation4], 0
    %12 = vsyncpa [#allocation7], 0
    %13 = vsyncpa [#allocation10], 0
    %14 = vsyncpa [#allocation13], 0
    %15 = vsyncpa [#allocation5], 0
    // Predicated region
    $region2: #{bert_forward.27} parent=1 // pred_check
      _
    $region3: #{bert_forward.27} parent=1 // pred_check_branch
      %17 = sbr.rel (0) target = $region5
    $region4: #{bert_forward.27} parent=1 // pred_region
      %s19 = ssub.s32 128, 128
      %20 = vsyncadd [#allocation4], %s19
      %s21 = sshll.u32 [#allocation3], 4
      %s22 = int_to_ptr.vmem [resolvable:$true] %s21
      %27 = dma.hbm_to_vmem [thread:$0]  %s0, 128, %s22, [#allocation4], 64, 64, 4
    $region5: #{bert_forward.27} parent=1 // pred_fallthru
      _
    // Predicated region
    $region6: #{bert_forward.27} parent=1 // pred_check
      _
    $region7: #{bert_forward.27} parent=1 // pred_check_branch
      %29 = sbr.rel (0) target = $region9
    $region8: #{bert_forward.27} parent=1 // pred_region
      %s31 = ssub.s32 512, 512
      %32 = vsyncadd [#allocation7], %s31
      %s33 = sshll.u32 [#allocation6], 4
      %s34 = int_to_ptr.vmem [resolvable:$true] %s33
      %39 = dma.hbm_to_vmem [thread:$0]  %s1, 512, %s34, [#allocation7], 64, 64, 4
    $region9: #{bert_forward.27} parent=1 // pred_fallthru
      _
    // Predicated region
    $region10: #{bert_forward.27} parent=1 // pred_check
      _
    $region11: #{bert_forward.27} parent=1 // pred_check_branch
      %41 = sbr.rel (0) target = $region13
    $region12: #{bert_forward.27} parent=1 // pred_region
      %s43 = ssub.s32 16, 16
      %44 = vsyncadd [#allocation7], %s43
      %s46 = sshll.u32 [#allocation8], 4
      %s47 = int_to_ptr.vmem [resolvable:$true] %s46
      %49 = dma.hbm_to_vmem [thread:$0]  %s2, 16, %s47, [#allocation7]
    $region13: #{bert_forward.27} parent=1 // pred_fallthru
      _
    // Predicated region
    $region14: #{bert_forward.27} parent=1 // pred_check
      _
    $region15: #{bert_forward.27} parent=1 // pred_check_branch
      %51 = sbr.rel (0) target = $region17
    $region16: #{bert_forward.27} parent=1 // pred_region
      %s53 = ssub.s32 128, 128
      %54 = vsyncadd [#allocation10], %s53
      %s55 = sshll.u32 [#allocation9], 4
      %s56 = int_to_ptr.vmem [resolvable:$true] %s55
      %61 = dma.hbm_to_vmem [thread:$0]  %s3, 128, %s56, [#allocation10], 64, 64, 4
    $region17: #{bert_forward.27} parent=1 // pred_fallthru
      _
    // Predicated region
    $region18: #{bert_forward.27} parent=1 // pred_check
      _
    $region19: #{bert_forward.27} parent=1 // pred_check_branch
      %63 = sbr.rel (0) target = $region21
    $region20: #{bert_forward.27} parent=1 // pred_region
      %s65 = ssub.s32 16, 16
      %66 = vsyncadd [#allocation10], %s65
      %s68 = sshll.u32 [#allocation11], 4
      %s69 = int_to_ptr.vmem [resolvable:$true] %s68
      %71 = dma.hbm_to_vmem [thread:$0]  %s4, 16, %s69, [#allocation10]
    $region21: #{bert_forward.27} parent=1 // pred_fallthru
      _
    // Predicated region
    $region22: #{bert_forward.27} parent=1 // pred_check
      _
    $region23: #{bert_forward.27} parent=1 // pred_check_branch
      %73 = sbr.rel (0) target = $region25
    $region24: #{bert_forward.27} parent=1 // pred_region
      %s75 = ssub.s32 16, 16
      %76 = vsyncadd [#allocation13], %s75
      %s78 = sshll.u32 [#allocation12], 4
      %s79 = int_to_ptr.vmem [resolvable:$true] %s78
      %81 = dma.hbm_to_vmem [thread:$0]  %s5, 16, %s79, [#allocation13]
    $region25: #{bert_forward.27} parent=1 // pred_fallthru
      _
    // Predicated region
    $region26: #{bert_forward.27} parent=1 // pred_check
      _
    $region27: #{bert_forward.27} parent=1 // pred_check_branch
      %83 = sbr.rel (0) target = $region29
    $region28: #{bert_forward.27} parent=1 // pred_region
      %84 = dma.done [#allocation4], 128
    $region29: #{bert_forward.27} parent=1 // pred_fallthru
      _
    // Predicated region
    $region30: #{bert_forward.27} parent=1 // pred_check
      _
    $region31: #{bert_forward.27} parent=1 // pred_check_branch
      %86 = sbr.rel (0) target = $region33
    $region32: #{bert_forward.27} parent=1 // pred_region
      %87 = dma.done [#allocation7], 512
    $region33: #{bert_forward.27} parent=1 // pred_fallthru
      _
    // Predicated region
    $region34: #{bert_forward.27} parent=1 // pred_check
      _
    $region35: #{bert_forward.27} parent=1 // pred_check_branch
      %89 = sbr.rel (0) target = $region37
    $region36: #{bert_forward.27} parent=1 // pred_region
      %90 = dma.done [#allocation7], 16
    $region37: #{bert_forward.27} parent=1 // pred_fallthru
      _
    // Predicated region
    $region38: #{bert_forward.27} parent=1 // pred_check
      _
    $region39: #{bert_forward.27} parent=1 // pred_check_branch
      %92 = sbr.rel (0) target = $region41
    $region40: #{bert_forward.27} parent=1 // pred_region
      %93 = dma.done [#allocation10], 128
    $region41: #{bert_forward.27} parent=1 // pred_fallthru
      _
    // Predicated region
    $region42: #{bert_forward.27} parent=1 // pred_check
      _
    $region43: #{bert_forward.27} parent=1 // pred_check_branch
      %95 = sbr.rel (0) target = $region45
    $region44: #{bert_forward.27} parent=1 // pred_region
      %96 = dma.done [#allocation10], 16
    $region45: #{bert_forward.27} parent=1 // pred_fallthru
      _
    // Predicated region
    $region46: #{bert_forward.27} parent=1 // pred_check
      _
    $region47: #{bert_forward.27} parent=1 // pred_check_branch
      %98 = sbr.rel (0) target = $region49
    $region48: #{bert_forward.27} parent=1 // pred_region
      %99 = dma.done [#allocation13], 16
    $region49: #{bert_forward.27} parent=1 // pred_fallthru
      _
    %p101 = scmp.eq.s32.totalorder 0, 0
    // Predicated region
    $region50: #{bert_forward.27} parent=1 // pred_check
      %p102 = pneg %p101
    $region51: #{bert_forward.27} parent=1 // pred_check_branch
      %104 = sbr.rel (%p102) target = $region53
    $region52: #{bert_forward.27} parent=1 // pred_region
      %vm105 = vcmask 261120
      %106 = vst.msk [vmem:[#allocation2] sm:$0xff] %vm105, 0.0
      %107 = vst.msk [vmem:[#allocation2 + $0x8] sm:$0xff] %vm105, 0.0
    $region53: #{bert_forward.27} parent=1 // pred_fallthru
      _
    %v108 = vld [vmem:[#allocation2] sm:$0xff]
    %v109 = vld [vmem:[#allocation2 + $0x8] sm:$0xff]
    %v110 = vld [vmem:[#allocation3] sm:$0xf]
    %v111 = vld [vmem:[#allocation3 + $0x4] sm:$0xf]
    %v112 = vld [vmem:[#allocation6] sm:$0xf]
    %v113 = vld [vmem:[#allocation6 + $0x4] sm:$0xf]
    %v114 = vld [vmem:[#allocation6 + $0x8] sm:$0xf]
    %v115 = vld [vmem:[#allocation6 + $0xc] sm:$0xf]
    %v116 = vld [vmem:[#allocation6 + $0x10] sm:$0xf]
    %v117 = vld [vmem:[#allocation6 + $0x14] sm:$0xf]
    %v118 = vld [vmem:[#allocation6 + $0x18] sm:$0xf]
    %v119 = vld [vmem:[#allocation6 + $0x1c] sm:$0xf]
    %v122 = vunpack.c.l.b16 %v110
    %v123 = vunpack.c.l.b16 %v111
    %v124 = vpack.c.b16 %v123, %v122
    %v133 = vunpack.c.l.b16 %v112
    %v134 = vunpack.c.l.b16 %v113
    %v135 = vunpack.c.l.b16 %v114
    %v136 = vunpack.c.l.b16 %v115
    %v137 = vunpack.c.l.b16 %v116
    %v138 = vunpack.c.l.b16 %v117
    %v139 = vunpack.c.l.b16 %v118
    %v140 = vunpack.c.l.b16 %v119
    %v141 = vpack.c.b16 %v134, %v133
    %v142 = vpack.c.b16 %v136, %v135
    %v143 = vpack.c.b16 %v138, %v137
    %v144 = vpack.c.b16 %v140, %v139
    %vm149 = vcmask 523264
    %v151 = vsel %vm149, %v124, 0
    %153 = vmatprep.subr.bf16.mxu0 0
    %154 = vmatpush1.bf16.msra.mxu0 %v141
    %155 = vmatprep.subr.bf16.mxu0 0
    %156 = vmatpush1.bf16.msra.mxu0 %v142
    %157 = vmatprep.subr.bf16.mxu0 0
    %158 = vmatpush1.bf16.msra.mxu0 %v143
    %159 = vmatprep.subr.bf16.mxu0 0
    %160 = vmatpush1.bf16.msra.mxu0 %v144
    %161 = vmatprep.subr.bf16.mxu0 0
    %162 = vmatpush1.bf16.msra.mxu0 0
    %163 = vmatprep.subr.bf16.mxu0 0
    %164 = vmatpush1.bf16.msra.mxu0 0
    %165 = vmatprep.subr.bf16.mxu0 0
    %166 = vmatpush1.bf16.msra.mxu0 0
    %167 = vmatprep.subr.bf16.mxu0 0
    %168 = vmatpush1.bf16.msra.mxu0 0
    %169 = vmatprep.subr.bf16.mxu0 0
    %170 = vmatpush1.bf16.msra.mxu0 0
    %171 = vmatprep.subr.bf16.mxu0 0
    %172 = vmatpush1.bf16.msra.mxu0 0
    %173 = vmatprep.subr.bf16.mxu0 0
    %174 = vmatpush1.bf16.msra.mxu0 0
    %175 = vmatprep.subr.bf16.mxu0 0
    %176 = vmatpush1.bf16.msra.mxu0 0
    %177 = vmatprep.subr.bf16.mxu0 0
    %178 = vmatpush1.bf16.msra.mxu0 0
    %179 = vmatprep.subr.bf16.mxu0 0
    %180 = vmatpush1.bf16.msra.mxu0 0
    %181 = vmatprep.subr.bf16.mxu0 0
    %182 = vmatpush1.bf16.msra.mxu0 0
    %183 = vmatprep.subr.bf16.mxu0 0
    %184 = vmatpush1.bf16.msra.mxu0 0
    %185 = vmatprep.mubr.bf16.mxu0 0
    %186 = vmatmul.mubr.bf16.gmra.mrb[0].mxu0 %v151
    %v187 = vpop.f32.mrb[0].mxu0
    %v188 = vadd.f32 0.0, %v187
    %v189 = vpop.f32.mrb[0].mxu0
    %v190 = vpop.f32.mrb[0].mxu0
    %v191 = vadd.f32 0.0, %v190
    %v192 = vpop.f32.mrb[0].mxu0
    %193 = vdwg.mxu0
    %v194 = vadd.f32 %v108, %v188
    %v195 = vadd.f32 %v109, %v191
    %vm196 = vcmask 261120
    %197 = vst.msk [vmem:[#allocation2] sm:$0xff] %vm196, %v194
    %198 = vst.msk [vmem:[#allocation2 + $0x8] sm:$0xff] %vm196, %v195
    // Predicated region
    $region54: #{bert_forward.27} parent=1 // pred_check
      %p199 = pneg %p101
    $region55: #{bert_forward.27} parent=1 // pred_check_branch
      %201 = sbr.rel (%p199) target = $region57
    $region56: #{bert_forward.27} parent=1 // pred_region
      %v202 = vld [vmem:[#allocation2] sm:$0xff]
      %v203 = vld [vmem:[#allocation2 + $0x8] sm:$0xff]
      %v204 = vld [vmem:[#allocation8] sm:$0x1]
      %v206 = vlaneseq
      %v207 = vshrl.u32 %v206, 7
      %v208 = vsub.s32 0, %v207
      %v209 = vrot.slane %v204, %v208
      %v211 = vadd.f32 %v202, %v209
      %v212 = vadd.f32 %v203, %v209
      %v213 = vld [vmem:[#allocation9] sm:$0xf]
      %v214 = vld [vmem:[#allocation9 + $0x4] sm:$0xf]
      %v215 = vunpack.c.l.bf16 %v213
      %v216 = vunpack.c.l.bf16 %v214
      %v217 = vadd.f32 %v211, %v215
      %v218 = vadd.f32 %v212, %v216
      %v219 = vsel %vm196, %v217, 0.0
      %220 = vadd.xlane.f32.xlu0 %v219
      %v221 = vpop.xlane.xlu0 %220
      %v222 = vsel %vm196, %v218, 0.0
      %223 = vadd.xlane.f32.xlu0 %v222
      %v224 = vpop.xlane.xlu0 %223
      %v225 = vrcp.pop 32.0
      %v226 = vmul.f32 %v221, %v225
      %v227 = vmul.f32 %v224, %v225
      %v228 = vsub.f32 %v217, %v226
      %v229 = vsub.f32 %v218, %v227
      %v230 = vmul.f32 %v228, %v228
      %v231 = vmul.f32 %v229, %v229
      %v232 = vsel %vm196, %v230, 0.0
      %233 = vadd.xlane.f32.xlu0 %v232
      %v234 = vpop.xlane.xlu0 %233
      %v235 = vsel %vm196, %v231, 0.0
      %236 = vadd.xlane.f32.xlu0 %v235
      %v237 = vpop.xlane.xlu0 %236
      %v238 = vmul.f32 %v234, %v225
      %v239 = vmul.f32 %v237, %v225
      %v240 = vadd.f32 %v238, 1e-12
      %v241 = vadd.f32 %v239, 1e-12
      %v242 = vrsqrt.pop %v240
      %v243 = vrsqrt.pop %v241
      %v244 = vmul.f32 %v228, %v242
      %v245 = vmul.f32 %v229, %v243
      %v246 = vld [vmem:[#allocation11] sm:$0x1]
      %v248 = vlaneseq
      %v249 = vshrl.u32 %v248, 7
      %v250 = vsub.s32 0, %v249
      %v251 = vrot.slane %v246, %v250
      %v253 = vmul.f32 %v244, %v251
      %v254 = vmul.f32 %v245, %v251
      %v255 = vld [vmem:[#allocation12] sm:$0x1]
      %v257 = vlaneseq
      %v258 = vshrl.u32 %v257, 7
      %v259 = vsub.s32 0, %v258
      %v260 = vrot.slane %v255, %v259
      %v262 = vadd.f32 %v253, %v260
      %v263 = vadd.f32 %v254, %v260
      %v264 = vpack.c.bf16 %v263, %v262
      %v266 = vunpack.c.l.b16 %v264
      %v267 = vunpack.c.h.b16 %v264
      %v268 = vpack.c.b16 %v266, %v266
      %v269 = vpack.c.b16 %v267, %v267
      %vm272 = vcmask 257024
      %273 = vst.msk [vmem:[#allocation14] sm:$0xf] %vm272, %v268
      %274 = vst.msk [vmem:[#allocation14 + $0x4] sm:$0xf] %vm272, %v269
    $region57: #{bert_forward.27} parent=1 // pred_fallthru
      _
    // Predicated region
    $region58: #{bert_forward.27} parent=1 // pred_check
      _
    $region59: #{bert_forward.27} parent=1 // pred_check_branch
      %276 = sbr.rel (0) target = $region61
    $region60: #{bert_forward.27} parent=1 // pred_region
      %s278 = ssub.s32 128, 128
      %279 = vsyncadd [#allocation5], %s278
      %s280 = sshll.u32 [#allocation14], 4
      %s281 = int_to_ptr.vmem [resolvable:$true] %s280
      %286 = dma.vmem_to_hbm [thread:$0]  %s281, 128, %s6, [#allocation5], 64, 64, 4
    $region61: #{bert_forward.27} parent=1 // pred_fallthru
      _
    // Predicated region
    $region62: #{bert_forward.27} parent=1 // pred_check
      _
    $region63: #{bert_forward.27} parent=1 // pred_check_branch
      %288 = sbr.rel (0) target = $region65
    $region64: #{bert_forward.27} parent=1 // pred_region
      %289 = dma.done [#allocation5], 128
    $region65: #{bert_forward.27} parent=1 // pred_fallthru
      _
    %290 = vsyncpa [#allocation4], 1
    %291 = vsyncpa [#allocation7], 1
    %292 = vsyncpa [#allocation10], 1
    %293 = vsyncpa [#allocation13], 1
    %294 = vsyncpa [#allocation5], 1

</llo_original>
